<compile_context>
chip_gen: v5e
topology: v5e:2x2
jax: 0.10.0
libtpu: 0.0.40
codegen_flags: <defaults>
</compile_context>

<pallas_src>
import jax
import jax.numpy as jnp
from jax.experimental import pallas as pl
from jax.experimental.pallas import tpu as pltpu


D_IN, D_HID, D_OUT = 256, 1024, 8
_INV_SQRT2 = 0.7071067811865476
_SQRT_2_OVER_PI = 0.7978845608028654
_GELU_K = 0.044715


def _mixer_head_kernel(x_ref, w1_ref, b1_ref, w32_ref, b32_ref, o_ref):
    # x tile: [256, TL] bf16 (channels-first, cast once in the wrapper).
    x = x_ref[0]

    # linear1: [1024, 256] @ [256, TL] -> [1024, TL], MXU with f32 accumulation.
    h = jnp.dot(w1_ref[...], x, preferred_element_type=jnp.float32) + b1_ref[...]

    # GELU, tanh approximation (EUP slot) instead of the erf VALU polynomial.
    h = 0.5 * h * (1.0 + jnp.tanh(jnp.float32(_SQRT_2_OVER_PI)
                                  * (h + jnp.float32(_GELU_K) * h * h * h)))

    # fused linear2+linear3: [8, 1024] @ [1024, TL] -> [8, TL]
    y = jnp.dot(w32_ref[...], h.astype(jnp.bfloat16),
                preferred_element_type=jnp.float32) + b32_ref[...]

    o_ref[0] = y.astype(o_ref.dtype)


def mixer_head_pallas(x_bf16, w1, b1, w32, b32, *, tile_l):
    """x_bf16: [B, 256, Lp] bf16 (Lp multiple of tile_l) -> [B, 8, Lp] float32."""
    B, C, Lp = x_bf16.shape
    assert C == D_IN and Lp % tile_l == 0 and tile_l % 128 == 0

    def const(shape):
        return pl.BlockSpec(shape, lambda b, l: (0,) * len(shape))

    return pl.pallas_call(
        _mixer_head_kernel,
        out_shape=jax.ShapeDtypeStruct((B, D_OUT, Lp), jnp.float32),
        grid_spec=pltpu.PrefetchScalarGridSpec(
            num_scalar_prefetch=0,
            grid=(B, Lp // tile_l),
            in_specs=[
                pl.BlockSpec((1, D_IN, tile_l), lambda b, l: (b, 0, l)),  # x tile
                const((D_HID, D_IN)),   # w1  (bf16, VMEM-resident)
                const((D_HID, 1)),      # b1  (f32)
                const((D_OUT, D_HID)),  # w32 = w3 @ w2 (bf16)
                const((D_OUT, 1)),      # b32 = w3 @ b2 + b3 (f32)
            ],
            out_specs=pl.BlockSpec((1, D_OUT, tile_l), lambda b, l: (b, 0, l)),
        ),
        compiler_params=pltpu.CompilerParams(
            dimension_semantics=("parallel", "parallel"),
            vmem_limit_bytes=48 << 20,
        ),
    )(x_bf16, w1, b1, w32, b32)


def _round_up(n, m):
    return ((n + m - 1) // m) * m


def _choose_tile_l(L, B, max_tile_l=2048):
    """Multiple-of-128 lane tile: bound L-padding, amortize per-step overhead,
    and guarantee >=2 grid steps so both v7x TensorCores get work."""
    assert max_tile_l % 128 == 0 and max_tile_l >= 128
    L128 = _round_up(max(L, 1), 128)
    if L128 <= max_tile_l:
        tile_l = L128                        # one tile covers L; padding <= 127
    else:
        best_t, best_cost = 128, None
        for t in range(max_tile_l, 127, -128):
            n = -(-L128 // t)
            cost = n * t + n * 256           # padded work + per-step-overhead proxy
            if best_cost is None or cost < best_cost:
                best_t, best_cost = t, cost
        tile_l = best_t
    if B * (-(-L128 // tile_l)) < 2 and L128 >= 256:
        tile_l = _round_up(-(-L128 // 2), 128)   # split L -> grid has >=2 steps
    return tile_l


def mixer_head_branch_forward(x, params, *, max_tile_l=2048):
    """Full forward, mirroring MixerHead_Branch.forward.

    x: [B, 256, L] (backbone output) -> [B, 8 * L] float32.
    TODO(synk): `self.backbone = model` is an arbitrary user-supplied module; it
    is treated as identity here (the head's 256-feature contract is preserved).
    """
    w1, b1, w2, b2, w3, b3 = params
    B, C, L = x.shape
    assert C == D_IN

    # Fold linear3 into linear2 (exact in f32): y = W32 @ GELU(W1 x + b1) + b32.
    w32 = (w3 @ w2).astype(jnp.bfloat16)             # [8, 1024]
    b32 = w3 @ b2 + b3                               # [8, 1] f32

    tile_l = _choose_tile_l(L, B, max_tile_l)
    Lp = _round_up(L, tile_l)
    if Lp != L:
        x = jnp.pad(x, ((0, 0), (0, 0), (0, Lp - L)))

    y = mixer_head_pallas(
        x.astype(jnp.bfloat16),                      # cast once: halves input DMA
        w1.astype(jnp.bfloat16), b1,
        w32, b32,
        tile_l=tile_l,
    )                                                # [B, 8, Lp] f32
    if Lp != L:
        # Padded lanes carry GELU(b1)-propagated values; slice before flatten.
        y = y[:, :, :L]
    return y.reshape(B, D_OUT * L)


def init_params(key):
    """Deterministic PyTorch-Linear-style init; weights [out, in], biases [out, 1]."""
    def linear(k, fan_in, fan_out):
        kw, kb = jax.random.split(k)
        bound = 1.0 / jnp.sqrt(fan_in)
        w = jax.random.uniform(kw, (fan_out, fan_in), jnp.float32, -bound, bound)
        b = jax.random.uniform(kb, (fan_out, 1), jnp.float32, -bound, bound)
        return w, b

    k1, k2, k3 = jax.random.split(key, 3)
    w1, b1 = linear(k1, D_IN, D_HID)
    w2, b2 = linear(k2, D_HID, D_IN)
    w3, b3 = linear(k3, D_IN, D_OUT)
    return (w1, b1, w2, b2, w3, b3)


def _reference_forward(x, params):
    """Pure-JAX f32 reference mirroring the PyTorch forward exactly (erf GELU)."""
    w1, b1, w2, b2, w3, b3 = params
    xt = jnp.transpose(x, (0, 2, 1))                 # [B, L, 256]
    h = xt @ w1.T + b1[:, 0]
    h = 0.5 * h * (1.0 + jax.lax.erf(h * jnp.float32(_INV_SQRT2)))
    h = h @ w2.T + b2[:, 0]
    y = h @ w3.T + b3[:, 0]
    y = jnp.transpose(y, (0, 2, 1))                  # [B, 8, L]
    return y.reshape(x.shape[0], -1)


if __name__ == "__main__":
    key = jax.random.PRNGKey(0)
    kx, kp = jax.random.split(key)

    B, L = 2, 8                      # small shapes; backbone output = [B, 256, L]
    x = jax.random.normal(kx, (B, D_IN, L), jnp.float32)
    params = init_params(kp)

    out = jax.block_until_ready(mixer_head_branch_forward(x, params))
    ref = _reference_forward(x, params)

    assert out.shape == (B, D_OUT * L), out.shape
    # bf16 MXU inputs + tanh-approx GELU vs the exact-erf f32 reference.
    err = float(jnp.max(jnp.abs(out - ref)))
    scale = float(jnp.max(jnp.abs(ref))) + 1e-6
    assert err / scale < 3e-2, (err, scale)

    print("KERNEL_OK")
</pallas_src>

<mosaic_0001>
module attributes {stable_mosaic.version = 11 : i64} {
  func.func @_mixer_head_kernel(%arg0: i32, %arg1: i32, %arg2: memref<1x256x128xbf16, #tpu.memory_space<vmem>>, %arg3: memref<1024x256xbf16, #tpu.memory_space<vmem>>, %arg4: memref<1024x1xf32, #tpu.memory_space<vmem>>, %arg5: memref<8x1024xbf16, #tpu.memory_space<vmem>>, %arg6: memref<8x1xf32, #tpu.memory_space<vmem>>, %arg7: memref<1x8x128xf32, #tpu.memory_space<vmem>>) attributes {dimension_semantics = [#tpu.dimension_semantics<parallel>, #tpu.dimension_semantics<parallel>], iteration_bounds = array<i64: 2, 1>, scalar_prefetch = 0 : i64, scratch_operands = 0 : i64, tpu.core_type = #tpu.core_type<tc>, window_params = [{transform_indices = @transform_0, window_bounds = array<i64: 1, 256, 128>}, {pipeline_mode = #tpu.pipeline_mode<synchronous>, transform_indices = @transform_1, window_bounds = array<i64: 1024, 256>}, {pipeline_mode = #tpu.pipeline_mode<synchronous>, transform_indices = @transform_2, window_bounds = array<i64: 1024, 1>}, {pipeline_mode = #tpu.pipeline_mode<synchronous>, transform_indices = @transform_3, window_bounds = array<i64: 8, 1024>}, {pipeline_mode = #tpu.pipeline_mode<synchronous>, transform_indices = @transform_4, window_bounds = array<i64: 8, 1>}, {transform_indices = @transform_5, window_bounds = array<i64: 1, 8, 128>}]} {
    %c0 = arith.constant 0 : index
    %c0_0 = arith.constant 0 : index
    %c0_1 = arith.constant 0 : index
    %0 = vector.load %arg2[%c0, %c0_0, %c0_1] : memref<1x256x128xbf16, #tpu.memory_space<vmem>>, vector<1x256x128xbf16>
    %1 = vector.shape_cast %0 : vector<1x256x128xbf16> to vector<256x128xbf16>
    %c0_2 = arith.constant 0 : index
    %c0_3 = arith.constant 0 : index
    %2 = vector.load %arg3[%c0_2, %c0_3] : memref<1024x256xbf16, #tpu.memory_space<vmem>>, vector<1024x256xbf16>
    %cst = arith.constant dense<0.000000e+00> : vector<1024x128xf32>
    %3 = tpu.matmul %2, %1, %cst {dimension_numbers = #tpu.dot_dimension_numbers<[1], [0], [0], [1], [0, 0, 1, 1], [], []>} : vector<1024x256xbf16>, vector<256x128xbf16>, vector<1024x128xf32> -> vector<1024x128xf32>
    %c0_4 = arith.constant 0 : index
    %c0_5 = arith.constant 0 : index
    %4 = vector.load %arg4[%c0_4, %c0_5] : memref<1024x1xf32, #tpu.memory_space<vmem>>, vector<1024x1xf32>
    %5 = vector.broadcast %4 : vector<1024x1xf32> to vector<1024x128xf32>
    %6 = arith.addf %3, %5 : vector<1024x128xf32>
    %cst_6 = arith.constant 5.000000e-01 : f32
    %7 = vector.broadcast %cst_6 : f32 to vector<1024x128xf32>
    %8 = arith.mulf %7, %6 : vector<1024x128xf32>
    %cst_7 = arith.constant 4.471500e-02 : f32
    %9 = vector.broadcast %cst_7 : f32 to vector<1024x128xf32>
    %10 = arith.mulf %9, %6 : vector<1024x128xf32>
    %11 = arith.mulf %10, %6 : vector<1024x128xf32>
    %12 = arith.mulf %11, %6 : vector<1024x128xf32>
    %13 = arith.addf %6, %12 : vector<1024x128xf32>
    %cst_8 = arith.constant 0.797884583 : f32
    %14 = vector.broadcast %cst_8 : f32 to vector<1024x128xf32>
    %15 = arith.mulf %14, %13 : vector<1024x128xf32>
    %16 = math.tanh %15 : vector<1024x128xf32>
    %cst_9 = arith.constant 1.000000e+00 : f32
    %17 = vector.broadcast %cst_9 : f32 to vector<1024x128xf32>
    %18 = arith.addf %17, %16 : vector<1024x128xf32>
    %19 = arith.mulf %8, %18 : vector<1024x128xf32>
    %c0_10 = arith.constant 0 : index
    %c0_11 = arith.constant 0 : index
    %20 = vector.load %arg5[%c0_10, %c0_11] : memref<8x1024xbf16, #tpu.memory_space<vmem>>, vector<8x1024xbf16>
    %21 = arith.truncf %19 : vector<1024x128xf32> to vector<1024x128xbf16>
    %cst_12 = arith.constant dense<0.000000e+00> : vector<8x128xf32>
    %22 = tpu.matmul %20, %21, %cst_12 {dimension_numbers = #tpu.dot_dimension_numbers<[1], [0], [0], [1], [0, 0, 1, 1], [], []>} : vector<8x1024xbf16>, vector<1024x128xbf16>, vector<8x128xf32> -> vector<8x128xf32>
    %c0_13 = arith.constant 0 : index
    %c0_14 = arith.constant 0 : index
    %23 = vector.load %arg6[%c0_13, %c0_14] : memref<8x1xf32, #tpu.memory_space<vmem>>, vector<8x1xf32>
    %24 = vector.broadcast %23 : vector<8x1xf32> to vector<8x128xf32>
    %25 = arith.addf %22, %24 : vector<8x128xf32>
    %c0_15 = arith.constant 0 : index
    %c0_16 = arith.constant 0 : index
    %c0_17 = arith.constant 0 : index
    %26 = vector.load %arg7[%c0_15, %c0_16, %c0_17] : memref<1x8x128xf32, #tpu.memory_space<vmem>>, vector<1x8x128xf32>
    %27 = vector.shape_cast %26 : vector<1x8x128xf32> to vector<8x128xf32>
    %28 = vector.shape_cast %25 : vector<8x128xf32> to vector<1x8x128xf32>
    tpu.vector_store %arg7[%c0_15, %c0_16, %c0_17], %28 {strides = array<i32>} : memref<1x8x128xf32, #tpu.memory_space<vmem>>, vector<1x8x128xf32>,
    return
  }
  func.func @transform_0(%arg0: i32, %arg1: i32) -> (i32, i32, i32) {
    %c0_i32 = arith.constant 0 : i32
    %c0_i32_0 = arith.constant 0 : i32
    return %arg0, %c0_i32, %arg1 : i32, i32, i32
  }
  func.func @transform_1(%arg0: i32, %arg1: i32) -> (i32, i32) {
    %c0_i32 = arith.constant 0 : i32
    %c0_i32_0 = arith.constant 0 : i32
    %c0_i32_1 = arith.constant 0 : i32
    return %c0_i32, %c0_i32_0 : i32, i32
  }
  func.func @transform_2(%arg0: i32, %arg1: i32) -> (i32, i32) {
    %c0_i32 = arith.constant 0 : i32
    %c0_i32_0 = arith.constant 0 : i32
    %c0_i32_1 = arith.constant 0 : i32
    return %c0_i32, %c0_i32_0 : i32, i32
  }
  func.func @transform_3(%arg0: i32, %arg1: i32) -> (i32, i32) {
    %c0_i32 = arith.constant 0 : i32
    %c0_i32_0 = arith.constant 0 : i32
    %c0_i32_1 = arith.constant 0 : i32
    return %c0_i32, %c0_i32_0 : i32, i32
  }
  func.func @transform_4(%arg0: i32, %arg1: i32) -> (i32, i32) {
    %c0_i32 = arith.constant 0 : i32
    %c0_i32_0 = arith.constant 0 : i32
    %c0_i32_1 = arith.constant 0 : i32
    return %c0_i32, %c0_i32_0 : i32, i32
  }
  func.func @transform_5(%arg0: i32, %arg1: i32) -> (i32, i32, i32) {
    %c0_i32 = arith.constant 0 : i32
    %c0_i32_0 = arith.constant 0 : i32
    return %arg0, %c0_i32, %arg1 : i32, i32, i32
  }
}

</mosaic_0001>

<llo_original>
// kernel: tpu_custom_call.1
$region0: #{tpu_custom_call.1}
  #allocation0 [shape = 'u32[]', space=smem, size = 0x4, offset = 0x4, fixed_abs, tag = 'smem constant byte address 0x4 - core index']
  #allocation1 [shape = 'u32[72,128]{1,0:T(1,128)}', space=vmem, size = 0x9000, scoped, tag = 'internal scratch']
  %s0 = inlined_call_operand.hbm [shape: bf16[2,256,128], index: 0, kind: input, shape index: {}]
  %s1 = inlined_call_operand.vmem [shape: bf16[1024,256], index: 1, kind: input, shape index: {}]
  %s2 = inlined_call_operand.vmem [shape: f32[1024,1], index: 2, kind: input, shape index: {}]
  %s3 = inlined_call_operand.hbm [shape: bf16[8,1024], index: 3, kind: input, shape index: {}]
  %s4 = inlined_call_operand.vmem [shape: f32[8,1], index: 4, kind: input, shape index: {}]
  %s5 = inlined_call_operand.hbm [shape: f32[2,8,128], index: 5, kind: output, shape index: {}]
  %s6 = sld [smem:[#allocation0]]
  $region61: #{tpu_custom_call.1} parent=0
    _
  %s8 = ssub.s32 1, %s6
  %s9 = scalar_select 0, %s8, %s6
  $region1: #{tpu_custom_call.1} parent=0
    #allocation2 [shape = 'u8[131072]{0}', space=vmem, size = 0x20000, scoped, tag = 'input window, operand 0']
    #allocation3 [shape = 's32[2]{0}', space=sflag, size = 0x8, scoped, tag = 'scoped memory for tpu_custom_call.1']
    #allocation4 [shape = 's32[2]{0}', space=sflag, size = 0x8, scoped, tag = 'scoped memory for tpu_custom_call.1']
    #allocation5 [shape = 'u8[16384]{0}', space=vmem, size = 0x4000, scoped, tag = 'input window, operand 3, single buffered']
    #allocation6 [shape = 's32[1]{0}', space=sflag, size = 0x4, scoped, tag = 'scoped memory for tpu_custom_call.1']
    #allocation7 [shape = 'u8[8192]{0}', space=vmem, size = 0x2000, scoped, tag = 'output window, operand 0']
    %10 = vsyncpa [#allocation3], 0
    %s11 = scalar_lea.sflag [#allocation3], 1
    %12 = vsyncpa %s11, 0
    %13 = vsyncpa [#allocation6], 0
    %14 = vsyncpa [#allocation4], 0
    %s15 = scalar_lea.sflag [#allocation4], 1
    %16 = vsyncpa %s15, 0
    loop: start=0, step=1, limit=4
    $region2: #{tpu_custom_call.1} parent=1 // loop_pre_header
      _
    $region3: #{tpu_custom_call.1} parent=1 // loop_header
      %s18 = sphi 0, %s22
      %p19 = scmp.ge.s32.totalorder %s18, 4
      %s25 = sphi 0, %s37
      %s26 = sphi 0, %s33
      %s27 = sphi 0, %s25
      %s28 = sphi 0, %s26
      %s29 = sphi 0, %s27
      %s30 = sphi 0, %s28
      %s42 = sphi 0, %s44
      %s45 = sphi 0, %s42
      %s46 = sphi 0, %s45
      %s62 = sphi 0, %s46
      %s66 = sphi 0, %s66
      %s68 = sphi 0, %s66
      %s69 = sphi 0, %s68
      %s83 = sphi 0, %s69
      %s87 = sphi 0, %s87
      %s89 = sphi 0, %s87
      %s90 = sphi 0, %s89
      %s104 = sphi 0, %s90
      %s108 = sphi 0, %s108
      %s110 = sphi 0, %s108
      %s111 = sphi 0, %s110
      %s125 = sphi 0, %s111
      %s129 = sphi 0, %s129
      %s131 = sphi 0, %s129
      %s132 = sphi 0, %s131
      %s146 = sphi 0, %s132
      %s154 = sphi 0, %s156
      %s157 = sphi 0, %s154
      %s158 = sphi 0, %s157
      %s174 = sphi 0, %s158
    $region4: #{tpu_custom_call.1} parent=1 // loop_header_branch
      %21 = sbr.rel (%p19) target = $region8
    $region5: #{tpu_custom_call.1} parent=1 // loop_body
      %s23 = ssub.s32 %s18, 1
      %s24 = ssub.s32 %s18, 2
      %s31 = sadd.s32 1, %s26
      %p32 = scmp.ge.s32.totalorder %s31, 1
      %s33 = scalar_select %p32, 0, %s31
      %s34 = sadd.s32 1, %s25
      %s35 = scalar_select %p32, %s34, %s25
      %p36 = scmp.ge.s32.totalorder %s35, 2
      %s37 = scalar_select %p36, 0, %s35
      %s38 = ssub.s32 %s25, %s37
      %s39 = ssub.s32 %s26, %s33
      %s40 = sor.u32 %s38, %s39
      %p41 = scmp.eq.s32.totalorder %s40, 0
      %s43 = sadd.s32 %s42, 1
      %s44 = scalar_select %p41, %s42, %s43
      %p47 = pneg %p41
      %p48 = scmp.eq.s32.totalorder %s18, 1
      %p49 = por %p47, %p48
      %p50 = scmp.ne.s32.totalorder %s42, %s45
      %p51 = scmp.eq.s32.totalorder %s18, 0
      %p52 = por %p50, %p51
      %p53 = scmp.ne.s32.totalorder %s42, %s45
      %p54 = scmp.eq.s32.totalorder %s23, 1
      %p55 = por %p53, %p54
      %p56 = scmp.ne.s32.totalorder %s45, %s46
      %p57 = scmp.eq.s32.totalorder %s23, 0
      %p58 = por %p56, %p57
      %p59 = scmp.ne.s32.totalorder %s45, %s46
      %p60 = scmp.eq.s32.totalorder %s24, 1
      %p61 = por %p59, %p60
      %p63 = scmp.ne.s32.totalorder %s46, %s62
      %p64 = scmp.eq.s32.totalorder %s24, 0
      %p65 = por %p63, %p64
      %s67 = sadd.s32 %s66, 1
      %p70 = scmp.eq.s32.totalorder %s18, 1
      %p71 = scmp.ne.s32.totalorder %s66, %s68
      %p72 = scmp.eq.s32.totalorder %s18, 0
      %p73 = por %p71, %p72
      %p74 = scmp.ne.s32.totalorder %s66, %s68
      %p75 = scmp.eq.s32.totalorder %s23, 1
      %p76 = por %p74, %p75
      %p77 = scmp.ne.s32.totalorder %s68, %s69
      %p78 = scmp.eq.s32.totalorder %s23, 0
      %p79 = por %p77, %p78
      %p80 = scmp.ne.s32.totalorder %s68, %s69
      %p81 = scmp.eq.s32.totalorder %s24, 1
      %p82 = por %p80, %p81
      %p84 = scmp.ne.s32.totalorder %s69, %s83
      %p85 = scmp.eq.s32.totalorder %s24, 0
      %p86 = por %p84, %p85
      %s88 = sadd.s32 %s87, 1
      %p91 = scmp.eq.s32.totalorder %s18, 1
      %p92 = scmp.ne.s32.totalorder %s87, %s89
      %p93 = scmp.eq.s32.totalorder %s18, 0
      %p94 = por %p92, %p93
      %p95 = scmp.ne.s32.totalorder %s87, %s89
      %p96 = scmp.eq.s32.totalorder %s23, 1
      %p97 = por %p95, %p96
      %p98 = scmp.ne.s32.totalorder %s89, %s90
      %p99 = scmp.eq.s32.totalorder %s23, 0
      %p100 = por %p98, %p99
      %p101 = scmp.ne.s32.totalorder %s89, %s90
      %p102 = scmp.eq.s32.totalorder %s24, 1
      %p103 = por %p101, %p102
      %p105 = scmp.ne.s32.totalorder %s90, %s104
      %p106 = scmp.eq.s32.totalorder %s24, 0
      %p107 = por %p105, %p106
      %s109 = sadd.s32 %s108, 1
      %p112 = scmp.eq.s32.totalorder %s18, 1
      %p113 = scmp.ne.s32.totalorder %s108, %s110
      %p114 = scmp.eq.s32.totalorder %s18, 0
      %p115 = por %p113, %p114
      %p116 = scmp.ne.s32.totalorder %s108, %s110
      %p117 = scmp.eq.s32.totalorder %s23, 1
      %p118 = por %p116, %p117
      %p119 = scmp.ne.s32.totalorder %s110, %s111
      %p120 = scmp.eq.s32.totalorder %s23, 0
      %p121 = por %p119, %p120
      %p122 = scmp.ne.s32.totalorder %s110, %s111
      %p123 = scmp.eq.s32.totalorder %s24, 1
      %p124 = por %p122, %p123
      %p126 = scmp.ne.s32.totalorder %s111, %s125
      %p127 = scmp.eq.s32.totalorder %s24, 0
      %p128 = por %p126, %p127
      %s130 = sadd.s32 %s129, 1
      %p133 = scmp.eq.s32.totalorder %s18, 1
      %p134 = scmp.ne.s32.totalorder %s129, %s131
      %p135 = scmp.eq.s32.totalorder %s18, 0
      %p136 = por %p134, %p135
      %p137 = scmp.ne.s32.totalorder %s129, %s131
      %p138 = scmp.eq.s32.totalorder %s23, 1
      %p139 = por %p137, %p138
      %p140 = scmp.ne.s32.totalorder %s131, %s132
      %p141 = scmp.eq.s32.totalorder %s23, 0
      %p142 = por %p140, %p141
      %p143 = scmp.ne.s32.totalorder %s131, %s132
      %p144 = scmp.eq.s32.totalorder %s24, 1
      %p145 = por %p143, %p144
      %p147 = scmp.ne.s32.totalorder %s132, %s146
      %p148 = scmp.eq.s32.totalorder %s24, 0
      %p149 = por %p147, %p148
      %s150 = ssub.s32 %s25, %s37
      %s151 = ssub.s32 %s26, %s33
      %s152 = sor.u32 %s150, %s151
      %p153 = scmp.eq.s32.totalorder %s152, 0
      %s155 = sadd.s32 %s154, 1
      %s156 = scalar_select %p153, %s154, %s155
      %p159 = pneg %p153
      %p160 = scmp.eq.s32.totalorder %s18, 1
      %p161 = por %p159, %p160
      %p162 = scmp.ne.s32.totalorder %s154, %s157
      %p163 = scmp.eq.s32.totalorder %s18, 0
      %p164 = por %p162, %p163
      %p165 = scmp.ne.s32.totalorder %s154, %s157
      %p166 = scmp.eq.s32.totalorder %s23, 1
      %p167 = por %p165, %p166
      %p168 = scmp.ne.s32.totalorder %s157, %s158
      %p169 = scmp.eq.s32.totalorder %s23, 0
      %p170 = por %p168, %p169
      %p171 = scmp.ne.s32.totalorder %s157, %s158
      %p172 = scmp.eq.s32.totalorder %s24, 1
      %p173 = por %p171, %p172
      %p175 = scmp.ne.s32.totalorder %s158, %s174
      %p176 = scmp.eq.s32.totalorder %s24, 0
      %p177 = por %p175, %p176
      %p178 = scmp.le.s32.totalorder 1, %s18
      %p179 = scmp.lt.s32.totalorder %s18, 3
      %p180 = pnand %p178, %p179
      %p181 = pneg %p180
      // Predicated region
      $region9: #{tpu_custom_call.1} parent=5 // pred_check
        _
      $region10: #{tpu_custom_call.1} parent=5 // pred_check_branch
        %183 = sbr.rel (%p180) target = $region12
      $region11: #{tpu_custom_call.1} parent=5 // pred_region
        %s184 = ssub.s32 %s18, 1
        // Predicated region
        $region13: #{tpu_custom_call.1} parent=11 // pred_check
          %p185 = pneg %p79
        $region14: #{tpu_custom_call.1} parent=11 // pred_check_branch
          %187 = sbr.rel (%p185) target = $region16
        $region15: #{tpu_custom_call.1} parent=11 // pred_region
          _
        $region16: #{tpu_custom_call.1} parent=11 // pred_fallthru
          _
        // Predicated region
        $region17: #{tpu_custom_call.1} parent=11 // pred_check
          %p188 = pneg %p100
        $region18: #{tpu_custom_call.1} parent=11 // pred_check_branch
          %190 = sbr.rel (%p188) target = $region20
        $region19: #{tpu_custom_call.1} parent=11 // pred_region
          _
        $region20: #{tpu_custom_call.1} parent=11 // pred_fallthru
          _
        // Predicated region
        $region21: #{tpu_custom_call.1} parent=11 // pred_check
          %p191 = pneg %p121
        $region22: #{tpu_custom_call.1} parent=11 // pred_check_branch
          %193 = sbr.rel (%p191) target = $region24
        $region23: #{tpu_custom_call.1} parent=11 // pred_region
          %195 = vsyncadd [#allocation6], 0
          %s197 = sshll.u32 %s3, 4
          %s198 = int_to_ptr.hbm [resolvable:$true] %s197
          %s199 = sshll.u32 [#allocation5], 4
          %s200 = int_to_ptr.vmem [resolvable:$true] %s199
          %202 = dma.hbm_to_vmem [thread:$0]  %s198, 512, %s200, [#allocation6]
        $region24: #{tpu_custom_call.1} parent=11 // pred_fallthru
          _
        // Predicated region
        $region25: #{tpu_custom_call.1} parent=11 // pred_check
          %p203 = pneg %p142
        $region26: #{tpu_custom_call.1} parent=11 // pred_check_branch
          %205 = sbr.rel (%p203) target = $region28
        $region27: #{tpu_custom_call.1} parent=11 // pred_region
          _
        $region28: #{tpu_custom_call.1} parent=11 // pred_fallthru
          _
      $region12: #{tpu_custom_call.1} parent=5 // pred_fallthru
        _
      %p206 = scmp.lt.s32.totalorder %s18, 2
      // Predicated region
      $region29: #{tpu_custom_call.1} parent=5 // pred_check
        %p207 = pneg %p206
      $region30: #{tpu_custom_call.1} parent=5 // pred_check_branch
        %209 = sbr.rel (%p207) target = $region32
      $region31: #{tpu_custom_call.1} parent=5 // pred_region
        // Predicated region
        $region33: #{tpu_custom_call.1} parent=31 // pred_check
          %p210 = pneg %p52
        $region34: #{tpu_custom_call.1} parent=31 // pred_check_branch
          %212 = sbr.rel (%p210) target = $region36
        $region35: #{tpu_custom_call.1} parent=31 // pred_region
          %s213 = sand.u32 %s42, 1
          %s214 = scalar_lea.sflag [#allocation3], %s213
          %s215 = sand.u32 %s42, 1
          %s216 = smul.addr %s215, 128
          %s217 = scalar_lea.vmem [#allocation2], %s216
          %219 = vsyncadd %s214, 0
          %s220 = smul.addr %s25, 32
          %s221 = sadd.s32 %s26, %s220
          %s222 = smul.addr %s221, 4
          %s223 = scalar_lea.hbm %s0, %s222
          %s224 = sshll.u32 %s223, 4
          %s225 = int_to_ptr.hbm [resolvable:$true] %s224
          %s226 = sshll.u32 %s217, 4
          %s227 = int_to_ptr.vmem [resolvable:$true] %s226
          %232 = dma.hbm_to_vmem [thread:$0]  %s225, 2048, %s227, %s214, 64, 64, 4
        $region36: #{tpu_custom_call.1} parent=31 // pred_fallthru
          _
      $region32: #{tpu_custom_call.1} parent=5 // pred_fallthru
        _
      %p233 = scmp.le.s32.totalorder 1, %s18
      %p234 = scmp.lt.s32.totalorder %s18, 3
      %p235 = pnand %p233, %p234
      %p236 = pneg %p235
      // Predicated region
      $region37: #{tpu_custom_call.1} parent=5 // pred_check
        _
      $region38: #{tpu_custom_call.1} parent=5 // pred_check_branch
        %238 = sbr.rel (%p235) target = $region40
      $region39: #{tpu_custom_call.1} parent=5 // pred_region
        %s239 = ssub.s32 %s18, 1
        %s240 = sand.u32 %s45, 1
        %s241 = scalar_lea.sflag [#allocation3], %s240
        %s242 = sand.u32 %s45, 1
        %s243 = smul.addr %s242, 128
        %s244 = scalar_lea.vmem [#allocation2], %s243
        // Predicated region
        $region41: #{tpu_custom_call.1} parent=39 // pred_check
          %p245 = pneg %p58
        $region42: #{tpu_custom_call.1} parent=39 // pred_check_branch
          %247 = sbr.rel (%p245) target = $region44
        $region43: #{tpu_custom_call.1} parent=39 // pred_region
          %249 = dma.done %s241, 2048
        $region44: #{tpu_custom_call.1} parent=39 // pred_fallthru
          _
        // Predicated region
        $region45: #{tpu_custom_call.1} parent=39 // pred_check
          %p250 = pneg %p121
        $region46: #{tpu_custom_call.1} parent=39 // pred_check_branch
          %252 = sbr.rel (%p250) target = $region48
        $region47: #{tpu_custom_call.1} parent=39 // pred_region
          %254 = dma.done [#allocation6], 512
        $region48: #{tpu_custom_call.1} parent=39 // pred_fallthru
          _
        %s255 = sand.u32 %s45, 1
        %s256 = scalar_lea.sflag [#allocation3], %s255
        %s257 = sand.u32 %s45, 1
        %s258 = smul.addr %s257, 128
        %s259 = scalar_lea.vmem [#allocation2], %s258
        %p260 = pneg %p58
        %p261 = pneg %p55
        %p262 = pneg %p79
        %p263 = pneg %p76
        %p264 = pneg %p100
        %p265 = pneg %p97
        %p266 = pneg %p121
        %p267 = pneg %p118
        %p268 = pneg %p142
        %p269 = pneg %p139
        %p270 = pneg %p170
        %p271 = pneg %p167
        %s272 = sand.u32 %s157, 1
        %s273 = scalar_lea.sflag [#allocation4], %s272
        %s274 = sand.u32 %s157, 1
        %s275 = smul.addr %s274, 8
        %s276 = scalar_lea.vmem [#allocation7], %s275
        %v277 = vld [vmem:[%s244] sm:$0xf]
        %v278 = vld [vmem:[%s244 + $0x4] sm:$0xf]
        %v279 = vld [vmem:[%s244 + $0x8] sm:$0xf]
        %v280 = vld [vmem:[%s244 + $0xc] sm:$0xf]
        %v281 = vld [vmem:[%s244 + $0x10] sm:$0xf]
        %v282 = vld [vmem:[%s244 + $0x14] sm:$0xf]
        %v283 = vld [vmem:[%s244 + $0x18] sm:$0xf]
        %v284 = vld [vmem:[%s244 + $0x1c] sm:$0xf]
        %v285 = vld [vmem:[%s244 + $0x20] sm:$0xf]
        %v286 = vld [vmem:[%s244 + $0x24] sm:$0xf]
        %v287 = vld [vmem:[%s244 + $0x28] sm:$0xf]
        %v288 = vld [vmem:[%s244 + $0x2c] sm:$0xf]
        %v289 = vld [vmem:[%s244 + $0x30] sm:$0xf]
        %v290 = vld [vmem:[%s244 + $0x34] sm:$0xf]
        %v291 = vld [vmem:[%s244 + $0x38] sm:$0xf]
        %v292 = vld [vmem:[%s244 + $0x3c] sm:$0xf]
        %v293 = vld [vmem:[%s244 + $0x40] sm:$0xf]
        %v294 = vld [vmem:[%s244 + $0x44] sm:$0xf]
        %v295 = vld [vmem:[%s244 + $0x48] sm:$0xf]
        %v296 = vld [vmem:[%s244 + $0x4c] sm:$0xf]
        %v297 = vld [vmem:[%s244 + $0x50] sm:$0xf]
        %v298 = vld [vmem:[%s244 + $0x54] sm:$0xf]
        %v299 = vld [vmem:[%s244 + $0x58] sm:$0xf]
        %v300 = vld [vmem:[%s244 + $0x5c] sm:$0xf]
        %v301 = vld [vmem:[%s244 + $0x60] sm:$0xf]
        %v302 = vld [vmem:[%s244 + $0x64] sm:$0xf]
        %v303 = vld [vmem:[%s244 + $0x68] sm:$0xf]
        %v304 = vld [vmem:[%s244 + $0x6c] sm:$0xf]
        %v305 = vld [vmem:[%s244 + $0x70] sm:$0xf]
        %v306 = vld [vmem:[%s244 + $0x74] sm:$0xf]
        %v307 = vld [vmem:[%s244 + $0x78] sm:$0xf]
        %v308 = vld [vmem:[%s244 + $0x7c] sm:$0xf]
        %v309 = vld [vmem:[%s1] sm:$0xff]
        %v310 = vld [vmem:[%s1 + $0x8] sm:$0xff]
        %v311 = vld [vmem:[%s1 + $0x10] sm:$0xff]
        %v312 = vld [vmem:[%s1 + $0x18] sm:$0xff]
        %v313 = vld [vmem:[%s1 + $0x20] sm:$0xff]
        %v314 = vld [vmem:[%s1 + $0x28] sm:$0xff]
        %v315 = vld [vmem:[%s1 + $0x30] sm:$0xff]
        %v316 = vld [vmem:[%s1 + $0x38] sm:$0xff]
        %v317 = vld [vmem:[%s1 + $0x40] sm:$0xff]
        %v318 = vld [vmem:[%s1 + $0x48] sm:$0xff]
        %v319 = vld [vmem:[%s1 + $0x50] sm:$0xff]
        %v320 = vld [vmem:[%s1 + $0x58] sm:$0xff]
        %v321 = vld [vmem:[%s1 + $0x60] sm:$0xff]
        %v322 = vld [vmem:[%s1 + $0x68] sm:$0xff]
        %v323 = vld [vmem:[%s1 + $0x70] sm:$0xff]
        %v324 = vld [vmem:[%s1 + $0x78] sm:$0xff]
        %v325 = vld [vmem:[%s1 + $0x80] sm:$0xff]
        %v326 = vld [vmem:[%s1 + $0x88] sm:$0xff]
        %v327 = vld [vmem:[%s1 + $0x90] sm:$0xff]
        %v328 = vld [vmem:[%s1 + $0x98] sm:$0xff]
        %v329 = vld [vmem:[%s1 + $0xa0] sm:$0xff]
        %v330 = vld [vmem:[%s1 + $0xa8] sm:$0xff]
        %v331 = vld [vmem:[%s1 + $0xb0] sm:$0xff]
        %v332 = vld [vmem:[%s1 + $0xb8] sm:$0xff]
        %v333 = vld [vmem:[%s1 + $0xc0] sm:$0xff]
        %v334 = vld [vmem:[%s1 + $0xc8] sm:$0xff]
        %v335 = vld [vmem:[%s1 + $0xd0] sm:$0xff]
        %v336 = vld [vmem:[%s1 + $0xd8] sm:$0xff]
        %v337 = vld [vmem:[%s1 + $0xe0] sm:$0xff]
        %v338 = vld [vmem:[%s1 + $0xe8] sm:$0xff]
        %v339 = vld [vmem:[%s1 + $0xf0] sm:$0xff]
        %v340 = vld [vmem:[%s1 + $0xf8] sm:$0xff]
        %v341 = vld [vmem:[%s1 + $0x100] sm:$0xff]
        %v342 = vld [vmem:[%s1 + $0x108] sm:$0xff]
        %v343 = vld [vmem:[%s1 + $0x110] sm:$0xff]
        %v344 = vld [vmem:[%s1 + $0x118] sm:$0xff]
        %v345 = vld [vmem:[%s1 + $0x120] sm:$0xff]
        %v346 = vld [vmem:[%s1 + $0x128] sm:$0xff]
        %v347 = vld [vmem:[%s1 + $0x130] sm:$0xff]
        %v348 = vld [vmem:[%s1 + $0x138] sm:$0xff]
        %v349 = vld [vmem:[%s1 + $0x140] sm:$0xff]
        %v350 = vld [vmem:[%s1 + $0x148] sm:$0xff]
        %v351 = vld [vmem:[%s1 + $0x150] sm:$0xff]
        %v352 = vld [vmem:[%s1 + $0x158] sm:$0xff]
        %v353 = vld [vmem:[%s1 + $0x160] sm:$0xff]
        %v354 = vld [vmem:[%s1 + $0x168] sm:$0xff]
        %v355 = vld [vmem:[%s1 + $0x170] sm:$0xff]
        %v356 = vld [vmem:[%s1 + $0x178] sm:$0xff]
        %v357 = vld [vmem:[%s1 + $0x180] sm:$0xff]
        %v358 = vld [vmem:[%s1 + $0x188] sm:$0xff]
        %v359 = vld [vmem:[%s1 + $0x190] sm:$0xff]
        %v360 = vld [vmem:[%s1 + $0x198] sm:$0xff]
        %v361 = vld [vmem:[%s1 + $0x1a0] sm:$0xff]
        %v362 = vld [vmem:[%s1 + $0x1a8] sm:$0xff]
        %v363 = vld [vmem:[%s1 + $0x1b0] sm:$0xff]
        %v364 = vld [vmem:[%s1 + $0x1b8] sm:$0xff]
        %v365 = vld [vmem:[%s1 + $0x1c0] sm:$0xff]
        %v366 = vld [vmem:[%s1 + $0x1c8] sm:$0xff]
        %v367 = vld [vmem:[%s1 + $0x1d0] sm:$0xff]
        %v368 = vld [vmem:[%s1 + $0x1d8] sm:$0xff]
        %v369 = vld [vmem:[%s1 + $0x1e0] sm:$0xff]
        %v370 = vld [vmem:[%s1 + $0x1e8] sm:$0xff]
        %v371 = vld [vmem:[%s1 + $0x1f0] sm:$0xff]
        %v372 = vld [vmem:[%s1 + $0x1f8] sm:$0xff]
        %v373 = vld [vmem:[%s1 + $0x200] sm:$0xff]
        %v374 = vld [vmem:[%s1 + $0x208] sm:$0xff]
        %v375 = vld [vmem:[%s1 + $0x210] sm:$0xff]
        %v376 = vld [vmem:[%s1 + $0x218] sm:$0xff]
        %v377 = vld [vmem:[%s1 + $0x220] sm:$0xff]
        %v378 = vld [vmem:[%s1 + $0x228] sm:$0xff]
        %v379 = vld [vmem:[%s1 + $0x230] sm:$0xff]
        %v380 = vld [vmem:[%s1 + $0x238] sm:$0xff]
        %v381 = vld [vmem:[%s1 + $0x240] sm:$0xff]
        %v382 = vld [vmem:[%s1 + $0x248] sm:$0xff]
        %v383 = vld [vmem:[%s1 + $0x250] sm:$0xff]
        %v384 = vld [vmem:[%s1 + $0x258] sm:$0xff]
        %v385 = vld [vmem:[%s1 + $0x260] sm:$0xff]
        %v386 = vld [vmem:[%s1 + $0x268] sm:$0xff]
        %v387 = vld [vmem:[%s1 + $0x270] sm:$0xff]
        %v388 = vld [vmem:[%s1 + $0x278] sm:$0xff]
        %v389 = vld [vmem:[%s1 + $0x280] sm:$0xff]
        %v390 = vld [vmem:[%s1 + $0x288] sm:$0xff]
        %v391 = vld [vmem:[%s1 + $0x290] sm:$0xff]
        %v392 = vld [vmem:[%s1 + $0x298] sm:$0xff]
        %v393 = vld [vmem:[%s1 + $0x2a0] sm:$0xff]
        %v394 = vld [vmem:[%s1 + $0x2a8] sm:$0xff]
        %v395 = vld [vmem:[%s1 + $0x2b0] sm:$0xff]
        %v396 = vld [vmem:[%s1 + $0x2b8] sm:$0xff]
        %v397 = vld [vmem:[%s1 + $0x2c0] sm:$0xff]
        %v398 = vld [vmem:[%s1 + $0x2c8] sm:$0xff]
        %v399 = vld [vmem:[%s1 + $0x2d0] sm:$0xff]
        %v400 = vld [vmem:[%s1 + $0x2d8] sm:$0xff]
        %v401 = vld [vmem:[%s1 + $0x2e0] sm:$0xff]
        %v402 = vld [vmem:[%s1 + $0x2e8] sm:$0xff]
        %v403 = vld [vmem:[%s1 + $0x2f0] sm:$0xff]
        %v404 = vld [vmem:[%s1 + $0x2f8] sm:$0xff]
        %v405 = vld [vmem:[%s1 + $0x300] sm:$0xff]
        %v406 = vld [vmem:[%s1 + $0x308] sm:$0xff]
        %v407 = vld [vmem:[%s1 + $0x310] sm:$0xff]
        %v408 = vld [vmem:[%s1 + $0x318] sm:$0xff]
        %v409 = vld [vmem:[%s1 + $0x320] sm:$0xff]
        %v410 = vld [vmem:[%s1 + $0x328] sm:$0xff]
        %v411 = vld [vmem:[%s1 + $0x330] sm:$0xff]
        %v412 = vld [vmem:[%s1 + $0x338] sm:$0xff]
        %v413 = vld [vmem:[%s1 + $0x340] sm:$0xff]
        %v414 = vld [vmem:[%s1 + $0x348] sm:$0xff]
        %v415 = vld [vmem:[%s1 + $0x350] sm:$0xff]
        %v416 = vld [vmem:[%s1 + $0x358] sm:$0xff]
        %v417 = vld [vmem:[%s1 + $0x360] sm:$0xff]
        %v418 = vld [vmem:[%s1 + $0x368] sm:$0xff]
        %v419 = vld [vmem:[%s1 + $0x370] sm:$0xff]
        %v420 = vld [vmem:[%s1 + $0x378] sm:$0xff]
        %v421 = vld [vmem:[%s1 + $0x380] sm:$0xff]
        %v422 = vld [vmem:[%s1 + $0x388] sm:$0xff]
        %v423 = vld [vmem:[%s1 + $0x390] sm:$0xff]
        %v424 = vld [vmem:[%s1 + $0x398] sm:$0xff]
        %v425 = vld [vmem:[%s1 + $0x3a0] sm:$0xff]
        %v426 = vld [vmem:[%s1 + $0x3a8] sm:$0xff]
        %v427 = vld [vmem:[%s1 + $0x3b0] sm:$0xff]
        %v428 = vld [vmem:[%s1 + $0x3b8] sm:$0xff]
        %v429 = vld [vmem:[%s1 + $0x3c0] sm:$0xff]
        %v430 = vld [vmem:[%s1 + $0x3c8] sm:$0xff]
        %v431 = vld [vmem:[%s1 + $0x3d0] sm:$0xff]
        %v432 = vld [vmem:[%s1 + $0x3d8] sm:$0xff]
        %v433 = vld [vmem:[%s1 + $0x3e0] sm:$0xff]
        %v434 = vld [vmem:[%s1 + $0x3e8] sm:$0xff]
        %v435 = vld [vmem:[%s1 + $0x3f0] sm:$0xff]
        %v436 = vld [vmem:[%s1 + $0x3f8] sm:$0xff]
        %v437 = vld [vmem:[%s2] sm:$0xff]
        %v438 = vld [vmem:[%s2 + $0x8] sm:$0xff]
        %v439 = vld [vmem:[%s2 + $0x10] sm:$0xff]
        %v440 = vld [vmem:[%s2 + $0x18] sm:$0xff]
        %v441 = vld [vmem:[%s2 + $0x20] sm:$0xff]
        %v442 = vld [vmem:[%s2 + $0x28] sm:$0xff]
        %v443 = vld [vmem:[%s2 + $0x30] sm:$0xff]
        %v444 = vld [vmem:[%s2 + $0x38] sm:$0xff]
        %v445 = vld [vmem:[%s2 + $0x40] sm:$0xff]
        %v446 = vld [vmem:[%s2 + $0x48] sm:$0xff]
        %v447 = vld [vmem:[%s2 + $0x50] sm:$0xff]
        %v448 = vld [vmem:[%s2 + $0x58] sm:$0xff]
        %v449 = vld [vmem:[%s2 + $0x60] sm:$0xff]
        %v450 = vld [vmem:[%s2 + $0x68] sm:$0xff]
        %v451 = vld [vmem:[%s2 + $0x70] sm:$0xff]
        %v452 = vld [vmem:[%s2 + $0x78] sm:$0xff]
        %v453 = vld [vmem:[%s2 + $0x80] sm:$0xff]
        %v454 = vld [vmem:[%s2 + $0x88] sm:$0xff]
        %v455 = vld [vmem:[%s2 + $0x90] sm:$0xff]
        %v456 = vld [vmem:[%s2 + $0x98] sm:$0xff]
        %v457 = vld [vmem:[%s2 + $0xa0] sm:$0xff]
        %v458 = vld [vmem:[%s2 + $0xa8] sm:$0xff]
        %v459 = vld [vmem:[%s2 + $0xb0] sm:$0xff]
        %v460 = vld [vmem:[%s2 + $0xb8] sm:$0xff]
        %v461 = vld [vmem:[%s2 + $0xc0] sm:$0xff]
        %v462 = vld [vmem:[%s2 + $0xc8] sm:$0xff]
        %v463 = vld [vmem:[%s2 + $0xd0] sm:$0xff]
        %v464 = vld [vmem:[%s2 + $0xd8] sm:$0xff]
        %v465 = vld [vmem:[%s2 + $0xe0] sm:$0xff]
        %v466 = vld [vmem:[%s2 + $0xe8] sm:$0xff]
        %v467 = vld [vmem:[%s2 + $0xf0] sm:$0xff]
        %v468 = vld [vmem:[%s2 + $0xf8] sm:$0xff]
        %v469 = vld [vmem:[%s2 + $0x100] sm:$0xff]
        %v470 = vld [vmem:[%s2 + $0x108] sm:$0xff]
        %v471 = vld [vmem:[%s2 + $0x110] sm:$0xff]
        %v472 = vld [vmem:[%s2 + $0x118] sm:$0xff]
        %v473 = vld [vmem:[%s2 + $0x120] sm:$0xff]
        %v474 = vld [vmem:[%s2 + $0x128] sm:$0xff]
        %v475 = vld [vmem:[%s2 + $0x130] sm:$0xff]
        %v476 = vld [vmem:[%s2 + $0x138] sm:$0xff]
        %v477 = vld [vmem:[%s2 + $0x140] sm:$0xff]
        %v478 = vld [vmem:[%s2 + $0x148] sm:$0xff]
        %v479 = vld [vmem:[%s2 + $0x150] sm:$0xff]
        %v480 = vld [vmem:[%s2 + $0x158] sm:$0xff]
        %v481 = vld [vmem:[%s2 + $0x160] sm:$0xff]
        %v482 = vld [vmem:[%s2 + $0x168] sm:$0xff]
        %v483 = vld [vmem:[%s2 + $0x170] sm:$0xff]
        %v484 = vld [vmem:[%s2 + $0x178] sm:$0xff]
        %v485 = vld [vmem:[%s2 + $0x180] sm:$0xff]
        %v486 = vld [vmem:[%s2 + $0x188] sm:$0xff]
        %v487 = vld [vmem:[%s2 + $0x190] sm:$0xff]
        %v488 = vld [vmem:[%s2 + $0x198] sm:$0xff]
        %v489 = vld [vmem:[%s2 + $0x1a0] sm:$0xff]
        %v490 = vld [vmem:[%s2 + $0x1a8] sm:$0xff]
        %v491 = vld [vmem:[%s2 + $0x1b0] sm:$0xff]
        %v492 = vld [vmem:[%s2 + $0x1b8] sm:$0xff]
        %v493 = vld [vmem:[%s2 + $0x1c0] sm:$0xff]
        %v494 = vld [vmem:[%s2 + $0x1c8] sm:$0xff]
        %v495 = vld [vmem:[%s2 + $0x1d0] sm:$0xff]
        %v496 = vld [vmem:[%s2 + $0x1d8] sm:$0xff]
        %v497 = vld [vmem:[%s2 + $0x1e0] sm:$0xff]
        %v498 = vld [vmem:[%s2 + $0x1e8] sm:$0xff]
        %v499 = vld [vmem:[%s2 + $0x1f0] sm:$0xff]
        %v500 = vld [vmem:[%s2 + $0x1f8] sm:$0xff]
        %v501 = vld [vmem:[%s2 + $0x200] sm:$0xff]
        %v502 = vld [vmem:[%s2 + $0x208] sm:$0xff]
        %v503 = vld [vmem:[%s2 + $0x210] sm:$0xff]
        %v504 = vld [vmem:[%s2 + $0x218] sm:$0xff]
        %v505 = vld [vmem:[%s2 + $0x220] sm:$0xff]
        %v506 = vld [vmem:[%s2 + $0x228] sm:$0xff]
        %v507 = vld [vmem:[%s2 + $0x230] sm:$0xff]
        %v508 = vld [vmem:[%s2 + $0x238] sm:$0xff]
        %v509 = vld [vmem:[%s2 + $0x240] sm:$0xff]
        %v510 = vld [vmem:[%s2 + $0x248] sm:$0xff]
        %v511 = vld [vmem:[%s2 + $0x250] sm:$0xff]
        %v512 = vld [vmem:[%s2 + $0x258] sm:$0xff]
        %v513 = vld [vmem:[%s2 + $0x260] sm:$0xff]
        %v514 = vld [vmem:[%s2 + $0x268] sm:$0xff]
        %v515 = vld [vmem:[%s2 + $0x270] sm:$0xff]
        %v516 = vld [vmem:[%s2 + $0x278] sm:$0xff]
        %v517 = vld [vmem:[%s2 + $0x280] sm:$0xff]
        %v518 = vld [vmem:[%s2 + $0x288] sm:$0xff]
        %v519 = vld [vmem:[%s2 + $0x290] sm:$0xff]
        %v520 = vld [vmem:[%s2 + $0x298] sm:$0xff]
        %v521 = vld [vmem:[%s2 + $0x2a0] sm:$0xff]
        %v522 = vld [vmem:[%s2 + $0x2a8] sm:$0xff]
        %v523 = vld [vmem:[%s2 + $0x2b0] sm:$0xff]
        %v524 = vld [vmem:[%s2 + $0x2b8] sm:$0xff]
        %v525 = vld [vmem:[%s2 + $0x2c0] sm:$0xff]
        %v526 = vld [vmem:[%s2 + $0x2c8] sm:$0xff]
        %v527 = vld [vmem:[%s2 + $0x2d0] sm:$0xff]
        %v528 = vld [vmem:[%s2 + $0x2d8] sm:$0xff]
        %v529 = vld [vmem:[%s2 + $0x2e0] sm:$0xff]
        %v530 = vld [vmem:[%s2 + $0x2e8] sm:$0xff]
        %v531 = vld [vmem:[%s2 + $0x2f0] sm:$0xff]
        %v532 = vld [vmem:[%s2 + $0x2f8] sm:$0xff]
        %v533 = vld [vmem:[%s2 + $0x300] sm:$0xff]
        %v534 = vld [vmem:[%s2 + $0x308] sm:$0xff]
        %v535 = vld [vmem:[%s2 + $0x310] sm:$0xff]
        %v536 = vld [vmem:[%s2 + $0x318] sm:$0xff]
        %v537 = vld [vmem:[%s2 + $0x320] sm:$0xff]
        %v538 = vld [vmem:[%s2 + $0x328] sm:$0xff]
        %v539 = vld [vmem:[%s2 + $0x330] sm:$0xff]
        %v540 = vld [vmem:[%s2 + $0x338] sm:$0xff]
        %v541 = vld [vmem:[%s2 + $0x340] sm:$0xff]
        %v542 = vld [vmem:[%s2 + $0x348] sm:$0xff]
        %v543 = vld [vmem:[%s2 + $0x350] sm:$0xff]
        %v544 = vld [vmem:[%s2 + $0x358] sm:$0xff]
        %v545 = vld [vmem:[%s2 + $0x360] sm:$0xff]
        %v546 = vld [vmem:[%s2 + $0x368] sm:$0xff]
        %v547 = vld [vmem:[%s2 + $0x370] sm:$0xff]
        %v548 = vld [vmem:[%s2 + $0x378] sm:$0xff]
        %v549 = vld [vmem:[%s2 + $0x380] sm:$0xff]
        %v550 = vld [vmem:[%s2 + $0x388] sm:$0xff]
        %v551 = vld [vmem:[%s2 + $0x390] sm:$0xff]
        %v552 = vld [vmem:[%s2 + $0x398] sm:$0xff]
        %v553 = vld [vmem:[%s2 + $0x3a0] sm:$0xff]
        %v554 = vld [vmem:[%s2 + $0x3a8] sm:$0xff]
        %v555 = vld [vmem:[%s2 + $0x3b0] sm:$0xff]
        %v556 = vld [vmem:[%s2 + $0x3b8] sm:$0xff]
        %v557 = vld [vmem:[%s2 + $0x3c0] sm:$0xff]
        %v558 = vld [vmem:[%s2 + $0x3c8] sm:$0xff]
        %v559 = vld [vmem:[%s2 + $0x3d0] sm:$0xff]
        %v560 = vld [vmem:[%s2 + $0x3d8] sm:$0xff]
        %v561 = vld [vmem:[%s2 + $0x3e0] sm:$0xff]
        %v562 = vld [vmem:[%s2 + $0x3e8] sm:$0xff]
        %v563 = vld [vmem:[%s2 + $0x3f0] sm:$0xff]
        %v564 = vld [vmem:[%s2 + $0x3f8] sm:$0xff]
        %566 = vset.pattern.permute.xlu0 0
        %567 = vperm.xlu0 %566, %v437
        %v568 = vpop.permute.xlu0 %567
        %571 = vset.pattern.permute.xlu0 0
        %572 = vperm.xlu0 %571, %v438
        %v573 = vpop.permute.xlu0 %572
        %576 = vset.pattern.permute.xlu0 0
        %577 = vperm.xlu0 %576, %v439
        %v578 = vpop.permute.xlu0 %577
        %581 = vset.pattern.permute.xlu0 0
        %582 = vperm.xlu0 %581, %v440
        %v583 = vpop.permute.xlu0 %582
        %586 = vset.pattern.permute.xlu0 0
        %587 = vperm.xlu0 %586, %v441
        %v588 = vpop.permute.xlu0 %587
        %591 = vset.pattern.permute.xlu0 0
        %592 = vperm.xlu0 %591, %v442
        %v593 = vpop.permute.xlu0 %592
        %596 = vset.pattern.permute.xlu0 0
        %597 = vperm.xlu0 %596, %v443
        %v598 = vpop.permute.xlu0 %597
        %601 = vset.pattern.permute.xlu0 0
        %602 = vperm.xlu0 %601, %v444
        %v603 = vpop.permute.xlu0 %602
        %606 = vset.pattern.permute.xlu0 0
        %607 = vperm.xlu0 %606, %v445
        %v608 = vpop.permute.xlu0 %607
        %611 = vset.pattern.permute.xlu0 0
        %612 = vperm.xlu0 %611, %v446
        %v613 = vpop.permute.xlu0 %612
        %616 = vset.pattern.permute.xlu0 0
        %617 = vperm.xlu0 %616, %v447
        %v618 = vpop.permute.xlu0 %617
        %621 = vset.pattern.permute.xlu0 0
        %622 = vperm.xlu0 %621, %v448
        %v623 = vpop.permute.xlu0 %622
        %626 = vset.pattern.permute.xlu0 0
        %627 = vperm.xlu0 %626, %v449
        %v628 = vpop.permute.xlu0 %627
        %631 = vset.pattern.permute.xlu0 0
        %632 = vperm.xlu0 %631, %v450
        %v633 = vpop.permute.xlu0 %632
        %636 = vset.pattern.permute.xlu0 0
        %637 = vperm.xlu0 %636, %v451
        %v638 = vpop.permute.xlu0 %637
        %641 = vset.pattern.permute.xlu0 0
        %642 = vperm.xlu0 %641, %v452
        %v643 = vpop.permute.xlu0 %642
        %646 = vset.pattern.permute.xlu0 0
        %647 = vperm.xlu0 %646, %v453
        %v648 = vpop.permute.xlu0 %647
        %651 = vset.pattern.permute.xlu0 0
        %652 = vperm.xlu0 %651, %v454
        %v653 = vpop.permute.xlu0 %652
        %656 = vset.pattern.permute.xlu0 0
        %657 = vperm.xlu0 %656, %v455
        %v658 = vpop.permute.xlu0 %657
        %661 = vset.pattern.permute.xlu0 0
        %662 = vperm.xlu0 %661, %v456
        %v663 = vpop.permute.xlu0 %662
        %666 = vset.pattern.permute.xlu0 0
        %667 = vperm.xlu0 %666, %v457
        %v668 = vpop.permute.xlu0 %667
        %671 = vset.pattern.permute.xlu0 0
        %672 = vperm.xlu0 %671, %v458
        %v673 = vpop.permute.xlu0 %672
        %676 = vset.pattern.permute.xlu0 0
        %677 = vperm.xlu0 %676, %v459
        %v678 = vpop.permute.xlu0 %677
        %681 = vset.pattern.permute.xlu0 0
        %682 = vperm.xlu0 %681, %v460
        %v683 = vpop.permute.xlu0 %682
        %686 = vset.pattern.permute.xlu0 0
        %687 = vperm.xlu0 %686, %v461
        %v688 = vpop.permute.xlu0 %687
        %691 = vset.pattern.permute.xlu0 0
        %692 = vperm.xlu0 %691, %v462
        %v693 = vpop.permute.xlu0 %692
        %696 = vset.pattern.permute.xlu0 0
        %697 = vperm.xlu0 %696, %v463
        %v698 = vpop.permute.xlu0 %697
        %701 = vset.pattern.permute.xlu0 0
        %702 = vperm.xlu0 %701, %v464
        %v703 = vpop.permute.xlu0 %702
        %706 = vset.pattern.permute.xlu0 0
        %707 = vperm.xlu0 %706, %v465
        %v708 = vpop.permute.xlu0 %707
        %711 = vset.pattern.permute.xlu0 0
        %712 = vperm.xlu0 %711, %v466
        %v713 = vpop.permute.xlu0 %712
        %716 = vset.pattern.permute.xlu0 0
        %717 = vperm.xlu0 %716, %v467
        %v718 = vpop.permute.xlu0 %717
        %721 = vset.pattern.permute.xlu0 0
        %722 = vperm.xlu0 %721, %v468
        %v723 = vpop.permute.xlu0 %722
        %726 = vset.pattern.permute.xlu0 0
        %727 = vperm.xlu0 %726, %v469
        %v728 = vpop.permute.xlu0 %727
        %731 = vset.pattern.permute.xlu0 0
        %732 = vperm.xlu0 %731, %v470
        %v733 = vpop.permute.xlu0 %732
        %736 = vset.pattern.permute.xlu0 0
        %737 = vperm.xlu0 %736, %v471
        %v738 = vpop.permute.xlu0 %737
        %741 = vset.pattern.permute.xlu0 0
        %742 = vperm.xlu0 %741, %v472
        %v743 = vpop.permute.xlu0 %742
        %746 = vset.pattern.permute.xlu0 0
        %747 = vperm.xlu0 %746, %v473
        %v748 = vpop.permute.xlu0 %747
        %751 = vset.pattern.permute.xlu0 0
        %752 = vperm.xlu0 %751, %v474
        %v753 = vpop.permute.xlu0 %752
        %756 = vset.pattern.permute.xlu0 0
        %757 = vperm.xlu0 %756, %v475
        %v758 = vpop.permute.xlu0 %757
        %761 = vset.pattern.permute.xlu0 0
        %762 = vperm.xlu0 %761, %v476
        %v763 = vpop.permute.xlu0 %762
        %766 = vset.pattern.permute.xlu0 0
        %767 = vperm.xlu0 %766, %v477
        %v768 = vpop.permute.xlu0 %767
        %771 = vset.pattern.permute.xlu0 0
        %772 = vperm.xlu0 %771, %v478
        %v773 = vpop.permute.xlu0 %772
        %776 = vset.pattern.permute.xlu0 0
        %777 = vperm.xlu0 %776, %v479
        %v778 = vpop.permute.xlu0 %777
        %781 = vset.pattern.permute.xlu0 0
        %782 = vperm.xlu0 %781, %v480
        %v783 = vpop.permute.xlu0 %782
        %786 = vset.pattern.permute.xlu0 0
        %787 = vperm.xlu0 %786, %v481
        %v788 = vpop.permute.xlu0 %787
        %791 = vset.pattern.permute.xlu0 0
        %792 = vperm.xlu0 %791, %v482
        %v793 = vpop.permute.xlu0 %792
        %796 = vset.pattern.permute.xlu0 0
        %797 = vperm.xlu0 %796, %v483
        %v798 = vpop.permute.xlu0 %797
        %801 = vset.pattern.permute.xlu0 0
        %802 = vperm.xlu0 %801, %v484
        %v803 = vpop.permute.xlu0 %802
        %806 = vset.pattern.permute.xlu0 0
        %807 = vperm.xlu0 %806, %v485
        %v808 = vpop.permute.xlu0 %807
        %811 = vset.pattern.permute.xlu0 0
        %812 = vperm.xlu0 %811, %v486
        %v813 = vpop.permute.xlu0 %812
        %816 = vset.pattern.permute.xlu0 0
        %817 = vperm.xlu0 %816, %v487
        %v818 = vpop.permute.xlu0 %817
        %821 = vset.pattern.permute.xlu0 0
        %822 = vperm.xlu0 %821, %v488
        %v823 = vpop.permute.xlu0 %822
        %826 = vset.pattern.permute.xlu0 0
        %827 = vperm.xlu0 %826, %v489
        %v828 = vpop.permute.xlu0 %827
        %831 = vset.pattern.permute.xlu0 0
        %832 = vperm.xlu0 %831, %v490
        %v833 = vpop.permute.xlu0 %832
        %836 = vset.pattern.permute.xlu0 0
        %837 = vperm.xlu0 %836, %v491
        %v838 = vpop.permute.xlu0 %837
        %841 = vset.pattern.permute.xlu0 0
        %842 = vperm.xlu0 %841, %v492
        %v843 = vpop.permute.xlu0 %842
        %846 = vset.pattern.permute.xlu0 0
        %847 = vperm.xlu0 %846, %v493
        %v848 = vpop.permute.xlu0 %847
        %851 = vset.pattern.permute.xlu0 0
        %852 = vperm.xlu0 %851, %v494
        %v853 = vpop.permute.xlu0 %852
        %856 = vset.pattern.permute.xlu0 0
        %857 = vperm.xlu0 %856, %v495
        %v858 = vpop.permute.xlu0 %857
        %861 = vset.pattern.permute.xlu0 0
        %862 = vperm.xlu0 %861, %v496
        %v863 = vpop.permute.xlu0 %862
        %866 = vset.pattern.permute.xlu0 0
        %867 = vperm.xlu0 %866, %v497
        %v868 = vpop.permute.xlu0 %867
        %871 = vset.pattern.permute.xlu0 0
        %872 = vperm.xlu0 %871, %v498
        %v873 = vpop.permute.xlu0 %872
        %876 = vset.pattern.permute.xlu0 0
        %877 = vperm.xlu0 %876, %v499
        %v878 = vpop.permute.xlu0 %877
        %881 = vset.pattern.permute.xlu0 0
        %882 = vperm.xlu0 %881, %v500
        %v883 = vpop.permute.xlu0 %882
        %886 = vset.pattern.permute.xlu0 0
        %887 = vperm.xlu0 %886, %v501
        %v888 = vpop.permute.xlu0 %887
        %891 = vset.pattern.permute.xlu0 0
        %892 = vperm.xlu0 %891, %v502
        %v893 = vpop.permute.xlu0 %892
        %896 = vset.pattern.permute.xlu0 0
        %897 = vperm.xlu0 %896, %v503
        %v898 = vpop.permute.xlu0 %897
        %901 = vset.pattern.permute.xlu0 0
        %902 = vperm.xlu0 %901, %v504
        %v903 = vpop.permute.xlu0 %902
        %906 = vset.pattern.permute.xlu0 0
        %907 = vperm.xlu0 %906, %v505
        %v908 = vpop.permute.xlu0 %907
        %911 = vset.pattern.permute.xlu0 0
        %912 = vperm.xlu0 %911, %v506
        %v913 = vpop.permute.xlu0 %912
        %916 = vset.pattern.permute.xlu0 0
        %917 = vperm.xlu0 %916, %v507
        %v918 = vpop.permute.xlu0 %917
        %921 = vset.pattern.permute.xlu0 0
        %922 = vperm.xlu0 %921, %v508
        %v923 = vpop.permute.xlu0 %922
        %926 = vset.pattern.permute.xlu0 0
        %927 = vperm.xlu0 %926, %v509
        %v928 = vpop.permute.xlu0 %927
        %931 = vset.pattern.permute.xlu0 0
        %932 = vperm.xlu0 %931, %v510
        %v933 = vpop.permute.xlu0 %932
        %936 = vset.pattern.permute.xlu0 0
        %937 = vperm.xlu0 %936, %v511
        %v938 = vpop.permute.xlu0 %937
        %941 = vset.pattern.permute.xlu0 0
        %942 = vperm.xlu0 %941, %v512
        %v943 = vpop.permute.xlu0 %942
        %946 = vset.pattern.permute.xlu0 0
        %947 = vperm.xlu0 %946, %v513
        %v948 = vpop.permute.xlu0 %947
        %951 = vset.pattern.permute.xlu0 0
        %952 = vperm.xlu0 %951, %v514
        %v953 = vpop.permute.xlu0 %952
        %956 = vset.pattern.permute.xlu0 0
        %957 = vperm.xlu0 %956, %v515
        %v958 = vpop.permute.xlu0 %957
        %961 = vset.pattern.permute.xlu0 0
        %962 = vperm.xlu0 %961, %v516
        %v963 = vpop.permute.xlu0 %962
        %966 = vset.pattern.permute.xlu0 0
        %967 = vperm.xlu0 %966, %v517
        %v968 = vpop.permute.xlu0 %967
        %971 = vset.pattern.permute.xlu0 0
        %972 = vperm.xlu0 %971, %v518
        %v973 = vpop.permute.xlu0 %972
        %976 = vset.pattern.permute.xlu0 0
        %977 = vperm.xlu0 %976, %v519
        %v978 = vpop.permute.xlu0 %977
        %981 = vset.pattern.permute.xlu0 0
        %982 = vperm.xlu0 %981, %v520
        %v983 = vpop.permute.xlu0 %982
        %986 = vset.pattern.permute.xlu0 0
        %987 = vperm.xlu0 %986, %v521
        %v988 = vpop.permute.xlu0 %987
        %991 = vset.pattern.permute.xlu0 0
        %992 = vperm.xlu0 %991, %v522
        %v993 = vpop.permute.xlu0 %992
        %996 = vset.pattern.permute.xlu0 0
        %997 = vperm.xlu0 %996, %v523
        %v998 = vpop.permute.xlu0 %997
        %1001 = vset.pattern.permute.xlu0 0
        %1002 = vperm.xlu0 %1001, %v524
        %v1003 = vpop.permute.xlu0 %1002
        %1006 = vset.pattern.permute.xlu0 0
        %1007 = vperm.xlu0 %1006, %v525
        %v1008 = vpop.permute.xlu0 %1007
        %1011 = vset.pattern.permute.xlu0 0
        %1012 = vperm.xlu0 %1011, %v526
        %v1013 = vpop.permute.xlu0 %1012
        %1016 = vset.pattern.permute.xlu0 0
        %1017 = vperm.xlu0 %1016, %v527
        %v1018 = vpop.permute.xlu0 %1017
        %1021 = vset.pattern.permute.xlu0 0
        %1022 = vperm.xlu0 %1021, %v528
        %v1023 = vpop.permute.xlu0 %1022
        %1026 = vset.pattern.permute.xlu0 0
        %1027 = vperm.xlu0 %1026, %v529
        %v1028 = vpop.permute.xlu0 %1027
        %1031 = vset.pattern.permute.xlu0 0
        %1032 = vperm.xlu0 %1031, %v530
        %v1033 = vpop.permute.xlu0 %1032
        %1036 = vset.pattern.permute.xlu0 0
        %1037 = vperm.xlu0 %1036, %v531
        %v1038 = vpop.permute.xlu0 %1037
        %1041 = vset.pattern.permute.xlu0 0
        %1042 = vperm.xlu0 %1041, %v532
        %v1043 = vpop.permute.xlu0 %1042
        %1046 = vset.pattern.permute.xlu0 0
        %1047 = vperm.xlu0 %1046, %v533
        %v1048 = vpop.permute.xlu0 %1047
        %1051 = vset.pattern.permute.xlu0 0
        %1052 = vperm.xlu0 %1051, %v534
        %v1053 = vpop.permute.xlu0 %1052
        %1056 = vset.pattern.permute.xlu0 0
        %1057 = vperm.xlu0 %1056, %v535
        %v1058 = vpop.permute.xlu0 %1057
        %1061 = vset.pattern.permute.xlu0 0
        %1062 = vperm.xlu0 %1061, %v536
        %v1063 = vpop.permute.xlu0 %1062
        %1066 = vset.pattern.permute.xlu0 0
        %1067 = vperm.xlu0 %1066, %v537
        %v1068 = vpop.permute.xlu0 %1067
        %1071 = vset.pattern.permute.xlu0 0
        %1072 = vperm.xlu0 %1071, %v538
        %v1073 = vpop.permute.xlu0 %1072
        %1076 = vset.pattern.permute.xlu0 0
        %1077 = vperm.xlu0 %1076, %v539
        %v1078 = vpop.permute.xlu0 %1077
        %1081 = vset.pattern.permute.xlu0 0
        %1082 = vperm.xlu0 %1081, %v540
        %v1083 = vpop.permute.xlu0 %1082
        %1086 = vset.pattern.permute.xlu0 0
        %1087 = vperm.xlu0 %1086, %v541
        %v1088 = vpop.permute.xlu0 %1087
        %1091 = vset.pattern.permute.xlu0 0
        %1092 = vperm.xlu0 %1091, %v542
        %v1093 = vpop.permute.xlu0 %1092
        %1096 = vset.pattern.permute.xlu0 0
        %1097 = vperm.xlu0 %1096, %v543
        %v1098 = vpop.permute.xlu0 %1097
        %1101 = vset.pattern.permute.xlu0 0
        %1102 = vperm.xlu0 %1101, %v544
        %v1103 = vpop.permute.xlu0 %1102
        %1106 = vset.pattern.permute.xlu0 0
        %1107 = vperm.xlu0 %1106, %v545
        %v1108 = vpop.permute.xlu0 %1107
        %1111 = vset.pattern.permute.xlu0 0
        %1112 = vperm.xlu0 %1111, %v546
        %v1113 = vpop.permute.xlu0 %1112
        %1116 = vset.pattern.permute.xlu0 0
        %1117 = vperm.xlu0 %1116, %v547
        %v1118 = vpop.permute.xlu0 %1117
        %1121 = vset.pattern.permute.xlu0 0
        %1122 = vperm.xlu0 %1121, %v548
        %v1123 = vpop.permute.xlu0 %1122
        %1126 = vset.pattern.permute.xlu0 0
        %1127 = vperm.xlu0 %1126, %v549
        %v1128 = vpop.permute.xlu0 %1127
        %1131 = vset.pattern.permute.xlu0 0
        %1132 = vperm.xlu0 %1131, %v550
        %v1133 = vpop.permute.xlu0 %1132
        %1136 = vset.pattern.permute.xlu0 0
        %1137 = vperm.xlu0 %1136, %v551
        %v1138 = vpop.permute.xlu0 %1137
        %1141 = vset.pattern.permute.xlu0 0
        %1142 = vperm.xlu0 %1141, %v552
        %v1143 = vpop.permute.xlu0 %1142
        %1146 = vset.pattern.permute.xlu0 0
        %1147 = vperm.xlu0 %1146, %v553
        %v1148 = vpop.permute.xlu0 %1147
        %1151 = vset.pattern.permute.xlu0 0
        %1152 = vperm.xlu0 %1151, %v554
        %v1153 = vpop.permute.xlu0 %1152
        %1156 = vset.pattern.permute.xlu0 0
        %1157 = vperm.xlu0 %1156, %v555
        %v1158 = vpop.permute.xlu0 %1157
        %1161 = vset.pattern.permute.xlu0 0
        %1162 = vperm.xlu0 %1161, %v556
        %v1163 = vpop.permute.xlu0 %1162
        %1166 = vset.pattern.permute.xlu0 0
        %1167 = vperm.xlu0 %1166, %v557
        %v1168 = vpop.permute.xlu0 %1167
        %1171 = vset.pattern.permute.xlu0 0
        %1172 = vperm.xlu0 %1171, %v558
        %v1173 = vpop.permute.xlu0 %1172
        %1176 = vset.pattern.permute.xlu0 0
        %1177 = vperm.xlu0 %1176, %v559
        %v1178 = vpop.permute.xlu0 %1177
        %1181 = vset.pattern.permute.xlu0 0
        %1182 = vperm.xlu0 %1181, %v560
        %v1183 = vpop.permute.xlu0 %1182
        %1186 = vset.pattern.permute.xlu0 0
        %1187 = vperm.xlu0 %1186, %v561
        %v1188 = vpop.permute.xlu0 %1187
        %1191 = vset.pattern.permute.xlu0 0
        %1192 = vperm.xlu0 %1191, %v562
        %v1193 = vpop.permute.xlu0 %1192
        %1196 = vset.pattern.permute.xlu0 0
        %1197 = vperm.xlu0 %1196, %v563
        %v1198 = vpop.permute.xlu0 %1197
        %1201 = vset.pattern.permute.xlu0 0
        %1202 = vperm.xlu0 %1201, %v564
        %v1203 = vpop.permute.xlu0 %1202
        %v1333 = vunpack.c.l.b16 %v309
        %v1334 = vunpack.c.h.b16 %v309
        %v1335 = vunpack.c.l.b16 %v310
        %v1336 = vunpack.c.h.b16 %v310
        %v1337 = vunpack.c.l.b16 %v311
        %v1338 = vunpack.c.h.b16 %v311
        %v1339 = vunpack.c.l.b16 %v312
        %v1340 = vunpack.c.h.b16 %v312
        %v1341 = vunpack.c.l.b16 %v313
        %v1342 = vunpack.c.h.b16 %v313
        %v1343 = vunpack.c.l.b16 %v314
        %v1344 = vunpack.c.h.b16 %v314
        %v1345 = vunpack.c.l.b16 %v315
        %v1346 = vunpack.c.h.b16 %v315
        %v1347 = vunpack.c.l.b16 %v316
        %v1348 = vunpack.c.h.b16 %v316
        %v1349 = vunpack.c.l.b16 %v317
        %v1350 = vunpack.c.h.b16 %v317
        %v1351 = vunpack.c.l.b16 %v318
        %v1352 = vunpack.c.h.b16 %v318
        %v1353 = vunpack.c.l.b16 %v319
        %v1354 = vunpack.c.h.b16 %v319
        %v1355 = vunpack.c.l.b16 %v320
        %v1356 = vunpack.c.h.b16 %v320
        %v1357 = vunpack.c.l.b16 %v321
        %v1358 = vunpack.c.h.b16 %v321
        %v1359 = vunpack.c.l.b16 %v322
        %v1360 = vunpack.c.h.b16 %v322
        %v1361 = vunpack.c.l.b16 %v323
        %v1362 = vunpack.c.h.b16 %v323
        %v1363 = vunpack.c.l.b16 %v324
        %v1364 = vunpack.c.h.b16 %v324
        %v1365 = vunpack.c.l.b16 %v325
        %v1366 = vunpack.c.h.b16 %v325
        %v1367 = vunpack.c.l.b16 %v326
        %v1368 = vunpack.c.h.b16 %v326
        %v1369 = vunpack.c.l.b16 %v327
        %v1370 = vunpack.c.h.b16 %v327
        %v1371 = vunpack.c.l.b16 %v328
        %v1372 = vunpack.c.h.b16 %v328
        %v1373 = vunpack.c.l.b16 %v329
        %v1374 = vunpack.c.h.b16 %v329
        %v1375 = vunpack.c.l.b16 %v330
        %v1376 = vunpack.c.h.b16 %v330
        %v1377 = vunpack.c.l.b16 %v331
        %v1378 = vunpack.c.h.b16 %v331
        %v1379 = vunpack.c.l.b16 %v332
        %v1380 = vunpack.c.h.b16 %v332
        %v1381 = vunpack.c.l.b16 %v333
        %v1382 = vunpack.c.h.b16 %v333
        %v1383 = vunpack.c.l.b16 %v334
        %v1384 = vunpack.c.h.b16 %v334
        %v1385 = vunpack.c.l.b16 %v335
        %v1386 = vunpack.c.h.b16 %v335
        %v1387 = vunpack.c.l.b16 %v336
        %v1388 = vunpack.c.h.b16 %v336
        %v1389 = vunpack.c.l.b16 %v337
        %v1390 = vunpack.c.h.b16 %v337
        %v1391 = vunpack.c.l.b16 %v338
        %v1392 = vunpack.c.h.b16 %v338
        %v1393 = vunpack.c.l.b16 %v339
        %v1394 = vunpack.c.h.b16 %v339
        %v1395 = vunpack.c.l.b16 %v340
        %v1396 = vunpack.c.h.b16 %v340
        %v1397 = vunpack.c.l.b16 %v341
        %v1398 = vunpack.c.h.b16 %v341
        %v1399 = vunpack.c.l.b16 %v342
        %v1400 = vunpack.c.h.b16 %v342
        %v1401 = vunpack.c.l.b16 %v343
        %v1402 = vunpack.c.h.b16 %v343
        %v1403 = vunpack.c.l.b16 %v344
        %v1404 = vunpack.c.h.b16 %v344
        %v1405 = vunpack.c.l.b16 %v345
        %v1406 = vunpack.c.h.b16 %v345
        %v1407 = vunpack.c.l.b16 %v346
        %v1408 = vunpack.c.h.b16 %v346
        %v1409 = vunpack.c.l.b16 %v347
        %v1410 = vunpack.c.h.b16 %v347
        %v1411 = vunpack.c.l.b16 %v348
        %v1412 = vunpack.c.h.b16 %v348
        %v1413 = vunpack.c.l.b16 %v349
        %v1414 = vunpack.c.h.b16 %v349
        %v1415 = vunpack.c.l.b16 %v350
        %v1416 = vunpack.c.h.b16 %v350
        %v1417 = vunpack.c.l.b16 %v351
        %v1418 = vunpack.c.h.b16 %v351
        %v1419 = vunpack.c.l.b16 %v352
        %v1420 = vunpack.c.h.b16 %v352
        %v1421 = vunpack.c.l.b16 %v353
        %v1422 = vunpack.c.h.b16 %v353
        %v1423 = vunpack.c.l.b16 %v354
        %v1424 = vunpack.c.h.b16 %v354
        %v1425 = vunpack.c.l.b16 %v355
        %v1426 = vunpack.c.h.b16 %v355
        %v1427 = vunpack.c.l.b16 %v356
        %v1428 = vunpack.c.h.b16 %v356
        %v1429 = vunpack.c.l.b16 %v357
        %v1430 = vunpack.c.h.b16 %v357
        %v1431 = vunpack.c.l.b16 %v358
        %v1432 = vunpack.c.h.b16 %v358
        %v1433 = vunpack.c.l.b16 %v359
        %v1434 = vunpack.c.h.b16 %v359
        %v1435 = vunpack.c.l.b16 %v360
        %v1436 = vunpack.c.h.b16 %v360
        %v1437 = vunpack.c.l.b16 %v361
        %v1438 = vunpack.c.h.b16 %v361
        %v1439 = vunpack.c.l.b16 %v362
        %v1440 = vunpack.c.h.b16 %v362
        %v1441 = vunpack.c.l.b16 %v363
        %v1442 = vunpack.c.h.b16 %v363
        %v1443 = vunpack.c.l.b16 %v364
        %v1444 = vunpack.c.h.b16 %v364
        %v1445 = vunpack.c.l.b16 %v365
        %v1446 = vunpack.c.h.b16 %v365
        %v1447 = vunpack.c.l.b16 %v366
        %v1448 = vunpack.c.h.b16 %v366
        %v1449 = vunpack.c.l.b16 %v367
        %v1450 = vunpack.c.h.b16 %v367
        %v1451 = vunpack.c.l.b16 %v368
        %v1452 = vunpack.c.h.b16 %v368
        %v1453 = vunpack.c.l.b16 %v369
        %v1454 = vunpack.c.h.b16 %v369
        %v1455 = vunpack.c.l.b16 %v370
        %v1456 = vunpack.c.h.b16 %v370
        %v1457 = vunpack.c.l.b16 %v371
        %v1458 = vunpack.c.h.b16 %v371
        %v1459 = vunpack.c.l.b16 %v372
        %v1460 = vunpack.c.h.b16 %v372
        %v1461 = vunpack.c.l.b16 %v373
        %v1462 = vunpack.c.h.b16 %v373
        %v1463 = vunpack.c.l.b16 %v374
        %v1464 = vunpack.c.h.b16 %v374
        %v1465 = vunpack.c.l.b16 %v375
        %v1466 = vunpack.c.h.b16 %v375
        %v1467 = vunpack.c.l.b16 %v376
        %v1468 = vunpack.c.h.b16 %v376
        %v1469 = vunpack.c.l.b16 %v377
        %v1470 = vunpack.c.h.b16 %v377
        %v1471 = vunpack.c.l.b16 %v378
        %v1472 = vunpack.c.h.b16 %v378
        %v1473 = vunpack.c.l.b16 %v379
        %v1474 = vunpack.c.h.b16 %v379
        %v1475 = vunpack.c.l.b16 %v380
        %v1476 = vunpack.c.h.b16 %v380
        %v1477 = vunpack.c.l.b16 %v381
        %v1478 = vunpack.c.h.b16 %v381
        %v1479 = vunpack.c.l.b16 %v382
        %v1480 = vunpack.c.h.b16 %v382
        %v1481 = vunpack.c.l.b16 %v383
        %v1482 = vunpack.c.h.b16 %v383
        %v1483 = vunpack.c.l.b16 %v384
        %v1484 = vunpack.c.h.b16 %v384
        %v1485 = vunpack.c.l.b16 %v385
        %v1486 = vunpack.c.h.b16 %v385
        %v1487 = vunpack.c.l.b16 %v386
        %v1488 = vunpack.c.h.b16 %v386
        %v1489 = vunpack.c.l.b16 %v387
        %v1490 = vunpack.c.h.b16 %v387
        %v1491 = vunpack.c.l.b16 %v388
        %v1492 = vunpack.c.h.b16 %v388
        %v1493 = vunpack.c.l.b16 %v389
        %v1494 = vunpack.c.h.b16 %v389
        %v1495 = vunpack.c.l.b16 %v390
        %v1496 = vunpack.c.h.b16 %v390
        %v1497 = vunpack.c.l.b16 %v391
        %v1498 = vunpack.c.h.b16 %v391
        %v1499 = vunpack.c.l.b16 %v392
        %v1500 = vunpack.c.h.b16 %v392
        %v1501 = vunpack.c.l.b16 %v393
        %v1502 = vunpack.c.h.b16 %v393
        %v1503 = vunpack.c.l.b16 %v394
        %v1504 = vunpack.c.h.b16 %v394
        %v1505 = vunpack.c.l.b16 %v395
        %v1506 = vunpack.c.h.b16 %v395
        %v1507 = vunpack.c.l.b16 %v396
        %v1508 = vunpack.c.h.b16 %v396
        %v1509 = vunpack.c.l.b16 %v397
        %v1510 = vunpack.c.h.b16 %v397
        %v1511 = vunpack.c.l.b16 %v398
        %v1512 = vunpack.c.h.b16 %v398
        %v1513 = vunpack.c.l.b16 %v399
        %v1514 = vunpack.c.h.b16 %v399
        %v1515 = vunpack.c.l.b16 %v400
        %v1516 = vunpack.c.h.b16 %v400
        %v1517 = vunpack.c.l.b16 %v401
        %v1518 = vunpack.c.h.b16 %v401
        %v1519 = vunpack.c.l.b16 %v402
        %v1520 = vunpack.c.h.b16 %v402
        %v1521 = vunpack.c.l.b16 %v403
        %v1522 = vunpack.c.h.b16 %v403
        %v1523 = vunpack.c.l.b16 %v404
        %v1524 = vunpack.c.h.b16 %v404
        %v1525 = vunpack.c.l.b16 %v405
        %v1526 = vunpack.c.h.b16 %v405
        %v1527 = vunpack.c.l.b16 %v406
        %v1528 = vunpack.c.h.b16 %v406
        %v1529 = vunpack.c.l.b16 %v407
        %v1530 = vunpack.c.h.b16 %v407
        %v1531 = vunpack.c.l.b16 %v408
        %v1532 = vunpack.c.h.b16 %v408
        %v1533 = vunpack.c.l.b16 %v409
        %v1534 = vunpack.c.h.b16 %v409
        %v1535 = vunpack.c.l.b16 %v410
        %v1536 = vunpack.c.h.b16 %v410
        %v1537 = vunpack.c.l.b16 %v411
        %v1538 = vunpack.c.h.b16 %v411
        %v1539 = vunpack.c.l.b16 %v412
        %v1540 = vunpack.c.h.b16 %v412
        %v1541 = vunpack.c.l.b16 %v413
        %v1542 = vunpack.c.h.b16 %v413
        %v1543 = vunpack.c.l.b16 %v414
        %v1544 = vunpack.c.h.b16 %v414
        %v1545 = vunpack.c.l.b16 %v415
        %v1546 = vunpack.c.h.b16 %v415
        %v1547 = vunpack.c.l.b16 %v416
        %v1548 = vunpack.c.h.b16 %v416
        %v1549 = vunpack.c.l.b16 %v417
        %v1550 = vunpack.c.h.b16 %v417
        %v1551 = vunpack.c.l.b16 %v418
        %v1552 = vunpack.c.h.b16 %v418
        %v1553 = vunpack.c.l.b16 %v419
        %v1554 = vunpack.c.h.b16 %v419
        %v1555 = vunpack.c.l.b16 %v420
        %v1556 = vunpack.c.h.b16 %v420
        %v1557 = vunpack.c.l.b16 %v421
        %v1558 = vunpack.c.h.b16 %v421
        %v1559 = vunpack.c.l.b16 %v422
        %v1560 = vunpack.c.h.b16 %v422
        %v1561 = vunpack.c.l.b16 %v423
        %v1562 = vunpack.c.h.b16 %v423
        %v1563 = vunpack.c.l.b16 %v424
        %v1564 = vunpack.c.h.b16 %v424
        %v1565 = vunpack.c.l.b16 %v425
        %v1566 = vunpack.c.h.b16 %v425
        %v1567 = vunpack.c.l.b16 %v426
        %v1568 = vunpack.c.h.b16 %v426
        %v1569 = vunpack.c.l.b16 %v427
        %v1570 = vunpack.c.h.b16 %v427
        %v1571 = vunpack.c.l.b16 %v428
        %v1572 = vunpack.c.h.b16 %v428
        %v1573 = vunpack.c.l.b16 %v429
        %v1574 = vunpack.c.h.b16 %v429
        %v1575 = vunpack.c.l.b16 %v430
        %v1576 = vunpack.c.h.b16 %v430
        %v1577 = vunpack.c.l.b16 %v431
        %v1578 = vunpack.c.h.b16 %v431
        %v1579 = vunpack.c.l.b16 %v432
        %v1580 = vunpack.c.h.b16 %v432
        %v1581 = vunpack.c.l.b16 %v433
        %v1582 = vunpack.c.h.b16 %v433
        %v1583 = vunpack.c.l.b16 %v434
        %v1584 = vunpack.c.h.b16 %v434
        %v1585 = vunpack.c.l.b16 %v435
        %v1586 = vunpack.c.h.b16 %v435
        %v1587 = vunpack.c.l.b16 %v436
        %v1588 = vunpack.c.h.b16 %v436
        %v1589 = vpack.c.b16 %v1335, %v1333
        %v1590 = vpack.c.b16 %v1336, %v1334
        %v1591 = vpack.c.b16 %v1339, %v1337
        %v1592 = vpack.c.b16 %v1340, %v1338
        %v1593 = vpack.c.b16 %v1343, %v1341
        %v1594 = vpack.c.b16 %v1344, %v1342
        %v1595 = vpack.c.b16 %v1347, %v1345
        %v1596 = vpack.c.b16 %v1348, %v1346
        %v1597 = vpack.c.b16 %v1351, %v1349
        %v1598 = vpack.c.b16 %v1352, %v1350
        %v1599 = vpack.c.b16 %v1355, %v1353
        %v1600 = vpack.c.b16 %v1356, %v1354
        %v1601 = vpack.c.b16 %v1359, %v1357
        %v1602 = vpack.c.b16 %v1360, %v1358
        %v1603 = vpack.c.b16 %v1363, %v1361
        %v1604 = vpack.c.b16 %v1364, %v1362
        %v1605 = vpack.c.b16 %v1367, %v1365
        %v1606 = vpack.c.b16 %v1368, %v1366
        %v1607 = vpack.c.b16 %v1371, %v1369
        %v1608 = vpack.c.b16 %v1372, %v1370
        %v1609 = vpack.c.b16 %v1375, %v1373
        %v1610 = vpack.c.b16 %v1376, %v1374
        %v1611 = vpack.c.b16 %v1379, %v1377
        %v1612 = vpack.c.b16 %v1380, %v1378
        %v1613 = vpack.c.b16 %v1383, %v1381
        %v1614 = vpack.c.b16 %v1384, %v1382
        %v1615 = vpack.c.b16 %v1387, %v1385
        %v1616 = vpack.c.b16 %v1388, %v1386
        %v1617 = vpack.c.b16 %v1391, %v1389
        %v1618 = vpack.c.b16 %v1392, %v1390
        %v1619 = vpack.c.b16 %v1395, %v1393
        %v1620 = vpack.c.b16 %v1396, %v1394
        %v1621 = vpack.c.b16 %v1399, %v1397
        %v1622 = vpack.c.b16 %v1400, %v1398
        %v1623 = vpack.c.b16 %v1403, %v1401
        %v1624 = vpack.c.b16 %v1404, %v1402
        %v1625 = vpack.c.b16 %v1407, %v1405
        %v1626 = vpack.c.b16 %v1408, %v1406
        %v1627 = vpack.c.b16 %v1411, %v1409
        %v1628 = vpack.c.b16 %v1412, %v1410
        %v1629 = vpack.c.b16 %v1415, %v1413
        %v1630 = vpack.c.b16 %v1416, %v1414
        %v1631 = vpack.c.b16 %v1419, %v1417
        %v1632 = vpack.c.b16 %v1420, %v1418
        %v1633 = vpack.c.b16 %v1423, %v1421
        %v1634 = vpack.c.b16 %v1424, %v1422
        %v1635 = vpack.c.b16 %v1427, %v1425
        %v1636 = vpack.c.b16 %v1428, %v1426
        %v1637 = vpack.c.b16 %v1431, %v1429
        %v1638 = vpack.c.b16 %v1432, %v1430
        %v1639 = vpack.c.b16 %v1435, %v1433
        %v1640 = vpack.c.b16 %v1436, %v1434
        %v1641 = vpack.c.b16 %v1439, %v1437
        %v1642 = vpack.c.b16 %v1440, %v1438
        %v1643 = vpack.c.b16 %v1443, %v1441
        %v1644 = vpack.c.b16 %v1444, %v1442
        %v1645 = vpack.c.b16 %v1447, %v1445
        %v1646 = vpack.c.b16 %v1448, %v1446
        %v1647 = vpack.c.b16 %v1451, %v1449
        %v1648 = vpack.c.b16 %v1452, %v1450
        %v1649 = vpack.c.b16 %v1455, %v1453
        %v1650 = vpack.c.b16 %v1456, %v1454
        %v1651 = vpack.c.b16 %v1459, %v1457
        %v1652 = vpack.c.b16 %v1460, %v1458
        %v1653 = vpack.c.b16 %v1463, %v1461
        %v1654 = vpack.c.b16 %v1464, %v1462
        %v1655 = vpack.c.b16 %v1467, %v1465
        %v1656 = vpack.c.b16 %v1468, %v1466
        %v1657 = vpack.c.b16 %v1471, %v1469
        %v1658 = vpack.c.b16 %v1472, %v1470
        %v1659 = vpack.c.b16 %v1475, %v1473
        %v1660 = vpack.c.b16 %v1476, %v1474
        %v1661 = vpack.c.b16 %v1479, %v1477
        %v1662 = vpack.c.b16 %v1480, %v1478
        %v1663 = vpack.c.b16 %v1483, %v1481
        %v1664 = vpack.c.b16 %v1484, %v1482
        %v1665 = vpack.c.b16 %v1487, %v1485
        %v1666 = vpack.c.b16 %v1488, %v1486
        %v1667 = vpack.c.b16 %v1491, %v1489
        %v1668 = vpack.c.b16 %v1492, %v1490
        %v1669 = vpack.c.b16 %v1495, %v1493
        %v1670 = vpack.c.b16 %v1496, %v1494
        %v1671 = vpack.c.b16 %v1499, %v1497
        %v1672 = vpack.c.b16 %v1500, %v1498
        %v1673 = vpack.c.b16 %v1503, %v1501
        %v1674 = vpack.c.b16 %v1504, %v1502
        %v1675 = vpack.c.b16 %v1507, %v1505
        %v1676 = vpack.c.b16 %v1508, %v1506
        %v1677 = vpack.c.b16 %v1511, %v1509
        %v1678 = vpack.c.b16 %v1512, %v1510
        %v1679 = vpack.c.b16 %v1515, %v1513
        %v1680 = vpack.c.b16 %v1516, %v1514
        %v1681 = vpack.c.b16 %v1519, %v1517
        %v1682 = vpack.c.b16 %v1520, %v1518
        %v1683 = vpack.c.b16 %v1523, %v1521
        %v1684 = vpack.c.b16 %v1524, %v1522
        %v1685 = vpack.c.b16 %v1527, %v1525
        %v1686 = vpack.c.b16 %v1528, %v1526
        %v1687 = vpack.c.b16 %v1531, %v1529
        %v1688 = vpack.c.b16 %v1532, %v1530
        %v1689 = vpack.c.b16 %v1535, %v1533
        %v1690 = vpack.c.b16 %v1536, %v1534
        %v1691 = vpack.c.b16 %v1539, %v1537
        %v1692 = vpack.c.b16 %v1540, %v1538
        %v1693 = vpack.c.b16 %v1543, %v1541
        %v1694 = vpack.c.b16 %v1544, %v1542
        %v1695 = vpack.c.b16 %v1547, %v1545
        %v1696 = vpack.c.b16 %v1548, %v1546
        %v1697 = vpack.c.b16 %v1551, %v1549
        %v1698 = vpack.c.b16 %v1552, %v1550
        %v1699 = vpack.c.b16 %v1555, %v1553
        %v1700 = vpack.c.b16 %v1556, %v1554
        %v1701 = vpack.c.b16 %v1559, %v1557
        %v1702 = vpack.c.b16 %v1560, %v1558
        %v1703 = vpack.c.b16 %v1563, %v1561
        %v1704 = vpack.c.b16 %v1564, %v1562
        %v1705 = vpack.c.b16 %v1567, %v1565
        %v1706 = vpack.c.b16 %v1568, %v1566
        %v1707 = vpack.c.b16 %v1571, %v1569
        %v1708 = vpack.c.b16 %v1572, %v1570
        %v1709 = vpack.c.b16 %v1575, %v1573
        %v1710 = vpack.c.b16 %v1576, %v1574
        %v1711 = vpack.c.b16 %v1579, %v1577
        %v1712 = vpack.c.b16 %v1580, %v1578
        %v1713 = vpack.c.b16 %v1583, %v1581
        %v1714 = vpack.c.b16 %v1584, %v1582
        %v1715 = vpack.c.b16 %v1587, %v1585
        %v1716 = vpack.c.b16 %v1588, %v1586
        %v1877 = vunpack.c.l.b16 %v277
        %v1878 = vunpack.c.l.b16 %v278
        %v1879 = vunpack.c.l.b16 %v279
        %v1880 = vunpack.c.l.b16 %v280
        %v1881 = vunpack.c.l.b16 %v281
        %v1882 = vunpack.c.l.b16 %v282
        %v1883 = vunpack.c.l.b16 %v283
        %v1884 = vunpack.c.l.b16 %v284
        %v1885 = vunpack.c.l.b16 %v285
        %v1886 = vunpack.c.l.b16 %v286
        %v1887 = vunpack.c.l.b16 %v287
        %v1888 = vunpack.c.l.b16 %v288
        %v1889 = vunpack.c.l.b16 %v289
        %v1890 = vunpack.c.l.b16 %v290
        %v1891 = vunpack.c.l.b16 %v291
        %v1892 = vunpack.c.l.b16 %v292
        %v1893 = vunpack.c.l.b16 %v293
        %v1894 = vunpack.c.l.b16 %v294
        %v1895 = vunpack.c.l.b16 %v295
        %v1896 = vunpack.c.l.b16 %v296
        %v1897 = vunpack.c.l.b16 %v297
        %v1898 = vunpack.c.l.b16 %v298
        %v1899 = vunpack.c.l.b16 %v299
        %v1900 = vunpack.c.l.b16 %v300
        %v1901 = vunpack.c.l.b16 %v301
        %v1902 = vunpack.c.l.b16 %v302
        %v1903 = vunpack.c.l.b16 %v303
        %v1904 = vunpack.c.l.b16 %v304
        %v1905 = vunpack.c.l.b16 %v305
        %v1906 = vunpack.c.l.b16 %v306
        %v1907 = vunpack.c.l.b16 %v307
        %v1908 = vunpack.c.l.b16 %v308
        %v1909 = vpack.c.b16 %v1878, %v1877
        %v1910 = vpack.c.b16 %v1880, %v1879
        %v1911 = vpack.c.b16 %v1882, %v1881
        %v1912 = vpack.c.b16 %v1884, %v1883
        %v1913 = vpack.c.b16 %v1886, %v1885
        %v1914 = vpack.c.b16 %v1888, %v1887
        %v1915 = vpack.c.b16 %v1890, %v1889
        %v1916 = vpack.c.b16 %v1892, %v1891
        %v1917 = vpack.c.b16 %v1894, %v1893
        %v1918 = vpack.c.b16 %v1896, %v1895
        %v1919 = vpack.c.b16 %v1898, %v1897
        %v1920 = vpack.c.b16 %v1900, %v1899
        %v1921 = vpack.c.b16 %v1902, %v1901
        %v1922 = vpack.c.b16 %v1904, %v1903
        %v1923 = vpack.c.b16 %v1906, %v1905
        %v1924 = vpack.c.b16 %v1908, %v1907
        %1941 = vmatpush.bf16.msra.mxu0 %v1916
        %1942 = vmatpush.bf16.msra.mxu0 %v1915
        %1943 = vmatpush.bf16.msra.mxu0 %v1914
        %1944 = vmatpush.bf16.msra.mxu0 %v1913
        %1945 = vmatpush.bf16.msra.mxu0 %v1912
        %1946 = vmatpush.bf16.msra.mxu0 %v1911
        %1947 = vmatpush.bf16.msra.mxu0 %v1910
        %1948 = vmatpush.bf16.msra.mxu0 %v1909
        %1949 = vmatmul.bf16.gmra.mxu0 %v1589
        %v1950 = vpop.f32.mrf.mxu0
        %v1951 = vadd.f32 %v568, %v1950
        %v1952 = vpop.f32.mrf.mxu0
        %v1953 = vadd.f32 %v573, %v1952
        %1954 = vmatmul.bf16.gmra.mxu0 %v1591
        %v1955 = vpop.f32.mrf.mxu0
        %v1956 = vadd.f32 %v578, %v1955
        %v1957 = vpop.f32.mrf.mxu0
        %v1958 = vadd.f32 %v583, %v1957
        %1959 = vmatmul.bf16.gmra.mxu0 %v1593
        %v1960 = vpop.f32.mrf.mxu0
        %v1961 = vadd.f32 %v588, %v1960
        %v1962 = vpop.f32.mrf.mxu0
        %v1963 = vadd.f32 %v593, %v1962
        %1964 = vmatmul.bf16.gmra.mxu0 %v1595
        %v1965 = vpop.f32.mrf.mxu0
        %v1966 = vadd.f32 %v598, %v1965
        %v1967 = vpop.f32.mrf.mxu0
        %v1968 = vadd.f32 %v603, %v1967
        %1969 = vmatmul.bf16.gmra.mxu0 %v1597
        %v1970 = vpop.f32.mrf.mxu0
        %v1971 = vadd.f32 %v608, %v1970
        %v1972 = vpop.f32.mrf.mxu0
        %v1973 = vadd.f32 %v613, %v1972
        %1974 = vmatmul.bf16.gmra.mxu0 %v1599
        %v1975 = vpop.f32.mrf.mxu0
        %v1976 = vadd.f32 %v618, %v1975
        %v1977 = vpop.f32.mrf.mxu0
        %v1978 = vadd.f32 %v623, %v1977
        %1979 = vmatmul.bf16.gmra.mxu0 %v1601
        %v1980 = vpop.f32.mrf.mxu0
        %v1981 = vadd.f32 %v628, %v1980
        %v1982 = vpop.f32.mrf.mxu0
        %v1983 = vadd.f32 %v633, %v1982
        %1984 = vmatmul.bf16.gmra.mxu0 %v1603
        %v1985 = vpop.f32.mrf.mxu0
        %v1986 = vadd.f32 %v638, %v1985
        %v1987 = vpop.f32.mrf.mxu0
        %v1988 = vadd.f32 %v643, %v1987
        %1989 = vmatmul.bf16.gmra.mxu0 %v1605
        %v1990 = vpop.f32.mrf.mxu0
        %v1991 = vadd.f32 %v648, %v1990
        %v1992 = vpop.f32.mrf.mxu0
        %v1993 = vadd.f32 %v653, %v1992
        %1994 = vmatmul.bf16.gmra.mxu0 %v1607
        %v1995 = vpop.f32.mrf.mxu0
        %v1996 = vadd.f32 %v658, %v1995
        %v1997 = vpop.f32.mrf.mxu0
        %v1998 = vadd.f32 %v663, %v1997
        %1999 = vmatmul.bf16.gmra.mxu0 %v1609
        %v2000 = vpop.f32.mrf.mxu0
        %v2001 = vadd.f32 %v668, %v2000
        %v2002 = vpop.f32.mrf.mxu0
        %v2003 = vadd.f32 %v673, %v2002
        %2004 = vmatmul.bf16.gmra.mxu0 %v1611
        %v2005 = vpop.f32.mrf.mxu0
        %v2006 = vadd.f32 %v678, %v2005
        %v2007 = vpop.f32.mrf.mxu0
        %v2008 = vadd.f32 %v683, %v2007
        %2009 = vmatmul.bf16.gmra.mxu0 %v1613
        %v2010 = vpop.f32.mrf.mxu0
        %v2011 = vadd.f32 %v688, %v2010
        %v2012 = vpop.f32.mrf.mxu0
        %v2013 = vadd.f32 %v693, %v2012
        %2014 = vmatmul.bf16.gmra.mxu0 %v1615
        %v2015 = vpop.f32.mrf.mxu0
        %v2016 = vadd.f32 %v698, %v2015
        %v2017 = vpop.f32.mrf.mxu0
        %v2018 = vadd.f32 %v703, %v2017
        %2019 = vmatmul.bf16.gmra.mxu0 %v1617
        %v2020 = vpop.f32.mrf.mxu0
        %v2021 = vadd.f32 %v708, %v2020
        %v2022 = vpop.f32.mrf.mxu0
        %v2023 = vadd.f32 %v713, %v2022
        %2024 = vmatmul.bf16.gmra.mxu0 %v1619
        %v2025 = vpop.f32.mrf.mxu0
        %v2026 = vadd.f32 %v718, %v2025
        %v2027 = vpop.f32.mrf.mxu0
        %v2028 = vadd.f32 %v723, %v2027
        %2029 = vmatmul.bf16.gmra.mxu0 %v1621
        %v2030 = vpop.f32.mrf.mxu0
        %v2031 = vadd.f32 %v728, %v2030
        %v2032 = vpop.f32.mrf.mxu0
        %v2033 = vadd.f32 %v733, %v2032
        %2034 = vmatmul.bf16.gmra.mxu0 %v1623
        %v2035 = vpop.f32.mrf.mxu0
        %v2036 = vadd.f32 %v738, %v2035
        %v2037 = vpop.f32.mrf.mxu0
        %v2038 = vadd.f32 %v743, %v2037
        %2039 = vmatmul.bf16.gmra.mxu0 %v1625
        %v2040 = vpop.f32.mrf.mxu0
        %v2041 = vadd.f32 %v748, %v2040
        %v2042 = vpop.f32.mrf.mxu0
        %v2043 = vadd.f32 %v753, %v2042
        %2044 = vmatmul.bf16.gmra.mxu0 %v1627
        %v2045 = vpop.f32.mrf.mxu0
        %v2046 = vadd.f32 %v758, %v2045
        %v2047 = vpop.f32.mrf.mxu0
        %v2048 = vadd.f32 %v763, %v2047
        %2049 = vmatmul.bf16.gmra.mxu0 %v1629
        %v2050 = vpop.f32.mrf.mxu0
        %v2051 = vadd.f32 %v768, %v2050
        %v2052 = vpop.f32.mrf.mxu0
        %v2053 = vadd.f32 %v773, %v2052
        %2054 = vmatmul.bf16.gmra.mxu0 %v1631
        %v2055 = vpop.f32.mrf.mxu0
        %v2056 = vadd.f32 %v778, %v2055
        %v2057 = vpop.f32.mrf.mxu0
        %v2058 = vadd.f32 %v783, %v2057
        %2059 = vmatmul.bf16.gmra.mxu0 %v1633
        %v2060 = vpop.f32.mrf.mxu0
        %v2061 = vadd.f32 %v788, %v2060
        %v2062 = vpop.f32.mrf.mxu0
        %v2063 = vadd.f32 %v793, %v2062
        %2064 = vmatmul.bf16.gmra.mxu0 %v1635
        %v2065 = vpop.f32.mrf.mxu0
        %v2066 = vadd.f32 %v798, %v2065
        %v2067 = vpop.f32.mrf.mxu0
        %v2068 = vadd.f32 %v803, %v2067
        %2069 = vmatmul.bf16.gmra.mxu0 %v1637
        %v2070 = vpop.f32.mrf.mxu0
        %v2071 = vadd.f32 %v808, %v2070
        %v2072 = vpop.f32.mrf.mxu0
        %v2073 = vadd.f32 %v813, %v2072
        %2074 = vmatmul.bf16.gmra.mxu0 %v1639
        %v2075 = vpop.f32.mrf.mxu0
        %v2076 = vadd.f32 %v818, %v2075
        %v2077 = vpop.f32.mrf.mxu0
        %v2078 = vadd.f32 %v823, %v2077
        %2079 = vmatmul.bf16.gmra.mxu0 %v1641
        %v2080 = vpop.f32.mrf.mxu0
        %v2081 = vadd.f32 %v828, %v2080
        %v2082 = vpop.f32.mrf.mxu0
        %v2083 = vadd.f32 %v833, %v2082
        %2084 = vmatmul.bf16.gmra.mxu0 %v1643
        %v2085 = vpop.f32.mrf.mxu0
        %v2086 = vadd.f32 %v838, %v2085
        %v2087 = vpop.f32.mrf.mxu0
        %v2088 = vadd.f32 %v843, %v2087
        %2089 = vmatmul.bf16.gmra.mxu0 %v1645
        %v2090 = vpop.f32.mrf.mxu0
        %v2091 = vadd.f32 %v848, %v2090
        %v2092 = vpop.f32.mrf.mxu0
        %v2093 = vadd.f32 %v853, %v2092
        %2094 = vmatmul.bf16.gmra.mxu0 %v1647
        %v2095 = vpop.f32.mrf.mxu0
        %v2096 = vadd.f32 %v858, %v2095
        %v2097 = vpop.f32.mrf.mxu0
        %v2098 = vadd.f32 %v863, %v2097
        %2099 = vmatmul.bf16.gmra.mxu0 %v1649
        %v2100 = vpop.f32.mrf.mxu0
        %v2101 = vadd.f32 %v868, %v2100
        %v2102 = vpop.f32.mrf.mxu0
        %v2103 = vadd.f32 %v873, %v2102
        %2104 = vmatmul.bf16.gmra.mxu0 %v1651
        %v2105 = vpop.f32.mrf.mxu0
        %v2106 = vadd.f32 %v878, %v2105
        %v2107 = vpop.f32.mrf.mxu0
        %v2108 = vadd.f32 %v883, %v2107
        %2109 = vmatmul.bf16.gmra.mxu0 %v1653
        %v2110 = vpop.f32.mrf.mxu0
        %v2111 = vadd.f32 %v888, %v2110
        %v2112 = vpop.f32.mrf.mxu0
        %v2113 = vadd.f32 %v893, %v2112
        %2114 = vmatmul.bf16.gmra.mxu0 %v1655
        %v2115 = vpop.f32.mrf.mxu0
        %v2116 = vadd.f32 %v898, %v2115
        %v2117 = vpop.f32.mrf.mxu0
        %v2118 = vadd.f32 %v903, %v2117
        %2119 = vmatmul.bf16.gmra.mxu0 %v1657
        %v2120 = vpop.f32.mrf.mxu0
        %v2121 = vadd.f32 %v908, %v2120
        %v2122 = vpop.f32.mrf.mxu0
        %v2123 = vadd.f32 %v913, %v2122
        %2124 = vmatmul.bf16.gmra.mxu0 %v1659
        %v2125 = vpop.f32.mrf.mxu0
        %v2126 = vadd.f32 %v918, %v2125
        %v2127 = vpop.f32.mrf.mxu0
        %v2128 = vadd.f32 %v923, %v2127
        %2129 = vmatmul.bf16.gmra.mxu0 %v1661
        %v2130 = vpop.f32.mrf.mxu0
        %v2131 = vadd.f32 %v928, %v2130
        %v2132 = vpop.f32.mrf.mxu0
        %v2133 = vadd.f32 %v933, %v2132
        %2134 = vmatmul.bf16.gmra.mxu0 %v1663
        %v2135 = vpop.f32.mrf.mxu0
        %v2136 = vadd.f32 %v938, %v2135
        %v2137 = vpop.f32.mrf.mxu0
        %v2138 = vadd.f32 %v943, %v2137
        %2139 = vmatmul.bf16.gmra.mxu0 %v1665
        %v2140 = vpop.f32.mrf.mxu0
        %v2141 = vadd.f32 %v948, %v2140
        %v2142 = vpop.f32.mrf.mxu0
        %v2143 = vadd.f32 %v953, %v2142
        %2144 = vmatmul.bf16.gmra.mxu0 %v1667
        %v2145 = vpop.f32.mrf.mxu0
        %v2146 = vadd.f32 %v958, %v2145
        %v2147 = vpop.f32.mrf.mxu0
        %v2148 = vadd.f32 %v963, %v2147
        %2149 = vmatmul.bf16.gmra.mxu0 %v1669
        %v2150 = vpop.f32.mrf.mxu0
        %v2151 = vadd.f32 %v968, %v2150
        %v2152 = vpop.f32.mrf.mxu0
        %v2153 = vadd.f32 %v973, %v2152
        %2154 = vmatmul.bf16.gmra.mxu0 %v1671
        %v2155 = vpop.f32.mrf.mxu0
        %v2156 = vadd.f32 %v978, %v2155
        %v2157 = vpop.f32.mrf.mxu0
        %v2158 = vadd.f32 %v983, %v2157
        %2159 = vmatmul.bf16.gmra.mxu0 %v1673
        %v2160 = vpop.f32.mrf.mxu0
        %v2161 = vadd.f32 %v988, %v2160
        %v2162 = vpop.f32.mrf.mxu0
        %v2163 = vadd.f32 %v993, %v2162
        %2164 = vmatmul.bf16.gmra.mxu0 %v1675
        %v2165 = vpop.f32.mrf.mxu0
        %v2166 = vadd.f32 %v998, %v2165
        %v2167 = vpop.f32.mrf.mxu0
        %v2168 = vadd.f32 %v1003, %v2167
        %2169 = vmatmul.bf16.gmra.mxu0 %v1677
        %v2170 = vpop.f32.mrf.mxu0
        %v2171 = vadd.f32 %v1008, %v2170
        %v2172 = vpop.f32.mrf.mxu0
        %v2173 = vadd.f32 %v1013, %v2172
        %2174 = vmatmul.bf16.gmra.mxu0 %v1679
        %v2175 = vpop.f32.mrf.mxu0
        %v2176 = vadd.f32 %v1018, %v2175
        %v2177 = vpop.f32.mrf.mxu0
        %v2178 = vadd.f32 %v1023, %v2177
        %2179 = vmatmul.bf16.gmra.mxu0 %v1681
        %v2180 = vpop.f32.mrf.mxu0
        %v2181 = vadd.f32 %v1028, %v2180
        %v2182 = vpop.f32.mrf.mxu0
        %v2183 = vadd.f32 %v1033, %v2182
        %2184 = vmatmul.bf16.gmra.mxu0 %v1683
        %v2185 = vpop.f32.mrf.mxu0
        %v2186 = vadd.f32 %v1038, %v2185
        %v2187 = vpop.f32.mrf.mxu0
        %v2188 = vadd.f32 %v1043, %v2187
        %2189 = vmatmul.bf16.gmra.mxu0 %v1685
        %v2190 = vpop.f32.mrf.mxu0
        %v2191 = vadd.f32 %v1048, %v2190
        %v2192 = vpop.f32.mrf.mxu0
        %v2193 = vadd.f32 %v1053, %v2192
        %2194 = vmatmul.bf16.gmra.mxu0 %v1687
        %v2195 = vpop.f32.mrf.mxu0
        %v2196 = vadd.f32 %v1058, %v2195
        %v2197 = vpop.f32.mrf.mxu0
        %v2198 = vadd.f32 %v1063, %v2197
        %2199 = vmatmul.bf16.gmra.mxu0 %v1689
        %v2200 = vpop.f32.mrf.mxu0
        %v2201 = vadd.f32 %v1068, %v2200
        %v2202 = vpop.f32.mrf.mxu0
        %v2203 = vadd.f32 %v1073, %v2202
        %2204 = vmatmul.bf16.gmra.mxu0 %v1691
        %v2205 = vpop.f32.mrf.mxu0
        %v2206 = vadd.f32 %v1078, %v2205
        %v2207 = vpop.f32.mrf.mxu0
        %v2208 = vadd.f32 %v1083, %v2207
        %2209 = vmatmul.bf16.gmra.mxu0 %v1693
        %v2210 = vpop.f32.mrf.mxu0
        %v2211 = vadd.f32 %v1088, %v2210
        %v2212 = vpop.f32.mrf.mxu0
        %v2213 = vadd.f32 %v1093, %v2212
        %2214 = vmatmul.bf16.gmra.mxu0 %v1695
        %v2215 = vpop.f32.mrf.mxu0
        %v2216 = vadd.f32 %v1098, %v2215
        %v2217 = vpop.f32.mrf.mxu0
        %v2218 = vadd.f32 %v1103, %v2217
        %2219 = vmatmul.bf16.gmra.mxu0 %v1697
        %v2220 = vpop.f32.mrf.mxu0
        %v2221 = vadd.f32 %v1108, %v2220
        %v2222 = vpop.f32.mrf.mxu0
        %v2223 = vadd.f32 %v1113, %v2222
        %2224 = vmatmul.bf16.gmra.mxu0 %v1699
        %v2225 = vpop.f32.mrf.mxu0
        %v2226 = vadd.f32 %v1118, %v2225
        %v2227 = vpop.f32.mrf.mxu0
        %v2228 = vadd.f32 %v1123, %v2227
        %2229 = vmatmul.bf16.gmra.mxu0 %v1701
        %v2230 = vpop.f32.mrf.mxu0
        %v2231 = vadd.f32 %v1128, %v2230
        %v2232 = vpop.f32.mrf.mxu0
        %v2233 = vadd.f32 %v1133, %v2232
        %2234 = vmatmul.bf16.gmra.mxu0 %v1703
        %v2235 = vpop.f32.mrf.mxu0
        %v2236 = vadd.f32 %v1138, %v2235
        %v2237 = vpop.f32.mrf.mxu0
        %v2238 = vadd.f32 %v1143, %v2237
        %2239 = vmatmul.bf16.gmra.mxu0 %v1705
        %v2240 = vpop.f32.mrf.mxu0
        %v2241 = vadd.f32 %v1148, %v2240
        %v2242 = vpop.f32.mrf.mxu0
        %v2243 = vadd.f32 %v1153, %v2242
        %2244 = vmatmul.bf16.gmra.mxu0 %v1707
        %v2245 = vpop.f32.mrf.mxu0
        %v2246 = vadd.f32 %v1158, %v2245
        %v2247 = vpop.f32.mrf.mxu0
        %v2248 = vadd.f32 %v1163, %v2247
        %2249 = vmatmul.bf16.gmra.mxu0 %v1709
        %v2250 = vpop.f32.mrf.mxu0
        %v2251 = vadd.f32 %v1168, %v2250
        %v2252 = vpop.f32.mrf.mxu0
        %v2253 = vadd.f32 %v1173, %v2252
        %2254 = vmatmul.bf16.gmra.mxu0 %v1711
        %v2255 = vpop.f32.mrf.mxu0
        %v2256 = vadd.f32 %v1178, %v2255
        %v2257 = vpop.f32.mrf.mxu0
        %v2258 = vadd.f32 %v1183, %v2257
        %2259 = vmatmul.bf16.gmra.mxu0 %v1713
        %v2260 = vpop.f32.mrf.mxu0
        %v2261 = vadd.f32 %v1188, %v2260
        %v2262 = vpop.f32.mrf.mxu0
        %v2263 = vadd.f32 %v1193, %v2262
        %2264 = vmatmul.bf16.gmra.mxu0 %v1715
        %v2265 = vpop.f32.mrf.mxu0
        %v2266 = vadd.f32 %v1198, %v2265
        %v2267 = vpop.f32.mrf.mxu0
        %v2268 = vadd.f32 %v1203, %v2267
        %2269 = vdwg.mxu0
        %2270 = vmatpush.bf16.msra.mxu0 %v1924
        %2271 = vmatpush.bf16.msra.mxu0 %v1923
        %2272 = vmatpush.bf16.msra.mxu0 %v1922
        %2273 = vmatpush.bf16.msra.mxu0 %v1921
        %2274 = vmatpush.bf16.msra.mxu0 %v1920
        %2275 = vmatpush.bf16.msra.mxu0 %v1919
        %2276 = vmatpush.bf16.msra.mxu0 %v1918
        %2277 = vmatpush.bf16.msra.mxu0 %v1917
        %2278 = vmatmul.bf16.gmra.mxu0 %v1590
        %v2279 = vpop.f32.mrf.mxu0
        %v2280 = vadd.f32 %v1951, %v2279
        %v2281 = vpop.f32.mrf.mxu0
        %v2282 = vadd.f32 %v1953, %v2281
        %2283 = vmatmul.bf16.gmra.mxu0 %v1592
        %v2284 = vpop.f32.mrf.mxu0
        %v2285 = vadd.f32 %v1956, %v2284
        %v2286 = vpop.f32.mrf.mxu0
        %v2287 = vadd.f32 %v1958, %v2286
        %2288 = vmatmul.bf16.gmra.mxu0 %v1594
        %v2289 = vpop.f32.mrf.mxu0
        %v2290 = vadd.f32 %v1961, %v2289
        %v2291 = vpop.f32.mrf.mxu0
        %v2292 = vadd.f32 %v1963, %v2291
        %2293 = vmatmul.bf16.gmra.mxu0 %v1596
        %v2294 = vpop.f32.mrf.mxu0
        %v2295 = vadd.f32 %v1966, %v2294
        %v2296 = vpop.f32.mrf.mxu0
        %v2297 = vadd.f32 %v1968, %v2296
        %2298 = vmatmul.bf16.gmra.mxu0 %v1598
        %v2299 = vpop.f32.mrf.mxu0
        %v2300 = vadd.f32 %v1971, %v2299
        %v2301 = vpop.f32.mrf.mxu0
        %v2302 = vadd.f32 %v1973, %v2301
        %2303 = vmatmul.bf16.gmra.mxu0 %v1600
        %v2304 = vpop.f32.mrf.mxu0
        %v2305 = vadd.f32 %v1976, %v2304
        %v2306 = vpop.f32.mrf.mxu0
        %v2307 = vadd.f32 %v1978, %v2306
        %2308 = vmatmul.bf16.gmra.mxu0 %v1602
        %v2309 = vpop.f32.mrf.mxu0
        %v2310 = vadd.f32 %v1981, %v2309
        %v2311 = vpop.f32.mrf.mxu0
        %v2312 = vadd.f32 %v1983, %v2311
        %2313 = vmatmul.bf16.gmra.mxu0 %v1604
        %v2314 = vpop.f32.mrf.mxu0
        %v2315 = vadd.f32 %v1986, %v2314
        %v2316 = vpop.f32.mrf.mxu0
        %v2317 = vadd.f32 %v1988, %v2316
        %2318 = vmatmul.bf16.gmra.mxu0 %v1606
        %v2319 = vpop.f32.mrf.mxu0
        %v2320 = vadd.f32 %v1991, %v2319
        %v2321 = vpop.f32.mrf.mxu0
        %v2322 = vadd.f32 %v1993, %v2321
        %2323 = vmatmul.bf16.gmra.mxu0 %v1608
        %v2324 = vpop.f32.mrf.mxu0
        %v2325 = vadd.f32 %v1996, %v2324
        %v2326 = vpop.f32.mrf.mxu0
        %v2327 = vadd.f32 %v1998, %v2326
        %2328 = vmatmul.bf16.gmra.mxu0 %v1610
        %v2329 = vpop.f32.mrf.mxu0
        %v2330 = vadd.f32 %v2001, %v2329
        %v2331 = vpop.f32.mrf.mxu0
        %v2332 = vadd.f32 %v2003, %v2331
        %2333 = vmatmul.bf16.gmra.mxu0 %v1612
        %v2334 = vpop.f32.mrf.mxu0
        %v2335 = vadd.f32 %v2006, %v2334
        %v2336 = vpop.f32.mrf.mxu0
        %v2337 = vadd.f32 %v2008, %v2336
        %2338 = vmatmul.bf16.gmra.mxu0 %v1614
        %v2339 = vpop.f32.mrf.mxu0
        %v2340 = vadd.f32 %v2011, %v2339
        %v2341 = vpop.f32.mrf.mxu0
        %v2342 = vadd.f32 %v2013, %v2341
        %2343 = vmatmul.bf16.gmra.mxu0 %v1616
        %v2344 = vpop.f32.mrf.mxu0
        %v2345 = vadd.f32 %v2016, %v2344
        %v2346 = vpop.f32.mrf.mxu0
        %v2347 = vadd.f32 %v2018, %v2346
        %2348 = vmatmul.bf16.gmra.mxu0 %v1618
        %v2349 = vpop.f32.mrf.mxu0
        %v2350 = vadd.f32 %v2021, %v2349
        %v2351 = vpop.f32.mrf.mxu0
        %v2352 = vadd.f32 %v2023, %v2351
        %2353 = vmatmul.bf16.gmra.mxu0 %v1620
        %v2354 = vpop.f32.mrf.mxu0
        %v2355 = vadd.f32 %v2026, %v2354
        %v2356 = vpop.f32.mrf.mxu0
        %v2357 = vadd.f32 %v2028, %v2356
        %2358 = vmatmul.bf16.gmra.mxu0 %v1622
        %v2359 = vpop.f32.mrf.mxu0
        %v2360 = vadd.f32 %v2031, %v2359
        %v2361 = vpop.f32.mrf.mxu0
        %v2362 = vadd.f32 %v2033, %v2361
        %2363 = vmatmul.bf16.gmra.mxu0 %v1624
        %v2364 = vpop.f32.mrf.mxu0
        %v2365 = vadd.f32 %v2036, %v2364
        %v2366 = vpop.f32.mrf.mxu0
        %v2367 = vadd.f32 %v2038, %v2366
        %2368 = vmatmul.bf16.gmra.mxu0 %v1626
        %v2369 = vpop.f32.mrf.mxu0
        %v2370 = vadd.f32 %v2041, %v2369
        %v2371 = vpop.f32.mrf.mxu0
        %v2372 = vadd.f32 %v2043, %v2371
        %2373 = vmatmul.bf16.gmra.mxu0 %v1628
        %v2374 = vpop.f32.mrf.mxu0
        %v2375 = vadd.f32 %v2046, %v2374
        %v2376 = vpop.f32.mrf.mxu0
        %v2377 = vadd.f32 %v2048, %v2376
        %2378 = vmatmul.bf16.gmra.mxu0 %v1630
        %v2379 = vpop.f32.mrf.mxu0
        %v2380 = vadd.f32 %v2051, %v2379
        %v2381 = vpop.f32.mrf.mxu0
        %v2382 = vadd.f32 %v2053, %v2381
        %2383 = vmatmul.bf16.gmra.mxu0 %v1632
        %v2384 = vpop.f32.mrf.mxu0
        %v2385 = vadd.f32 %v2056, %v2384
        %v2386 = vpop.f32.mrf.mxu0
        %v2387 = vadd.f32 %v2058, %v2386
        %2388 = vmatmul.bf16.gmra.mxu0 %v1634
        %v2389 = vpop.f32.mrf.mxu0
        %v2390 = vadd.f32 %v2061, %v2389
        %v2391 = vpop.f32.mrf.mxu0
        %v2392 = vadd.f32 %v2063, %v2391
        %2393 = vmatmul.bf16.gmra.mxu0 %v1636
        %v2394 = vpop.f32.mrf.mxu0
        %v2395 = vadd.f32 %v2066, %v2394
        %v2396 = vpop.f32.mrf.mxu0
        %v2397 = vadd.f32 %v2068, %v2396
        %2398 = vmatmul.bf16.gmra.mxu0 %v1638
        %v2399 = vpop.f32.mrf.mxu0
        %v2400 = vadd.f32 %v2071, %v2399
        %v2401 = vpop.f32.mrf.mxu0
        %v2402 = vadd.f32 %v2073, %v2401
        %2403 = vmatmul.bf16.gmra.mxu0 %v1640
        %v2404 = vpop.f32.mrf.mxu0
        %v2405 = vadd.f32 %v2076, %v2404
        %v2406 = vpop.f32.mrf.mxu0
        %v2407 = vadd.f32 %v2078, %v2406
        %2408 = vmatmul.bf16.gmra.mxu0 %v1642
        %v2409 = vpop.f32.mrf.mxu0
        %v2410 = vadd.f32 %v2081, %v2409
        %v2411 = vpop.f32.mrf.mxu0
        %v2412 = vadd.f32 %v2083, %v2411
        %2413 = vmatmul.bf16.gmra.mxu0 %v1644
        %v2414 = vpop.f32.mrf.mxu0
        %v2415 = vadd.f32 %v2086, %v2414
        %v2416 = vpop.f32.mrf.mxu0
        %v2417 = vadd.f32 %v2088, %v2416
        %2418 = vmatmul.bf16.gmra.mxu0 %v1646
        %v2419 = vpop.f32.mrf.mxu0
        %v2420 = vadd.f32 %v2091, %v2419
        %v2421 = vpop.f32.mrf.mxu0
        %v2422 = vadd.f32 %v2093, %v2421
        %2423 = vmatmul.bf16.gmra.mxu0 %v1648
        %v2424 = vpop.f32.mrf.mxu0
        %v2425 = vadd.f32 %v2096, %v2424
        %v2426 = vpop.f32.mrf.mxu0
        %v2427 = vadd.f32 %v2098, %v2426
        %2428 = vmatmul.bf16.gmra.mxu0 %v1650
        %v2429 = vpop.f32.mrf.mxu0
        %v2430 = vadd.f32 %v2101, %v2429
        %v2431 = vpop.f32.mrf.mxu0
        %v2432 = vadd.f32 %v2103, %v2431
        %2433 = vmatmul.bf16.gmra.mxu0 %v1652
        %v2434 = vpop.f32.mrf.mxu0
        %v2435 = vadd.f32 %v2106, %v2434
        %v2436 = vpop.f32.mrf.mxu0
        %v2437 = vadd.f32 %v2108, %v2436
        %2438 = vmatmul.bf16.gmra.mxu0 %v1654
        %v2439 = vpop.f32.mrf.mxu0
        %v2440 = vadd.f32 %v2111, %v2439
        %v2441 = vpop.f32.mrf.mxu0
        %v2442 = vadd.f32 %v2113, %v2441
        %2443 = vmatmul.bf16.gmra.mxu0 %v1656
        %v2444 = vpop.f32.mrf.mxu0
        %v2445 = vadd.f32 %v2116, %v2444
        %v2446 = vpop.f32.mrf.mxu0
        %v2447 = vadd.f32 %v2118, %v2446
        %2448 = vmatmul.bf16.gmra.mxu0 %v1658
        %v2449 = vpop.f32.mrf.mxu0
        %v2450 = vadd.f32 %v2121, %v2449
        %v2451 = vpop.f32.mrf.mxu0
        %v2452 = vadd.f32 %v2123, %v2451
        %2453 = vmatmul.bf16.gmra.mxu0 %v1660
        %v2454 = vpop.f32.mrf.mxu0
        %v2455 = vadd.f32 %v2126, %v2454
        %v2456 = vpop.f32.mrf.mxu0
        %v2457 = vadd.f32 %v2128, %v2456
        %2458 = vmatmul.bf16.gmra.mxu0 %v1662
        %v2459 = vpop.f32.mrf.mxu0
        %v2460 = vadd.f32 %v2131, %v2459
        %v2461 = vpop.f32.mrf.mxu0
        %v2462 = vadd.f32 %v2133, %v2461
        %2463 = vmatmul.bf16.gmra.mxu0 %v1664
        %v2464 = vpop.f32.mrf.mxu0
        %v2465 = vadd.f32 %v2136, %v2464
        %v2466 = vpop.f32.mrf.mxu0
        %v2467 = vadd.f32 %v2138, %v2466
        %2468 = vmatmul.bf16.gmra.mxu0 %v1666
        %v2469 = vpop.f32.mrf.mxu0
        %v2470 = vadd.f32 %v2141, %v2469
        %v2471 = vpop.f32.mrf.mxu0
        %v2472 = vadd.f32 %v2143, %v2471
        %2473 = vmatmul.bf16.gmra.mxu0 %v1668
        %v2474 = vpop.f32.mrf.mxu0
        %v2475 = vadd.f32 %v2146, %v2474
        %v2476 = vpop.f32.mrf.mxu0
        %v2477 = vadd.f32 %v2148, %v2476
        %2478 = vmatmul.bf16.gmra.mxu0 %v1670
        %v2479 = vpop.f32.mrf.mxu0
        %v2480 = vadd.f32 %v2151, %v2479
        %v2481 = vpop.f32.mrf.mxu0
        %v2482 = vadd.f32 %v2153, %v2481
        %2483 = vmatmul.bf16.gmra.mxu0 %v1672
        %v2484 = vpop.f32.mrf.mxu0
        %v2485 = vadd.f32 %v2156, %v2484
        %v2486 = vpop.f32.mrf.mxu0
        %v2487 = vadd.f32 %v2158, %v2486
        %2488 = vmatmul.bf16.gmra.mxu0 %v1674
        %v2489 = vpop.f32.mrf.mxu0
        %v2490 = vadd.f32 %v2161, %v2489
        %v2491 = vpop.f32.mrf.mxu0
        %v2492 = vadd.f32 %v2163, %v2491
        %2493 = vmatmul.bf16.gmra.mxu0 %v1676
        %v2494 = vpop.f32.mrf.mxu0
        %v2495 = vadd.f32 %v2166, %v2494
        %v2496 = vpop.f32.mrf.mxu0
        %v2497 = vadd.f32 %v2168, %v2496
        %2498 = vmatmul.bf16.gmra.mxu0 %v1678
        %v2499 = vpop.f32.mrf.mxu0
        %v2500 = vadd.f32 %v2171, %v2499
        %v2501 = vpop.f32.mrf.mxu0
        %v2502 = vadd.f32 %v2173, %v2501
        %2503 = vmatmul.bf16.gmra.mxu0 %v1680
        %v2504 = vpop.f32.mrf.mxu0
        %v2505 = vadd.f32 %v2176, %v2504
        %v2506 = vpop.f32.mrf.mxu0
        %v2507 = vadd.f32 %v2178, %v2506
        %2508 = vmatmul.bf16.gmra.mxu0 %v1682
        %v2509 = vpop.f32.mrf.mxu0
        %v2510 = vadd.f32 %v2181, %v2509
        %v2511 = vpop.f32.mrf.mxu0
        %v2512 = vadd.f32 %v2183, %v2511
        %2513 = vmatmul.bf16.gmra.mxu0 %v1684
        %v2514 = vpop.f32.mrf.mxu0
        %v2515 = vadd.f32 %v2186, %v2514
        %v2516 = vpop.f32.mrf.mxu0
        %v2517 = vadd.f32 %v2188, %v2516
        %2518 = vmatmul.bf16.gmra.mxu0 %v1686
        %v2519 = vpop.f32.mrf.mxu0
        %v2520 = vadd.f32 %v2191, %v2519
        %v2521 = vpop.f32.mrf.mxu0
        %v2522 = vadd.f32 %v2193, %v2521
        %2523 = vmatmul.bf16.gmra.mxu0 %v1688
        %v2524 = vpop.f32.mrf.mxu0
        %v2525 = vadd.f32 %v2196, %v2524
        %v2526 = vpop.f32.mrf.mxu0
        %v2527 = vadd.f32 %v2198, %v2526
        %2528 = vmatmul.bf16.gmra.mxu0 %v1690
        %v2529 = vpop.f32.mrf.mxu0
        %v2530 = vadd.f32 %v2201, %v2529
        %v2531 = vpop.f32.mrf.mxu0
        %v2532 = vadd.f32 %v2203, %v2531
        %2533 = vmatmul.bf16.gmra.mxu0 %v1692
        %v2534 = vpop.f32.mrf.mxu0
        %v2535 = vadd.f32 %v2206, %v2534
        %v2536 = vpop.f32.mrf.mxu0
        %v2537 = vadd.f32 %v2208, %v2536
        %2538 = vmatmul.bf16.gmra.mxu0 %v1694
        %v2539 = vpop.f32.mrf.mxu0
        %v2540 = vadd.f32 %v2211, %v2539
        %v2541 = vpop.f32.mrf.mxu0
        %v2542 = vadd.f32 %v2213, %v2541
        %2543 = vmatmul.bf16.gmra.mxu0 %v1696
        %v2544 = vpop.f32.mrf.mxu0
        %v2545 = vadd.f32 %v2216, %v2544
        %v2546 = vpop.f32.mrf.mxu0
        %v2547 = vadd.f32 %v2218, %v2546
        %2548 = vmatmul.bf16.gmra.mxu0 %v1698
        %v2549 = vpop.f32.mrf.mxu0
        %v2550 = vadd.f32 %v2221, %v2549
        %v2551 = vpop.f32.mrf.mxu0
        %v2552 = vadd.f32 %v2223, %v2551
        %2553 = vmatmul.bf16.gmra.mxu0 %v1700
        %v2554 = vpop.f32.mrf.mxu0
        %v2555 = vadd.f32 %v2226, %v2554
        %v2556 = vpop.f32.mrf.mxu0
        %v2557 = vadd.f32 %v2228, %v2556
        %2558 = vmatmul.bf16.gmra.mxu0 %v1702
        %v2559 = vpop.f32.mrf.mxu0
        %v2560 = vadd.f32 %v2231, %v2559
        %v2561 = vpop.f32.mrf.mxu0
        %v2562 = vadd.f32 %v2233, %v2561
        %2563 = vmatmul.bf16.gmra.mxu0 %v1704
        %v2564 = vpop.f32.mrf.mxu0
        %v2565 = vadd.f32 %v2236, %v2564
        %v2566 = vpop.f32.mrf.mxu0
        %v2567 = vadd.f32 %v2238, %v2566
        %2568 = vmatmul.bf16.gmra.mxu0 %v1706
        %v2569 = vpop.f32.mrf.mxu0
        %v2570 = vadd.f32 %v2241, %v2569
        %v2571 = vpop.f32.mrf.mxu0
        %v2572 = vadd.f32 %v2243, %v2571
        %2573 = vmatmul.bf16.gmra.mxu0 %v1708
        %v2574 = vpop.f32.mrf.mxu0
        %v2575 = vadd.f32 %v2246, %v2574
        %v2576 = vpop.f32.mrf.mxu0
        %v2577 = vadd.f32 %v2248, %v2576
        %2578 = vmatmul.bf16.gmra.mxu0 %v1710
        %v2579 = vpop.f32.mrf.mxu0
        %v2580 = vadd.f32 %v2251, %v2579
        %v2581 = vpop.f32.mrf.mxu0
        %v2582 = vadd.f32 %v2253, %v2581
        %2583 = vmatmul.bf16.gmra.mxu0 %v1712
        %v2584 = vpop.f32.mrf.mxu0
        %v2585 = vadd.f32 %v2256, %v2584
        %v2586 = vpop.f32.mrf.mxu0
        %v2587 = vadd.f32 %v2258, %v2586
        %2588 = vmatmul.bf16.gmra.mxu0 %v1714
        %v2589 = vpop.f32.mrf.mxu0
        %v2590 = vadd.f32 %v2261, %v2589
        %v2591 = vpop.f32.mrf.mxu0
        %v2592 = vadd.f32 %v2263, %v2591
        %2593 = vmatmul.bf16.gmra.mxu0 %v1716
        %v2594 = vpop.f32.mrf.mxu0
        %v2595 = vadd.f32 %v2266, %v2594
        %v2596 = vpop.f32.mrf.mxu0
        %v2597 = vadd.f32 %v2268, %v2596
        %2598 = vdwg.mxu0
        %v2599 = vmul.f32 %v2280, 0.5
        %v2600 = vmul.f32 %v2282, 0.5
        %v2601 = vmul.f32 %v2285, 0.5
        %v2602 = vmul.f32 %v2287, 0.5
        %v2603 = vmul.f32 %v2290, 0.5
        %v2604 = vmul.f32 %v2292, 0.5
        %v2605 = vmul.f32 %v2295, 0.5
        %v2606 = vmul.f32 %v2297, 0.5
        %v2607 = vmul.f32 %v2300, 0.5
        %v2608 = vmul.f32 %v2302, 0.5
        %v2609 = vmul.f32 %v2305, 0.5
        %v2610 = vmul.f32 %v2307, 0.5
        %v2611 = vmul.f32 %v2310, 0.5
        %v2612 = vmul.f32 %v2312, 0.5
        %v2613 = vmul.f32 %v2315, 0.5
        %v2614 = vmul.f32 %v2317, 0.5
        %v2615 = vmul.f32 %v2320, 0.5
        %v2616 = vmul.f32 %v2322, 0.5
        %v2617 = vmul.f32 %v2325, 0.5
        %v2618 = vmul.f32 %v2327, 0.5
        %v2619 = vmul.f32 %v2330, 0.5
        %v2620 = vmul.f32 %v2332, 0.5
        %v2621 = vmul.f32 %v2335, 0.5
        %v2622 = vmul.f32 %v2337, 0.5
        %v2623 = vmul.f32 %v2340, 0.5
        %v2624 = vmul.f32 %v2342, 0.5
        %v2625 = vmul.f32 %v2345, 0.5
        %v2626 = vmul.f32 %v2347, 0.5
        %v2627 = vmul.f32 %v2350, 0.5
        %v2628 = vmul.f32 %v2352, 0.5
        %v2629 = vmul.f32 %v2355, 0.5
        %v2630 = vmul.f32 %v2357, 0.5
        %v2631 = vmul.f32 %v2360, 0.5
        %v2632 = vmul.f32 %v2362, 0.5
        %v2633 = vmul.f32 %v2365, 0.5
        %v2634 = vmul.f32 %v2367, 0.5
        %v2635 = vmul.f32 %v2370, 0.5
        %v2636 = vmul.f32 %v2372, 0.5
        %v2637 = vmul.f32 %v2375, 0.5
        %v2638 = vmul.f32 %v2377, 0.5
        %v2639 = vmul.f32 %v2380, 0.5
        %v2640 = vmul.f32 %v2382, 0.5
        %v2641 = vmul.f32 %v2385, 0.5
        %v2642 = vmul.f32 %v2387, 0.5
        %v2643 = vmul.f32 %v2390, 0.5
        %v2644 = vmul.f32 %v2392, 0.5
        %v2645 = vmul.f32 %v2395, 0.5
        %v2646 = vmul.f32 %v2397, 0.5
        %v2647 = vmul.f32 %v2400, 0.5
        %v2648 = vmul.f32 %v2402, 0.5
        %v2649 = vmul.f32 %v2405, 0.5
        %v2650 = vmul.f32 %v2407, 0.5
        %v2651 = vmul.f32 %v2410, 0.5
        %v2652 = vmul.f32 %v2412, 0.5
        %v2653 = vmul.f32 %v2415, 0.5
        %v2654 = vmul.f32 %v2417, 0.5
        %v2655 = vmul.f32 %v2420, 0.5
        %v2656 = vmul.f32 %v2422, 0.5
        %v2657 = vmul.f32 %v2425, 0.5
        %v2658 = vmul.f32 %v2427, 0.5
        %v2659 = vmul.f32 %v2430, 0.5
        %v2660 = vmul.f32 %v2432, 0.5
        %v2661 = vmul.f32 %v2435, 0.5
        %v2662 = vmul.f32 %v2437, 0.5
        %v2663 = vmul.f32 %v2440, 0.5
        %v2664 = vmul.f32 %v2442, 0.5
        %v2665 = vmul.f32 %v2445, 0.5
        %v2666 = vmul.f32 %v2447, 0.5
        %v2667 = vmul.f32 %v2450, 0.5
        %v2668 = vmul.f32 %v2452, 0.5
        %v2669 = vmul.f32 %v2455, 0.5
        %v2670 = vmul.f32 %v2457, 0.5
        %v2671 = vmul.f32 %v2460, 0.5
        %v2672 = vmul.f32 %v2462, 0.5
        %v2673 = vmul.f32 %v2465, 0.5
        %v2674 = vmul.f32 %v2467, 0.5
        %v2675 = vmul.f32 %v2470, 0.5
        %v2676 = vmul.f32 %v2472, 0.5
        %v2677 = vmul.f32 %v2475, 0.5
        %v2678 = vmul.f32 %v2477, 0.5
        %v2679 = vmul.f32 %v2480, 0.5
        %v2680 = vmul.f32 %v2482, 0.5
        %v2681 = vmul.f32 %v2485, 0.5
        %v2682 = vmul.f32 %v2487, 0.5
        %v2683 = vmul.f32 %v2490, 0.5
        %v2684 = vmul.f32 %v2492, 0.5
        %v2685 = vmul.f32 %v2495, 0.5
        %v2686 = vmul.f32 %v2497, 0.5
        %v2687 = vmul.f32 %v2500, 0.5
        %v2688 = vmul.f32 %v2502, 0.5
        %v2689 = vmul.f32 %v2505, 0.5
        %v2690 = vmul.f32 %v2507, 0.5
        %v2691 = vmul.f32 %v2510, 0.5
        %v2692 = vmul.f32 %v2512, 0.5
        %v2693 = vmul.f32 %v2515, 0.5
        %v2694 = vmul.f32 %v2517, 0.5
        %v2695 = vmul.f32 %v2520, 0.5
        %v2696 = vmul.f32 %v2522, 0.5
        %v2697 = vmul.f32 %v2525, 0.5
        %v2698 = vmul.f32 %v2527, 0.5
        %v2699 = vmul.f32 %v2530, 0.5
        %v2700 = vmul.f32 %v2532, 0.5
        %v2701 = vmul.f32 %v2535, 0.5
        %v2702 = vmul.f32 %v2537, 0.5
        %v2703 = vmul.f32 %v2540, 0.5
        %v2704 = vmul.f32 %v2542, 0.5
        %v2705 = vmul.f32 %v2545, 0.5
        %v2706 = vmul.f32 %v2547, 0.5
        %v2707 = vmul.f32 %v2550, 0.5
        %v2708 = vmul.f32 %v2552, 0.5
        %v2709 = vmul.f32 %v2555, 0.5
        %v2710 = vmul.f32 %v2557, 0.5
        %v2711 = vmul.f32 %v2560, 0.5
        %v2712 = vmul.f32 %v2562, 0.5
        %v2713 = vmul.f32 %v2565, 0.5
        %v2714 = vmul.f32 %v2567, 0.5
        %v2715 = vmul.f32 %v2570, 0.5
        %v2716 = vmul.f32 %v2572, 0.5
        %v2717 = vmul.f32 %v2575, 0.5
        %v2718 = vmul.f32 %v2577, 0.5
        %v2719 = vmul.f32 %v2580, 0.5
        %v2720 = vmul.f32 %v2582, 0.5
        %v2721 = vmul.f32 %v2585, 0.5
        %v2722 = vmul.f32 %v2587, 0.5
        %v2723 = vmul.f32 %v2590, 0.5
        %v2724 = vmul.f32 %v2592, 0.5
        %v2725 = vmul.f32 %v2595, 0.5
        %v2726 = vmul.f32 %v2597, 0.5
        %v2727 = vmul.f32 %v2280, 0.044715
        %v2728 = vmul.f32 %v2282, 0.044715
        %v2729 = vmul.f32 %v2285, 0.044715
        %v2730 = vmul.f32 %v2287, 0.044715
        %v2731 = vmul.f32 %v2290, 0.044715
        %v2732 = vmul.f32 %v2292, 0.044715
        %v2733 = vmul.f32 %v2295, 0.044715
        %v2734 = vmul.f32 %v2297, 0.044715
        %v2735 = vmul.f32 %v2300, 0.044715
        %v2736 = vmul.f32 %v2302, 0.044715
        %v2737 = vmul.f32 %v2305, 0.044715
        %v2738 = vmul.f32 %v2307, 0.044715
        %v2739 = vmul.f32 %v2310, 0.044715
        %v2740 = vmul.f32 %v2312, 0.044715
        %v2741 = vmul.f32 %v2315, 0.044715
        %v2742 = vmul.f32 %v2317, 0.044715
        %v2743 = vmul.f32 %v2320, 0.044715
        %v2744 = vmul.f32 %v2322, 0.044715
        %v2745 = vmul.f32 %v2325, 0.044715
        %v2746 = vmul.f32 %v2327, 0.044715
        %v2747 = vmul.f32 %v2330, 0.044715
        %v2748 = vmul.f32 %v2332, 0.044715
        %v2749 = vmul.f32 %v2335, 0.044715
        %v2750 = vmul.f32 %v2337, 0.044715
        %v2751 = vmul.f32 %v2340, 0.044715
        %v2752 = vmul.f32 %v2342, 0.044715
        %v2753 = vmul.f32 %v2345, 0.044715
        %v2754 = vmul.f32 %v2347, 0.044715
        %v2755 = vmul.f32 %v2350, 0.044715
        %v2756 = vmul.f32 %v2352, 0.044715
        %v2757 = vmul.f32 %v2355, 0.044715
        %v2758 = vmul.f32 %v2357, 0.044715
        %v2759 = vmul.f32 %v2360, 0.044715
        %v2760 = vmul.f32 %v2362, 0.044715
        %v2761 = vmul.f32 %v2365, 0.044715
        %v2762 = vmul.f32 %v2367, 0.044715
        %v2763 = vmul.f32 %v2370, 0.044715
        %v2764 = vmul.f32 %v2372, 0.044715
        %v2765 = vmul.f32 %v2375, 0.044715
        %v2766 = vmul.f32 %v2377, 0.044715
        %v2767 = vmul.f32 %v2380, 0.044715
        %v2768 = vmul.f32 %v2382, 0.044715
        %v2769 = vmul.f32 %v2385, 0.044715
        %v2770 = vmul.f32 %v2387, 0.044715
        %v2771 = vmul.f32 %v2390, 0.044715
        %v2772 = vmul.f32 %v2392, 0.044715
        %v2773 = vmul.f32 %v2395, 0.044715
        %v2774 = vmul.f32 %v2397, 0.044715
        %v2775 = vmul.f32 %v2400, 0.044715
        %v2776 = vmul.f32 %v2402, 0.044715
        %v2777 = vmul.f32 %v2405, 0.044715
        %v2778 = vmul.f32 %v2407, 0.044715
        %v2779 = vmul.f32 %v2410, 0.044715
        %v2780 = vmul.f32 %v2412, 0.044715
        %v2781 = vmul.f32 %v2415, 0.044715
        %v2782 = vmul.f32 %v2417, 0.044715
        %v2783 = vmul.f32 %v2420, 0.044715
        %v2784 = vmul.f32 %v2422, 0.044715
        %v2785 = vmul.f32 %v2425, 0.044715
        %v2786 = vmul.f32 %v2427, 0.044715
        %v2787 = vmul.f32 %v2430, 0.044715
        %v2788 = vmul.f32 %v2432, 0.044715
        %v2789 = vmul.f32 %v2435, 0.044715
        %v2790 = vmul.f32 %v2437, 0.044715
        %v2791 = vmul.f32 %v2440, 0.044715
        %v2792 = vmul.f32 %v2442, 0.044715
        %v2793 = vmul.f32 %v2445, 0.044715
        %v2794 = vmul.f32 %v2447, 0.044715
        %v2795 = vmul.f32 %v2450, 0.044715
        %v2796 = vmul.f32 %v2452, 0.044715
        %v2797 = vmul.f32 %v2455, 0.044715
        %v2798 = vmul.f32 %v2457, 0.044715
        %v2799 = vmul.f32 %v2460, 0.044715
        %v2800 = vmul.f32 %v2462, 0.044715
        %v2801 = vmul.f32 %v2465, 0.044715
        %v2802 = vmul.f32 %v2467, 0.044715
        %v2803 = vmul.f32 %v2470, 0.044715
        %v2804 = vmul.f32 %v2472, 0.044715
        %v2805 = vmul.f32 %v2475, 0.044715
        %v2806 = vmul.f32 %v2477, 0.044715
        %v2807 = vmul.f32 %v2480, 0.044715
        %v2808 = vmul.f32 %v2482, 0.044715
        %v2809 = vmul.f32 %v2485, 0.044715
        %v2810 = vmul.f32 %v2487, 0.044715
        %v2811 = vmul.f32 %v2490, 0.044715
        %v2812 = vmul.f32 %v2492, 0.044715
        %v2813 = vmul.f32 %v2495, 0.044715
        %v2814 = vmul.f32 %v2497, 0.044715
        %v2815 = vmul.f32 %v2500, 0.044715
        %v2816 = vmul.f32 %v2502, 0.044715
        %v2817 = vmul.f32 %v2505, 0.044715
        %v2818 = vmul.f32 %v2507, 0.044715
        %v2819 = vmul.f32 %v2510, 0.044715
        %v2820 = vmul.f32 %v2512, 0.044715
        %v2821 = vmul.f32 %v2515, 0.044715
        %v2822 = vmul.f32 %v2517, 0.044715
        %v2823 = vmul.f32 %v2520, 0.044715
        %v2824 = vmul.f32 %v2522, 0.044715
        %v2825 = vmul.f32 %v2525, 0.044715
        %v2826 = vmul.f32 %v2527, 0.044715
        %v2827 = vmul.f32 %v2530, 0.044715
        %v2828 = vmul.f32 %v2532, 0.044715
        %v2829 = vmul.f32 %v2535, 0.044715
        %v2830 = vmul.f32 %v2537, 0.044715
        %v2831 = vmul.f32 %v2540, 0.044715
        %v2832 = vmul.f32 %v2542, 0.044715
        %v2833 = vmul.f32 %v2545, 0.044715
        %v2834 = vmul.f32 %v2547, 0.044715
        %v2835 = vmul.f32 %v2550, 0.044715
        %v2836 = vmul.f32 %v2552, 0.044715
        %v2837 = vmul.f32 %v2555, 0.044715
        %v2838 = vmul.f32 %v2557, 0.044715
        %v2839 = vmul.f32 %v2560, 0.044715
        %v2840 = vmul.f32 %v2562, 0.044715
        %v2841 = vmul.f32 %v2565, 0.044715
        %v2842 = vmul.f32 %v2567, 0.044715
        %v2843 = vmul.f32 %v2570, 0.044715
        %v2844 = vmul.f32 %v2572, 0.044715
        %v2845 = vmul.f32 %v2575, 0.044715
        %v2846 = vmul.f32 %v2577, 0.044715
        %v2847 = vmul.f32 %v2580, 0.044715
        %v2848 = vmul.f32 %v2582, 0.044715
        %v2849 = vmul.f32 %v2585, 0.044715
        %v2850 = vmul.f32 %v2587, 0.044715
        %v2851 = vmul.f32 %v2590, 0.044715
        %v2852 = vmul.f32 %v2592, 0.044715
        %v2853 = vmul.f32 %v2595, 0.044715
        %v2854 = vmul.f32 %v2597, 0.044715
        %v2855 = vmul.f32 %v2727, %v2280
        %v2856 = vmul.f32 %v2728, %v2282
        %v2857 = vmul.f32 %v2729, %v2285
        %v2858 = vmul.f32 %v2730, %v2287
        %v2859 = vmul.f32 %v2731, %v2290
        %v2860 = vmul.f32 %v2732, %v2292
        %v2861 = vmul.f32 %v2733, %v2295
        %v2862 = vmul.f32 %v2734, %v2297
        %v2863 = vmul.f32 %v2735, %v2300
        %v2864 = vmul.f32 %v2736, %v2302
        %v2865 = vmul.f32 %v2737, %v2305
        %v2866 = vmul.f32 %v2738, %v2307
        %v2867 = vmul.f32 %v2739, %v2310
        %v2868 = vmul.f32 %v2740, %v2312
        %v2869 = vmul.f32 %v2741, %v2315
        %v2870 = vmul.f32 %v2742, %v2317
        %v2871 = vmul.f32 %v2743, %v2320
        %v2872 = vmul.f32 %v2744, %v2322
        %v2873 = vmul.f32 %v2745, %v2325
        %v2874 = vmul.f32 %v2746, %v2327
        %v2875 = vmul.f32 %v2747, %v2330
        %v2876 = vmul.f32 %v2748, %v2332
        %v2877 = vmul.f32 %v2749, %v2335
        %v2878 = vmul.f32 %v2750, %v2337
        %v2879 = vmul.f32 %v2751, %v2340
        %v2880 = vmul.f32 %v2752, %v2342
        %v2881 = vmul.f32 %v2753, %v2345
        %v2882 = vmul.f32 %v2754, %v2347
        %v2883 = vmul.f32 %v2755, %v2350
        %v2884 = vmul.f32 %v2756, %v2352
        %v2885 = vmul.f32 %v2757, %v2355
        %v2886 = vmul.f32 %v2758, %v2357
        %v2887 = vmul.f32 %v2759, %v2360
        %v2888 = vmul.f32 %v2760, %v2362
        %v2889 = vmul.f32 %v2761, %v2365
        %v2890 = vmul.f32 %v2762, %v2367
        %v2891 = vmul.f32 %v2763, %v2370
        %v2892 = vmul.f32 %v2764, %v2372
        %v2893 = vmul.f32 %v2765, %v2375
        %v2894 = vmul.f32 %v2766, %v2377
        %v2895 = vmul.f32 %v2767, %v2380
        %v2896 = vmul.f32 %v2768, %v2382
        %v2897 = vmul.f32 %v2769, %v2385
        %v2898 = vmul.f32 %v2770, %v2387
        %v2899 = vmul.f32 %v2771, %v2390
        %v2900 = vmul.f32 %v2772, %v2392
        %v2901 = vmul.f32 %v2773, %v2395
        %v2902 = vmul.f32 %v2774, %v2397
        %v2903 = vmul.f32 %v2775, %v2400
        %v2904 = vmul.f32 %v2776, %v2402
        %v2905 = vmul.f32 %v2777, %v2405
        %v2906 = vmul.f32 %v2778, %v2407
        %v2907 = vmul.f32 %v2779, %v2410
        %v2908 = vmul.f32 %v2780, %v2412
        %v2909 = vmul.f32 %v2781, %v2415
        %v2910 = vmul.f32 %v2782, %v2417
        %v2911 = vmul.f32 %v2783, %v2420
        %v2912 = vmul.f32 %v2784, %v2422
        %v2913 = vmul.f32 %v2785, %v2425
        %v2914 = vmul.f32 %v2786, %v2427
        %v2915 = vmul.f32 %v2787, %v2430
        %v2916 = vmul.f32 %v2788, %v2432
        %v2917 = vmul.f32 %v2789, %v2435
        %v2918 = vmul.f32 %v2790, %v2437
        %v2919 = vmul.f32 %v2791, %v2440
        %v2920 = vmul.f32 %v2792, %v2442
        %v2921 = vmul.f32 %v2793, %v2445
        %v2922 = vmul.f32 %v2794, %v2447
        %v2923 = vmul.f32 %v2795, %v2450
        %v2924 = vmul.f32 %v2796, %v2452
        %v2925 = vmul.f32 %v2797, %v2455
        %v2926 = vmul.f32 %v2798, %v2457
        %v2927 = vmul.f32 %v2799, %v2460
        %v2928 = vmul.f32 %v2800, %v2462
        %v2929 = vmul.f32 %v2801, %v2465
        %v2930 = vmul.f32 %v2802, %v2467
        %v2931 = vmul.f32 %v2803, %v2470
        %v2932 = vmul.f32 %v2804, %v2472
        %v2933 = vmul.f32 %v2805, %v2475
        %v2934 = vmul.f32 %v2806, %v2477
        %v2935 = vmul.f32 %v2807, %v2480
        %v2936 = vmul.f32 %v2808, %v2482
        %v2937 = vmul.f32 %v2809, %v2485
        %v2938 = vmul.f32 %v2810, %v2487
        %v2939 = vmul.f32 %v2811, %v2490
        %v2940 = vmul.f32 %v2812, %v2492
        %v2941 = vmul.f32 %v2813, %v2495
        %v2942 = vmul.f32 %v2814, %v2497
        %v2943 = vmul.f32 %v2815, %v2500
        %v2944 = vmul.f32 %v2816, %v2502
        %v2945 = vmul.f32 %v2817, %v2505
        %v2946 = vmul.f32 %v2818, %v2507
        %v2947 = vmul.f32 %v2819, %v2510
        %v2948 = vmul.f32 %v2820, %v2512
        %v2949 = vmul.f32 %v2821, %v2515
        %v2950 = vmul.f32 %v2822, %v2517
        %v2951 = vmul.f32 %v2823, %v2520
        %v2952 = vmul.f32 %v2824, %v2522
        %v2953 = vmul.f32 %v2825, %v2525
        %v2954 = vmul.f32 %v2826, %v2527
        %v2955 = vmul.f32 %v2827, %v2530
        %v2956 = vmul.f32 %v2828, %v2532
        %v2957 = vmul.f32 %v2829, %v2535
        %v2958 = vmul.f32 %v2830, %v2537
        %v2959 = vmul.f32 %v2831, %v2540
        %v2960 = vmul.f32 %v2832, %v2542
        %v2961 = vmul.f32 %v2833, %v2545
        %v2962 = vmul.f32 %v2834, %v2547
        %v2963 = vmul.f32 %v2835, %v2550
        %v2964 = vmul.f32 %v2836, %v2552
        %v2965 = vmul.f32 %v2837, %v2555
        %v2966 = vmul.f32 %v2838, %v2557
        %v2967 = vmul.f32 %v2839, %v2560
        %v2968 = vmul.f32 %v2840, %v2562
        %v2969 = vmul.f32 %v2841, %v2565
        %v2970 = vmul.f32 %v2842, %v2567
        %v2971 = vmul.f32 %v2843, %v2570
        %v2972 = vmul.f32 %v2844, %v2572
        %v2973 = vmul.f32 %v2845, %v2575
        %v2974 = vmul.f32 %v2846, %v2577
        %v2975 = vmul.f32 %v2847, %v2580
        %v2976 = vmul.f32 %v2848, %v2582
        %v2977 = vmul.f32 %v2849, %v2585
        %v2978 = vmul.f32 %v2850, %v2587
        %v2979 = vmul.f32 %v2851, %v2590
        %v2980 = vmul.f32 %v2852, %v2592
        %v2981 = vmul.f32 %v2853, %v2595
        %v2982 = vmul.f32 %v2854, %v2597
        %v2983 = vmul.f32 %v2855, %v2280
        %v2984 = vmul.f32 %v2856, %v2282
        %v2985 = vmul.f32 %v2857, %v2285
        %v2986 = vmul.f32 %v2858, %v2287
        %v2987 = vmul.f32 %v2859, %v2290
        %v2988 = vmul.f32 %v2860, %v2292
        %v2989 = vmul.f32 %v2861, %v2295
        %v2990 = vmul.f32 %v2862, %v2297
        %v2991 = vmul.f32 %v2863, %v2300
        %v2992 = vmul.f32 %v2864, %v2302
        %v2993 = vmul.f32 %v2865, %v2305
        %v2994 = vmul.f32 %v2866, %v2307
        %v2995 = vmul.f32 %v2867, %v2310
        %v2996 = vmul.f32 %v2868, %v2312
        %v2997 = vmul.f32 %v2869, %v2315
        %v2998 = vmul.f32 %v2870, %v2317
        %v2999 = vmul.f32 %v2871, %v2320
        %v3000 = vmul.f32 %v2872, %v2322
        %v3001 = vmul.f32 %v2873, %v2325
        %v3002 = vmul.f32 %v2874, %v2327
        %v3003 = vmul.f32 %v2875, %v2330
        %v3004 = vmul.f32 %v2876, %v2332
        %v3005 = vmul.f32 %v2877, %v2335
        %v3006 = vmul.f32 %v2878, %v2337
        %v3007 = vmul.f32 %v2879, %v2340
        %v3008 = vmul.f32 %v2880, %v2342
        %v3009 = vmul.f32 %v2881, %v2345
        %v3010 = vmul.f32 %v2882, %v2347
        %v3011 = vmul.f32 %v2883, %v2350
        %v3012 = vmul.f32 %v2884, %v2352
        %v3013 = vmul.f32 %v2885, %v2355
        %v3014 = vmul.f32 %v2886, %v2357
        %v3015 = vmul.f32 %v2887, %v2360
        %v3016 = vmul.f32 %v2888, %v2362
        %v3017 = vmul.f32 %v2889, %v2365
        %v3018 = vmul.f32 %v2890, %v2367
        %v3019 = vmul.f32 %v2891, %v2370
        %v3020 = vmul.f32 %v2892, %v2372
        %v3021 = vmul.f32 %v2893, %v2375
        %v3022 = vmul.f32 %v2894, %v2377
        %v3023 = vmul.f32 %v2895, %v2380
        %v3024 = vmul.f32 %v2896, %v2382
        %v3025 = vmul.f32 %v2897, %v2385
        %v3026 = vmul.f32 %v2898, %v2387
        %v3027 = vmul.f32 %v2899, %v2390
        %v3028 = vmul.f32 %v2900, %v2392
        %v3029 = vmul.f32 %v2901, %v2395
        %v3030 = vmul.f32 %v2902, %v2397
        %v3031 = vmul.f32 %v2903, %v2400
        %v3032 = vmul.f32 %v2904, %v2402
        %v3033 = vmul.f32 %v2905, %v2405
        %v3034 = vmul.f32 %v2906, %v2407
        %v3035 = vmul.f32 %v2907, %v2410
        %v3036 = vmul.f32 %v2908, %v2412
        %v3037 = vmul.f32 %v2909, %v2415
        %v3038 = vmul.f32 %v2910, %v2417
        %v3039 = vmul.f32 %v2911, %v2420
        %v3040 = vmul.f32 %v2912, %v2422
        %v3041 = vmul.f32 %v2913, %v2425
        %v3042 = vmul.f32 %v2914, %v2427
        %v3043 = vmul.f32 %v2915, %v2430
        %v3044 = vmul.f32 %v2916, %v2432
        %v3045 = vmul.f32 %v2917, %v2435
        %v3046 = vmul.f32 %v2918, %v2437
        %v3047 = vmul.f32 %v2919, %v2440
        %v3048 = vmul.f32 %v2920, %v2442
        %v3049 = vmul.f32 %v2921, %v2445
        %v3050 = vmul.f32 %v2922, %v2447
        %v3051 = vmul.f32 %v2923, %v2450
        %v3052 = vmul.f32 %v2924, %v2452
        %v3053 = vmul.f32 %v2925, %v2455
        %v3054 = vmul.f32 %v2926, %v2457
        %v3055 = vmul.f32 %v2927, %v2460
        %v3056 = vmul.f32 %v2928, %v2462
        %v3057 = vmul.f32 %v2929, %v2465
        %v3058 = vmul.f32 %v2930, %v2467
        %v3059 = vmul.f32 %v2931, %v2470
        %v3060 = vmul.f32 %v2932, %v2472
        %v3061 = vmul.f32 %v2933, %v2475
        %v3062 = vmul.f32 %v2934, %v2477
        %v3063 = vmul.f32 %v2935, %v2480
        %v3064 = vmul.f32 %v2936, %v2482
        %v3065 = vmul.f32 %v2937, %v2485
        %v3066 = vmul.f32 %v2938, %v2487
        %v3067 = vmul.f32 %v2939, %v2490
        %v3068 = vmul.f32 %v2940, %v2492
        %v3069 = vmul.f32 %v2941, %v2495
        %v3070 = vmul.f32 %v2942, %v2497
        %v3071 = vmul.f32 %v2943, %v2500
        %v3072 = vmul.f32 %v2944, %v2502
        %v3073 = vmul.f32 %v2945, %v2505
        %v3074 = vmul.f32 %v2946, %v2507
        %v3075 = vmul.f32 %v2947, %v2510
        %v3076 = vmul.f32 %v2948, %v2512
        %v3077 = vmul.f32 %v2949, %v2515
        %v3078 = vmul.f32 %v2950, %v2517
        %v3079 = vmul.f32 %v2951, %v2520
        %v3080 = vmul.f32 %v2952, %v2522
        %v3081 = vmul.f32 %v2953, %v2525
        %v3082 = vmul.f32 %v2954, %v2527
        %v3083 = vmul.f32 %v2955, %v2530
        %v3084 = vmul.f32 %v2956, %v2532
        %v3085 = vmul.f32 %v2957, %v2535
        %v3086 = vmul.f32 %v2958, %v2537
        %v3087 = vmul.f32 %v2959, %v2540
        %v3088 = vmul.f32 %v2960, %v2542
        %v3089 = vmul.f32 %v2961, %v2545
        %v3090 = vmul.f32 %v2962, %v2547
        %v3091 = vmul.f32 %v2963, %v2550
        %v3092 = vmul.f32 %v2964, %v2552
        %v3093 = vmul.f32 %v2965, %v2555
        %v3094 = vmul.f32 %v2966, %v2557
        %v3095 = vmul.f32 %v2967, %v2560
        %v3096 = vmul.f32 %v2968, %v2562
        %v3097 = vmul.f32 %v2969, %v2565
        %v3098 = vmul.f32 %v2970, %v2567
        %v3099 = vmul.f32 %v2971, %v2570
        %v3100 = vmul.f32 %v2972, %v2572
        %v3101 = vmul.f32 %v2973, %v2575
        %v3102 = vmul.f32 %v2974, %v2577
        %v3103 = vmul.f32 %v2975, %v2580
        %v3104 = vmul.f32 %v2976, %v2582
        %v3105 = vmul.f32 %v2977, %v2585
        %v3106 = vmul.f32 %v2978, %v2587
        %v3107 = vmul.f32 %v2979, %v2590
        %v3108 = vmul.f32 %v2980, %v2592
        %v3109 = vmul.f32 %v2981, %v2595
        %v3110 = vmul.f32 %v2982, %v2597
        %v3111 = vadd.f32 %v2280, %v2983
        %v3112 = vadd.f32 %v2282, %v2984
        %v3113 = vadd.f32 %v2285, %v2985
        %v3114 = vadd.f32 %v2287, %v2986
        %v3115 = vadd.f32 %v2290, %v2987
        %v3116 = vadd.f32 %v2292, %v2988
        %v3117 = vadd.f32 %v2295, %v2989
        %v3118 = vadd.f32 %v2297, %v2990
        %v3119 = vadd.f32 %v2300, %v2991
        %v3120 = vadd.f32 %v2302, %v2992
        %v3121 = vadd.f32 %v2305, %v2993
        %v3122 = vadd.f32 %v2307, %v2994
        %v3123 = vadd.f32 %v2310, %v2995
        %v3124 = vadd.f32 %v2312, %v2996
        %v3125 = vadd.f32 %v2315, %v2997
        %v3126 = vadd.f32 %v2317, %v2998
        %v3127 = vadd.f32 %v2320, %v2999
        %v3128 = vadd.f32 %v2322, %v3000
        %v3129 = vadd.f32 %v2325, %v3001
        %v3130 = vadd.f32 %v2327, %v3002
        %v3131 = vadd.f32 %v2330, %v3003
        %v3132 = vadd.f32 %v2332, %v3004
        %v3133 = vadd.f32 %v2335, %v3005
        %v3134 = vadd.f32 %v2337, %v3006
        %v3135 = vadd.f32 %v2340, %v3007
        %v3136 = vadd.f32 %v2342, %v3008
        %v3137 = vadd.f32 %v2345, %v3009
        %v3138 = vadd.f32 %v2347, %v3010
        %v3139 = vadd.f32 %v2350, %v3011
        %v3140 = vadd.f32 %v2352, %v3012
        %v3141 = vadd.f32 %v2355, %v3013
        %v3142 = vadd.f32 %v2357, %v3014
        %v3143 = vadd.f32 %v2360, %v3015
        %v3144 = vadd.f32 %v2362, %v3016
        %v3145 = vadd.f32 %v2365, %v3017
        %v3146 = vadd.f32 %v2367, %v3018
        %v3147 = vadd.f32 %v2370, %v3019
        %v3148 = vadd.f32 %v2372, %v3020
        %v3149 = vadd.f32 %v2375, %v3021
        %v3150 = vadd.f32 %v2377, %v3022
        %v3151 = vadd.f32 %v2380, %v3023
        %v3152 = vadd.f32 %v2382, %v3024
        %v3153 = vadd.f32 %v2385, %v3025
        %v3154 = vadd.f32 %v2387, %v3026
        %v3155 = vadd.f32 %v2390, %v3027
        %v3156 = vadd.f32 %v2392, %v3028
        %v3157 = vadd.f32 %v2395, %v3029
        %v3158 = vadd.f32 %v2397, %v3030
        %v3159 = vadd.f32 %v2400, %v3031
        %v3160 = vadd.f32 %v2402, %v3032
        %v3161 = vadd.f32 %v2405, %v3033
        %v3162 = vadd.f32 %v2407, %v3034
        %v3163 = vadd.f32 %v2410, %v3035
        %v3164 = vadd.f32 %v2412, %v3036
        %v3165 = vadd.f32 %v2415, %v3037
        %v3166 = vadd.f32 %v2417, %v3038
        %v3167 = vadd.f32 %v2420, %v3039
        %v3168 = vadd.f32 %v2422, %v3040
        %v3169 = vadd.f32 %v2425, %v3041
        %v3170 = vadd.f32 %v2427, %v3042
        %v3171 = vadd.f32 %v2430, %v3043
        %v3172 = vadd.f32 %v2432, %v3044
        %v3173 = vadd.f32 %v2435, %v3045
        %v3174 = vadd.f32 %v2437, %v3046
        %v3175 = vadd.f32 %v2440, %v3047
        %v3176 = vadd.f32 %v2442, %v3048
        %v3177 = vadd.f32 %v2445, %v3049
        %v3178 = vadd.f32 %v2447, %v3050
        %v3179 = vadd.f32 %v2450, %v3051
        %v3180 = vadd.f32 %v2452, %v3052
        %v3181 = vadd.f32 %v2455, %v3053
        %v3182 = vadd.f32 %v2457, %v3054
        %v3183 = vadd.f32 %v2460, %v3055
        %v3184 = vadd.f32 %v2462, %v3056
        %v3185 = vadd.f32 %v2465, %v3057
        %v3186 = vadd.f32 %v2467, %v3058
        %v3187 = vadd.f32 %v2470, %v3059
        %v3188 = vadd.f32 %v2472, %v3060
        %v3189 = vadd.f32 %v2475, %v3061
        %v3190 = vadd.f32 %v2477, %v3062
        %v3191 = vadd.f32 %v2480, %v3063
        %v3192 = vadd.f32 %v2482, %v3064
        %v3193 = vadd.f32 %v2485, %v3065
        %v3194 = vadd.f32 %v2487, %v3066
        %v3195 = vadd.f32 %v2490, %v3067
        %v3196 = vadd.f32 %v2492, %v3068
        %v3197 = vadd.f32 %v2495, %v3069
        %v3198 = vadd.f32 %v2497, %v3070
        %v3199 = vadd.f32 %v2500, %v3071
        %v3200 = vadd.f32 %v2502, %v3072
        %v3201 = vadd.f32 %v2505, %v3073
        %v3202 = vadd.f32 %v2507, %v3074
        %v3203 = vadd.f32 %v2510, %v3075
        %v3204 = vadd.f32 %v2512, %v3076
        %v3205 = vadd.f32 %v2515, %v3077
        %v3206 = vadd.f32 %v2517, %v3078
        %v3207 = vadd.f32 %v2520, %v3079
        %v3208 = vadd.f32 %v2522, %v3080
        %v3209 = vadd.f32 %v2525, %v3081
        %v3210 = vadd.f32 %v2527, %v3082
        %v3211 = vadd.f32 %v2530, %v3083
        %v3212 = vadd.f32 %v2532, %v3084
        %v3213 = vadd.f32 %v2535, %v3085
        %v3214 = vadd.f32 %v2537, %v3086
        %v3215 = vadd.f32 %v2540, %v3087
        %v3216 = vadd.f32 %v2542, %v3088
        %v3217 = vadd.f32 %v2545, %v3089
        %v3218 = vadd.f32 %v2547, %v3090
        %v3219 = vadd.f32 %v2550, %v3091
        %v3220 = vadd.f32 %v2552, %v3092
        %v3221 = vadd.f32 %v2555, %v3093
        %v3222 = vadd.f32 %v2557, %v3094
        %v3223 = vadd.f32 %v2560, %v3095
        %v3224 = vadd.f32 %v2562, %v3096
        %v3225 = vadd.f32 %v2565, %v3097
        %v3226 = vadd.f32 %v2567, %v3098
        %v3227 = vadd.f32 %v2570, %v3099
        %v3228 = vadd.f32 %v2572, %v3100
        %v3229 = vadd.f32 %v2575, %v3101
        %v3230 = vadd.f32 %v2577, %v3102
        %v3231 = vadd.f32 %v2580, %v3103
        %v3232 = vadd.f32 %v2582, %v3104
        %v3233 = vadd.f32 %v2585, %v3105
        %v3234 = vadd.f32 %v2587, %v3106
        %v3235 = vadd.f32 %v2590, %v3107
        %v3236 = vadd.f32 %v2592, %v3108
        %v3237 = vadd.f32 %v2595, %v3109
        %v3238 = vadd.f32 %v2597, %v3110
        %v3239 = vmul.f32 %v3111, 0.7978846
        %v3240 = vmul.f32 %v3112, 0.7978846
        %v3241 = vmul.f32 %v3113, 0.7978846
        %v3242 = vmul.f32 %v3114, 0.7978846
        %v3243 = vmul.f32 %v3115, 0.7978846
        %v3244 = vmul.f32 %v3116, 0.7978846
        %v3245 = vmul.f32 %v3117, 0.7978846
        %v3246 = vmul.f32 %v3118, 0.7978846
        %v3247 = vmul.f32 %v3119, 0.7978846
        %v3248 = vmul.f32 %v3120, 0.7978846
        %v3249 = vmul.f32 %v3121, 0.7978846
        %v3250 = vmul.f32 %v3122, 0.7978846
        %v3251 = vmul.f32 %v3123, 0.7978846
        %v3252 = vmul.f32 %v3124, 0.7978846
        %v3253 = vmul.f32 %v3125, 0.7978846
        %v3254 = vmul.f32 %v3126, 0.7978846
        %v3255 = vmul.f32 %v3127, 0.7978846
        %v3256 = vmul.f32 %v3128, 0.7978846
        %v3257 = vmul.f32 %v3129, 0.7978846
        %v3258 = vmul.f32 %v3130, 0.7978846
        %v3259 = vmul.f32 %v3131, 0.7978846
        %v3260 = vmul.f32 %v3132, 0.7978846
        %v3261 = vmul.f32 %v3133, 0.7978846
        %v3262 = vmul.f32 %v3134, 0.7978846
        %v3263 = vmul.f32 %v3135, 0.7978846
        %v3264 = vmul.f32 %v3136, 0.7978846
        %v3265 = vmul.f32 %v3137, 0.7978846
        %v3266 = vmul.f32 %v3138, 0.7978846
        %v3267 = vmul.f32 %v3139, 0.7978846
        %v3268 = vmul.f32 %v3140, 0.7978846
        %v3269 = vmul.f32 %v3141, 0.7978846
        %v3270 = vmul.f32 %v3142, 0.7978846
        %v3271 = vmul.f32 %v3143, 0.7978846
        %v3272 = vmul.f32 %v3144, 0.7978846
        %v3273 = vmul.f32 %v3145, 0.7978846
        %v3274 = vmul.f32 %v3146, 0.7978846
        %v3275 = vmul.f32 %v3147, 0.7978846
        %v3276 = vmul.f32 %v3148, 0.7978846
        %v3277 = vmul.f32 %v3149, 0.7978846
        %v3278 = vmul.f32 %v3150, 0.7978846
        %v3279 = vmul.f32 %v3151, 0.7978846
        %v3280 = vmul.f32 %v3152, 0.7978846
        %v3281 = vmul.f32 %v3153, 0.7978846
        %v3282 = vmul.f32 %v3154, 0.7978846
        %v3283 = vmul.f32 %v3155, 0.7978846
        %v3284 = vmul.f32 %v3156, 0.7978846
        %v3285 = vmul.f32 %v3157, 0.7978846
        %v3286 = vmul.f32 %v3158, 0.7978846
        %v3287 = vmul.f32 %v3159, 0.7978846
        %v3288 = vmul.f32 %v3160, 0.7978846
        %v3289 = vmul.f32 %v3161, 0.7978846
        %v3290 = vmul.f32 %v3162, 0.7978846
        %v3291 = vmul.f32 %v3163, 0.7978846
        %v3292 = vmul.f32 %v3164, 0.7978846
        %v3293 = vmul.f32 %v3165, 0.7978846
        %v3294 = vmul.f32 %v3166, 0.7978846
        %v3295 = vmul.f32 %v3167, 0.7978846
        %v3296 = vmul.f32 %v3168, 0.7978846
        %v3297 = vmul.f32 %v3169, 0.7978846
        %v3298 = vmul.f32 %v3170, 0.7978846
        %v3299 = vmul.f32 %v3171, 0.7978846
        %v3300 = vmul.f32 %v3172, 0.7978846
        %v3301 = vmul.f32 %v3173, 0.7978846
        %v3302 = vmul.f32 %v3174, 0.7978846
        %v3303 = vmul.f32 %v3175, 0.7978846
        %v3304 = vmul.f32 %v3176, 0.7978846
        %v3305 = vmul.f32 %v3177, 0.7978846
        %v3306 = vmul.f32 %v3178, 0.7978846
        %v3307 = vmul.f32 %v3179, 0.7978846
        %v3308 = vmul.f32 %v3180, 0.7978846
        %v3309 = vmul.f32 %v3181, 0.7978846
        %v3310 = vmul.f32 %v3182, 0.7978846
        %v3311 = vmul.f32 %v3183, 0.7978846
        %v3312 = vmul.f32 %v3184, 0.7978846
        %v3313 = vmul.f32 %v3185, 0.7978846
        %v3314 = vmul.f32 %v3186, 0.7978846
        %v3315 = vmul.f32 %v3187, 0.7978846
        %v3316 = vmul.f32 %v3188, 0.7978846
        %v3317 = vmul.f32 %v3189, 0.7978846
        %v3318 = vmul.f32 %v3190, 0.7978846
        %v3319 = vmul.f32 %v3191, 0.7978846
        %v3320 = vmul.f32 %v3192, 0.7978846
        %v3321 = vmul.f32 %v3193, 0.7978846
        %v3322 = vmul.f32 %v3194, 0.7978846
        %v3323 = vmul.f32 %v3195, 0.7978846
        %v3324 = vmul.f32 %v3196, 0.7978846
        %v3325 = vmul.f32 %v3197, 0.7978846
        %v3326 = vmul.f32 %v3198, 0.7978846
        %v3327 = vmul.f32 %v3199, 0.7978846
        %v3328 = vmul.f32 %v3200, 0.7978846
        %v3329 = vmul.f32 %v3201, 0.7978846
        %v3330 = vmul.f32 %v3202, 0.7978846
        %v3331 = vmul.f32 %v3203, 0.7978846
        %v3332 = vmul.f32 %v3204, 0.7978846
        %v3333 = vmul.f32 %v3205, 0.7978846
        %v3334 = vmul.f32 %v3206, 0.7978846
        %v3335 = vmul.f32 %v3207, 0.7978846
        %v3336 = vmul.f32 %v3208, 0.7978846
        %v3337 = vmul.f32 %v3209, 0.7978846
        %v3338 = vmul.f32 %v3210, 0.7978846
        %v3339 = vmul.f32 %v3211, 0.7978846
        %v3340 = vmul.f32 %v3212, 0.7978846
        %v3341 = vmul.f32 %v3213, 0.7978846
        %v3342 = vmul.f32 %v3214, 0.7978846
        %v3343 = vmul.f32 %v3215, 0.7978846
        %v3344 = vmul.f32 %v3216, 0.7978846
        %v3345 = vmul.f32 %v3217, 0.7978846
        %v3346 = vmul.f32 %v3218, 0.7978846
        %v3347 = vmul.f32 %v3219, 0.7978846
        %v3348 = vmul.f32 %v3220, 0.7978846
        %v3349 = vmul.f32 %v3221, 0.7978846
        %v3350 = vmul.f32 %v3222, 0.7978846
        %v3351 = vmul.f32 %v3223, 0.7978846
        %v3352 = vmul.f32 %v3224, 0.7978846
        %v3353 = vmul.f32 %v3225, 0.7978846
        %v3354 = vmul.f32 %v3226, 0.7978846
        %v3355 = vmul.f32 %v3227, 0.7978846
        %v3356 = vmul.f32 %v3228, 0.7978846
        %v3357 = vmul.f32 %v3229, 0.7978846
        %v3358 = vmul.f32 %v3230, 0.7978846
        %v3359 = vmul.f32 %v3231, 0.7978846
        %v3360 = vmul.f32 %v3232, 0.7978846
        %v3361 = vmul.f32 %v3233, 0.7978846
        %v3362 = vmul.f32 %v3234, 0.7978846
        %v3363 = vmul.f32 %v3235, 0.7978846
        %v3364 = vmul.f32 %v3236, 0.7978846
        %v3365 = vmul.f32 %v3237, 0.7978846
        %v3366 = vmul.f32 %v3238, 0.7978846
        %v3367 = vtanh.pop %v3239
        %v3368 = vtanh.pop %v3240
        %v3369 = vtanh.pop %v3241
        %v3370 = vtanh.pop %v3242
        %v3371 = vtanh.pop %v3243
        %v3372 = vtanh.pop %v3244
        %v3373 = vtanh.pop %v3245
        %v3374 = vtanh.pop %v3246
        %v3375 = vtanh.pop %v3247
        %v3376 = vtanh.pop %v3248
        %v3377 = vtanh.pop %v3249
        %v3378 = vtanh.pop %v3250
        %v3379 = vtanh.pop %v3251
        %v3380 = vtanh.pop %v3252
        %v3381 = vtanh.pop %v3253
        %v3382 = vtanh.pop %v3254
        %v3383 = vtanh.pop %v3255
        %v3384 = vtanh.pop %v3256
        %v3385 = vtanh.pop %v3257
        %v3386 = vtanh.pop %v3258
        %v3387 = vtanh.pop %v3259
        %v3388 = vtanh.pop %v3260
        %v3389 = vtanh.pop %v3261
        %v3390 = vtanh.pop %v3262
        %v3391 = vtanh.pop %v3263
        %v3392 = vtanh.pop %v3264
        %v3393 = vtanh.pop %v3265
        %v3394 = vtanh.pop %v3266
        %v3395 = vtanh.pop %v3267
        %v3396 = vtanh.pop %v3268
        %v3397 = vtanh.pop %v3269
        %v3398 = vtanh.pop %v3270
        %v3399 = vtanh.pop %v3271
        %v3400 = vtanh.pop %v3272
        %v3401 = vtanh.pop %v3273
        %v3402 = vtanh.pop %v3274
        %v3403 = vtanh.pop %v3275
        %v3404 = vtanh.pop %v3276
        %v3405 = vtanh.pop %v3277
        %v3406 = vtanh.pop %v3278
        %v3407 = vtanh.pop %v3279
        %v3408 = vtanh.pop %v3280
        %v3409 = vtanh.pop %v3281
        %v3410 = vtanh.pop %v3282
        %v3411 = vtanh.pop %v3283
        %v3412 = vtanh.pop %v3284
        %v3413 = vtanh.pop %v3285
        %v3414 = vtanh.pop %v3286
        %v3415 = vtanh.pop %v3287
        %v3416 = vtanh.pop %v3288
        %v3417 = vtanh.pop %v3289
        %v3418 = vtanh.pop %v3290
        %v3419 = vtanh.pop %v3291
        %v3420 = vtanh.pop %v3292
        %v3421 = vtanh.pop %v3293
        %v3422 = vtanh.pop %v3294
        %v3423 = vtanh.pop %v3295
        %v3424 = vtanh.pop %v3296
        %v3425 = vtanh.pop %v3297
        %v3426 = vtanh.pop %v3298
        %v3427 = vtanh.pop %v3299
        %v3428 = vtanh.pop %v3300
        %v3429 = vtanh.pop %v3301
        %v3430 = vtanh.pop %v3302
        %v3431 = vtanh.pop %v3303
        %v3432 = vtanh.pop %v3304
        %v3433 = vtanh.pop %v3305
        %v3434 = vtanh.pop %v3306
        %v3435 = vtanh.pop %v3307
        %v3436 = vtanh.pop %v3308
        %v3437 = vtanh.pop %v3309
        %v3438 = vtanh.pop %v3310
        %v3439 = vtanh.pop %v3311
        %v3440 = vtanh.pop %v3312
        %v3441 = vtanh.pop %v3313
        %v3442 = vtanh.pop %v3314
        %v3443 = vtanh.pop %v3315
        %v3444 = vtanh.pop %v3316
        %v3445 = vtanh.pop %v3317
        %v3446 = vtanh.pop %v3318
        %v3447 = vtanh.pop %v3319
        %v3448 = vtanh.pop %v3320
        %v3449 = vtanh.pop %v3321
        %v3450 = vtanh.pop %v3322
        %v3451 = vtanh.pop %v3323
        %v3452 = vtanh.pop %v3324
        %v3453 = vtanh.pop %v3325
        %v3454 = vtanh.pop %v3326
        %v3455 = vtanh.pop %v3327
        %v3456 = vtanh.pop %v3328
        %v3457 = vtanh.pop %v3329
        %v3458 = vtanh.pop %v3330
        %v3459 = vtanh.pop %v3331
        %v3460 = vtanh.pop %v3332
        %v3461 = vtanh.pop %v3333
        %v3462 = vtanh.pop %v3334
        %v3463 = vtanh.pop %v3335
        %v3464 = vtanh.pop %v3336
        %v3465 = vtanh.pop %v3337
        %v3466 = vtanh.pop %v3338
        %v3467 = vtanh.pop %v3339
        %v3468 = vtanh.pop %v3340
        %v3469 = vtanh.pop %v3341
        %v3470 = vtanh.pop %v3342
        %v3471 = vtanh.pop %v3343
        %v3472 = vtanh.pop %v3344
        %v3473 = vtanh.pop %v3345
        %v3474 = vtanh.pop %v3346
        %v3475 = vtanh.pop %v3347
        %v3476 = vtanh.pop %v3348
        %v3477 = vtanh.pop %v3349
        %v3478 = vtanh.pop %v3350
        %v3479 = vtanh.pop %v3351
        %v3480 = vtanh.pop %v3352
        %v3481 = vtanh.pop %v3353
        %v3482 = vtanh.pop %v3354
        %v3483 = vtanh.pop %v3355
        %v3484 = vtanh.pop %v3356
        %v3485 = vtanh.pop %v3357
        %v3486 = vtanh.pop %v3358
        %v3487 = vtanh.pop %v3359
        %v3488 = vtanh.pop %v3360
        %v3489 = vtanh.pop %v3361
        %v3490 = vtanh.pop %v3362
        %v3491 = vtanh.pop %v3363
        %v3492 = vtanh.pop %v3364
        %v3493 = vtanh.pop %v3365
        %v3494 = vtanh.pop %v3366
        %v3495 = vadd.f32 %v3367, 1.0
        %v3496 = vadd.f32 %v3368, 1.0
        %v3497 = vadd.f32 %v3369, 1.0
        %v3498 = vadd.f32 %v3370, 1.0
        %v3499 = vadd.f32 %v3371, 1.0
        %v3500 = vadd.f32 %v3372, 1.0
        %v3501 = vadd.f32 %v3373, 1.0
        %v3502 = vadd.f32 %v3374, 1.0
        %v3503 = vadd.f32 %v3375, 1.0
        %v3504 = vadd.f32 %v3376, 1.0
        %v3505 = vadd.f32 %v3377, 1.0
        %v3506 = vadd.f32 %v3378, 1.0
        %v3507 = vadd.f32 %v3379, 1.0
        %v3508 = vadd.f32 %v3380, 1.0
        %v3509 = vadd.f32 %v3381, 1.0
        %v3510 = vadd.f32 %v3382, 1.0
        %v3511 = vadd.f32 %v3383, 1.0
        %v3512 = vadd.f32 %v3384, 1.0
        %v3513 = vadd.f32 %v3385, 1.0
        %v3514 = vadd.f32 %v3386, 1.0
        %v3515 = vadd.f32 %v3387, 1.0
        %v3516 = vadd.f32 %v3388, 1.0
        %v3517 = vadd.f32 %v3389, 1.0
        %v3518 = vadd.f32 %v3390, 1.0
        %v3519 = vadd.f32 %v3391, 1.0
        %v3520 = vadd.f32 %v3392, 1.0
        %v3521 = vadd.f32 %v3393, 1.0
        %v3522 = vadd.f32 %v3394, 1.0
        %v3523 = vadd.f32 %v3395, 1.0
        %v3524 = vadd.f32 %v3396, 1.0
        %v3525 = vadd.f32 %v3397, 1.0
        %v3526 = vadd.f32 %v3398, 1.0
        %v3527 = vadd.f32 %v3399, 1.0
        %v3528 = vadd.f32 %v3400, 1.0
        %v3529 = vadd.f32 %v3401, 1.0
        %v3530 = vadd.f32 %v3402, 1.0
        %v3531 = vadd.f32 %v3403, 1.0
        %v3532 = vadd.f32 %v3404, 1.0
        %v3533 = vadd.f32 %v3405, 1.0
        %v3534 = vadd.f32 %v3406, 1.0
        %v3535 = vadd.f32 %v3407, 1.0
        %v3536 = vadd.f32 %v3408, 1.0
        %v3537 = vadd.f32 %v3409, 1.0
        %v3538 = vadd.f32 %v3410, 1.0
        %v3539 = vadd.f32 %v3411, 1.0
        %v3540 = vadd.f32 %v3412, 1.0
        %v3541 = vadd.f32 %v3413, 1.0
        %v3542 = vadd.f32 %v3414, 1.0
        %v3543 = vadd.f32 %v3415, 1.0
        %v3544 = vadd.f32 %v3416, 1.0
        %v3545 = vadd.f32 %v3417, 1.0
        %v3546 = vadd.f32 %v3418, 1.0
        %v3547 = vadd.f32 %v3419, 1.0
        %v3548 = vadd.f32 %v3420, 1.0
        %v3549 = vadd.f32 %v3421, 1.0
        %v3550 = vadd.f32 %v3422, 1.0
        %v3551 = vadd.f32 %v3423, 1.0
        %v3552 = vadd.f32 %v3424, 1.0
        %v3553 = vadd.f32 %v3425, 1.0
        %v3554 = vadd.f32 %v3426, 1.0
        %v3555 = vadd.f32 %v3427, 1.0
        %v3556 = vadd.f32 %v3428, 1.0
        %v3557 = vadd.f32 %v3429, 1.0
        %v3558 = vadd.f32 %v3430, 1.0
        %v3559 = vadd.f32 %v3431, 1.0
        %v3560 = vadd.f32 %v3432, 1.0
        %v3561 = vadd.f32 %v3433, 1.0
        %v3562 = vadd.f32 %v3434, 1.0
        %v3563 = vadd.f32 %v3435, 1.0
        %v3564 = vadd.f32 %v3436, 1.0
        %v3565 = vadd.f32 %v3437, 1.0
        %v3566 = vadd.f32 %v3438, 1.0
        %v3567 = vadd.f32 %v3439, 1.0
        %v3568 = vadd.f32 %v3440, 1.0
        %v3569 = vadd.f32 %v3441, 1.0
        %v3570 = vadd.f32 %v3442, 1.0
        %v3571 = vadd.f32 %v3443, 1.0
        %v3572 = vadd.f32 %v3444, 1.0
        %v3573 = vadd.f32 %v3445, 1.0
        %v3574 = vadd.f32 %v3446, 1.0
        %v3575 = vadd.f32 %v3447, 1.0
        %v3576 = vadd.f32 %v3448, 1.0
        %v3577 = vadd.f32 %v3449, 1.0
        %v3578 = vadd.f32 %v3450, 1.0
        %v3579 = vadd.f32 %v3451, 1.0
        %v3580 = vadd.f32 %v3452, 1.0
        %v3581 = vadd.f32 %v3453, 1.0
        %v3582 = vadd.f32 %v3454, 1.0
        %v3583 = vadd.f32 %v3455, 1.0
        %v3584 = vadd.f32 %v3456, 1.0
        %v3585 = vadd.f32 %v3457, 1.0
        %v3586 = vadd.f32 %v3458, 1.0
        %v3587 = vadd.f32 %v3459, 1.0
        %v3588 = vadd.f32 %v3460, 1.0
        %v3589 = vadd.f32 %v3461, 1.0
        %v3590 = vadd.f32 %v3462, 1.0
        %v3591 = vadd.f32 %v3463, 1.0
        %v3592 = vadd.f32 %v3464, 1.0
        %v3593 = vadd.f32 %v3465, 1.0
        %v3594 = vadd.f32 %v3466, 1.0
        %v3595 = vadd.f32 %v3467, 1.0
        %v3596 = vadd.f32 %v3468, 1.0
        %v3597 = vadd.f32 %v3469, 1.0
        %v3598 = vadd.f32 %v3470, 1.0
        %v3599 = vadd.f32 %v3471, 1.0
        %v3600 = vadd.f32 %v3472, 1.0
        %v3601 = vadd.f32 %v3473, 1.0
        %v3602 = vadd.f32 %v3474, 1.0
        %v3603 = vadd.f32 %v3475, 1.0
        %v3604 = vadd.f32 %v3476, 1.0
        %v3605 = vadd.f32 %v3477, 1.0
        %v3606 = vadd.f32 %v3478, 1.0
        %v3607 = vadd.f32 %v3479, 1.0
        %v3608 = vadd.f32 %v3480, 1.0
        %v3609 = vadd.f32 %v3481, 1.0
        %v3610 = vadd.f32 %v3482, 1.0
        %v3611 = vadd.f32 %v3483, 1.0
        %v3612 = vadd.f32 %v3484, 1.0
        %v3613 = vadd.f32 %v3485, 1.0
        %v3614 = vadd.f32 %v3486, 1.0
        %v3615 = vadd.f32 %v3487, 1.0
        %v3616 = vadd.f32 %v3488, 1.0
        %v3617 = vadd.f32 %v3489, 1.0
        %v3618 = vadd.f32 %v3490, 1.0
        %v3619 = vadd.f32 %v3491, 1.0
        %v3620 = vadd.f32 %v3492, 1.0
        %v3621 = vadd.f32 %v3493, 1.0
        %v3622 = vadd.f32 %v3494, 1.0
        %v3623 = vmul.f32 %v2599, %v3495
        %v3624 = vmul.f32 %v2600, %v3496
        %v3625 = vmul.f32 %v2601, %v3497
        %v3626 = vmul.f32 %v2602, %v3498
        %v3627 = vmul.f32 %v2603, %v3499
        %v3628 = vmul.f32 %v2604, %v3500
        %v3629 = vmul.f32 %v2605, %v3501
        %v3630 = vmul.f32 %v2606, %v3502
        %v3631 = vmul.f32 %v2607, %v3503
        %v3632 = vmul.f32 %v2608, %v3504
        %v3633 = vmul.f32 %v2609, %v3505
        %v3634 = vmul.f32 %v2610, %v3506
        %v3635 = vmul.f32 %v2611, %v3507
        %v3636 = vmul.f32 %v2612, %v3508
        %v3637 = vmul.f32 %v2613, %v3509
        %v3638 = vmul.f32 %v2614, %v3510
        %v3639 = vmul.f32 %v2615, %v3511
        %v3640 = vmul.f32 %v2616, %v3512
        %v3641 = vmul.f32 %v2617, %v3513
        %v3642 = vmul.f32 %v2618, %v3514
        %v3643 = vmul.f32 %v2619, %v3515
        %v3644 = vmul.f32 %v2620, %v3516
        %v3645 = vmul.f32 %v2621, %v3517
        %v3646 = vmul.f32 %v2622, %v3518
        %v3647 = vmul.f32 %v2623, %v3519
        %v3648 = vmul.f32 %v2624, %v3520
        %v3649 = vmul.f32 %v2625, %v3521
        %v3650 = vmul.f32 %v2626, %v3522
        %v3651 = vmul.f32 %v2627, %v3523
        %v3652 = vmul.f32 %v2628, %v3524
        %v3653 = vmul.f32 %v2629, %v3525
        %v3654 = vmul.f32 %v2630, %v3526
        %v3655 = vmul.f32 %v2631, %v3527
        %v3656 = vmul.f32 %v2632, %v3528
        %v3657 = vmul.f32 %v2633, %v3529
        %v3658 = vmul.f32 %v2634, %v3530
        %v3659 = vmul.f32 %v2635, %v3531
        %v3660 = vmul.f32 %v2636, %v3532
        %v3661 = vmul.f32 %v2637, %v3533
        %v3662 = vmul.f32 %v2638, %v3534
        %v3663 = vmul.f32 %v2639, %v3535
        %v3664 = vmul.f32 %v2640, %v3536
        %v3665 = vmul.f32 %v2641, %v3537
        %v3666 = vmul.f32 %v2642, %v3538
        %v3667 = vmul.f32 %v2643, %v3539
        %v3668 = vmul.f32 %v2644, %v3540
        %v3669 = vmul.f32 %v2645, %v3541
        %v3670 = vmul.f32 %v2646, %v3542
        %v3671 = vmul.f32 %v2647, %v3543
        %v3672 = vmul.f32 %v2648, %v3544
        %v3673 = vmul.f32 %v2649, %v3545
        %v3674 = vmul.f32 %v2650, %v3546
        %v3675 = vmul.f32 %v2651, %v3547
        %v3676 = vmul.f32 %v2652, %v3548
        %v3677 = vmul.f32 %v2653, %v3549
        %v3678 = vmul.f32 %v2654, %v3550
        %v3679 = vmul.f32 %v2655, %v3551
        %v3680 = vmul.f32 %v2656, %v3552
        %v3681 = vmul.f32 %v2657, %v3553
        %v3682 = vmul.f32 %v2658, %v3554
        %v3683 = vmul.f32 %v2659, %v3555
        %v3684 = vmul.f32 %v2660, %v3556
        %v3685 = vmul.f32 %v2661, %v3557
        %v3686 = vmul.f32 %v2662, %v3558
        %v3687 = vmul.f32 %v2663, %v3559
        %v3688 = vmul.f32 %v2664, %v3560
        %v3689 = vmul.f32 %v2665, %v3561
        %v3690 = vmul.f32 %v2666, %v3562
        %v3691 = vmul.f32 %v2667, %v3563
        %v3692 = vmul.f32 %v2668, %v3564
        %v3693 = vmul.f32 %v2669, %v3565
        %v3694 = vmul.f32 %v2670, %v3566
        %v3695 = vmul.f32 %v2671, %v3567
        %v3696 = vmul.f32 %v2672, %v3568
        %v3697 = vmul.f32 %v2673, %v3569
        %v3698 = vmul.f32 %v2674, %v3570
        %v3699 = vmul.f32 %v2675, %v3571
        %v3700 = vmul.f32 %v2676, %v3572
        %v3701 = vmul.f32 %v2677, %v3573
        %v3702 = vmul.f32 %v2678, %v3574
        %v3703 = vmul.f32 %v2679, %v3575
        %v3704 = vmul.f32 %v2680, %v3576
        %v3705 = vmul.f32 %v2681, %v3577
        %v3706 = vmul.f32 %v2682, %v3578
        %v3707 = vmul.f32 %v2683, %v3579
        %v3708 = vmul.f32 %v2684, %v3580
        %v3709 = vmul.f32 %v2685, %v3581
        %v3710 = vmul.f32 %v2686, %v3582
        %v3711 = vmul.f32 %v2687, %v3583
        %v3712 = vmul.f32 %v2688, %v3584
        %v3713 = vmul.f32 %v2689, %v3585
        %v3714 = vmul.f32 %v2690, %v3586
        %v3715 = vmul.f32 %v2691, %v3587
        %v3716 = vmul.f32 %v2692, %v3588
        %v3717 = vmul.f32 %v2693, %v3589
        %v3718 = vmul.f32 %v2694, %v3590
        %v3719 = vmul.f32 %v2695, %v3591
        %v3720 = vmul.f32 %v2696, %v3592
        %v3721 = vmul.f32 %v2697, %v3593
        %v3722 = vmul.f32 %v2698, %v3594
        %v3723 = vmul.f32 %v2699, %v3595
        %v3724 = vmul.f32 %v2700, %v3596
        %v3725 = vmul.f32 %v2701, %v3597
        %v3726 = vmul.f32 %v2702, %v3598
        %v3727 = vmul.f32 %v2703, %v3599
        %v3728 = vmul.f32 %v2704, %v3600
        %v3729 = vmul.f32 %v2705, %v3601
        %v3730 = vmul.f32 %v2706, %v3602
        %v3731 = vmul.f32 %v2707, %v3603
        %v3732 = vmul.f32 %v2708, %v3604
        %v3733 = vmul.f32 %v2709, %v3605
        %v3734 = vmul.f32 %v2710, %v3606
        %v3735 = vmul.f32 %v2711, %v3607
        %v3736 = vmul.f32 %v2712, %v3608
        %v3737 = vmul.f32 %v2713, %v3609
        %v3738 = vmul.f32 %v2714, %v3610
        %v3739 = vmul.f32 %v2715, %v3611
        %v3740 = vmul.f32 %v2716, %v3612
        %v3741 = vmul.f32 %v2717, %v3613
        %v3742 = vmul.f32 %v2718, %v3614
        %v3743 = vmul.f32 %v2719, %v3615
        %v3744 = vmul.f32 %v2720, %v3616
        %v3745 = vmul.f32 %v2721, %v3617
        %v3746 = vmul.f32 %v2722, %v3618
        %v3747 = vmul.f32 %v2723, %v3619
        %v3748 = vmul.f32 %v2724, %v3620
        %v3749 = vmul.f32 %v2725, %v3621
        %v3750 = vmul.f32 %v2726, %v3622
        %v3751 = vld [vmem:[#allocation5] sm:$0xff]
        %v3752 = vld [vmem:[#allocation5 + $0x8] sm:$0xff]
        %v3753 = vld [vmem:[#allocation5 + $0x10] sm:$0xff]
        %v3754 = vld [vmem:[#allocation5 + $0x18] sm:$0xff]
        %v3755 = vpack.c.bf16 %v3624, %v3623
        %v3756 = vpack.c.bf16 %v3626, %v3625
        %v3757 = vpack.c.bf16 %v3628, %v3627
        %v3758 = vpack.c.bf16 %v3630, %v3629
        %v3759 = vpack.c.bf16 %v3632, %v3631
        %v3760 = vpack.c.bf16 %v3634, %v3633
        %v3761 = vpack.c.bf16 %v3636, %v3635
        %v3762 = vpack.c.bf16 %v3638, %v3637
        %v3763 = vpack.c.bf16 %v3640, %v3639
        %v3764 = vpack.c.bf16 %v3642, %v3641
        %v3765 = vpack.c.bf16 %v3644, %v3643
        %v3766 = vpack.c.bf16 %v3646, %v3645
        %v3767 = vpack.c.bf16 %v3648, %v3647
        %v3768 = vpack.c.bf16 %v3650, %v3649
        %v3769 = vpack.c.bf16 %v3652, %v3651
        %v3770 = vpack.c.bf16 %v3654, %v3653
        %v3771 = vpack.c.bf16 %v3656, %v3655
        %v3772 = vpack.c.bf16 %v3658, %v3657
        %v3773 = vpack.c.bf16 %v3660, %v3659
        %v3774 = vpack.c.bf16 %v3662, %v3661
        %v3775 = vpack.c.bf16 %v3664, %v3663
        %v3776 = vpack.c.bf16 %v3666, %v3665
        %v3777 = vpack.c.bf16 %v3668, %v3667
        %v3778 = vpack.c.bf16 %v3670, %v3669
        %v3779 = vpack.c.bf16 %v3672, %v3671
        %v3780 = vpack.c.bf16 %v3674, %v3673
        %v3781 = vpack.c.bf16 %v3676, %v3675
        %v3782 = vpack.c.bf16 %v3678, %v3677
        %v3783 = vpack.c.bf16 %v3680, %v3679
        %v3784 = vpack.c.bf16 %v3682, %v3681
        %v3785 = vpack.c.bf16 %v3684, %v3683
        %v3786 = vpack.c.bf16 %v3686, %v3685
        %v3787 = vpack.c.bf16 %v3688, %v3687
        %v3788 = vpack.c.bf16 %v3690, %v3689
        %v3789 = vpack.c.bf16 %v3692, %v3691
        %v3790 = vpack.c.bf16 %v3694, %v3693
        %v3791 = vpack.c.bf16 %v3696, %v3695
        %v3792 = vpack.c.bf16 %v3698, %v3697
        %v3793 = vpack.c.bf16 %v3700, %v3699
        %v3794 = vpack.c.bf16 %v3702, %v3701
        %v3795 = vpack.c.bf16 %v3704, %v3703
        %v3796 = vpack.c.bf16 %v3706, %v3705
        %v3797 = vpack.c.bf16 %v3708, %v3707
        %v3798 = vpack.c.bf16 %v3710, %v3709
        %v3799 = vpack.c.bf16 %v3712, %v3711
        %v3800 = vpack.c.bf16 %v3714, %v3713
        %v3801 = vpack.c.bf16 %v3716, %v3715
        %v3802 = vpack.c.bf16 %v3718, %v3717
        %v3803 = vpack.c.bf16 %v3720, %v3719
        %v3804 = vpack.c.bf16 %v3722, %v3721
        %v3805 = vpack.c.bf16 %v3724, %v3723
        %v3806 = vpack.c.bf16 %v3726, %v3725
        %v3807 = vpack.c.bf16 %v3728, %v3727
        %v3808 = vpack.c.bf16 %v3730, %v3729
        %v3809 = vpack.c.bf16 %v3732, %v3731
        %v3810 = vpack.c.bf16 %v3734, %v3733
        %v3811 = vpack.c.bf16 %v3736, %v3735
        %v3812 = vpack.c.bf16 %v3738, %v3737
        %v3813 = vpack.c.bf16 %v3740, %v3739
        %v3814 = vpack.c.bf16 %v3742, %v3741
        %v3815 = vpack.c.bf16 %v3744, %v3743
        %v3816 = vpack.c.bf16 %v3746, %v3745
        %v3817 = vpack.c.bf16 %v3748, %v3747
        %v3818 = vpack.c.bf16 %v3750, %v3749
        %v3819 = vld [vmem:[%s4] sm:$0xff]
        %3821 = vset.pattern.permute.xlu0 0
        %3822 = vperm.xlu0 %3821, %v3819
        %v3823 = vpop.permute.xlu0 %3822
        %v3829 = vunpack.c.l.b16 %v3751
        %v3830 = vunpack.c.h.b16 %v3751
        %v3831 = vunpack.c.l.b16 %v3752
        %v3832 = vunpack.c.h.b16 %v3752
        %v3833 = vunpack.c.l.b16 %v3753
        %v3834 = vunpack.c.h.b16 %v3753
        %v3835 = vunpack.c.l.b16 %v3754
        %v3836 = vunpack.c.h.b16 %v3754
        %v3837 = vpack.c.b16 %v3829, %v3829
        %v3838 = vpack.c.b16 %v3830, %v3830
        %v3839 = vpack.c.b16 %v3831, %v3831
        %v3840 = vpack.c.b16 %v3832, %v3832
        %v3841 = vpack.c.b16 %v3833, %v3833
        %v3842 = vpack.c.b16 %v3834, %v3834
        %v3843 = vpack.c.b16 %v3835, %v3835
        %v3844 = vpack.c.b16 %v3836, %v3836
        %3853 = vmatpush.bf16.msra.mxu0 %v3762
        %3854 = vmatpush.bf16.msra.mxu0 %v3761
        %3855 = vmatpush.bf16.msra.mxu0 %v3760
        %3856 = vmatpush.bf16.msra.mxu0 %v3759
        %3857 = vmatpush.bf16.msra.mxu0 %v3758
        %3858 = vmatpush.bf16.msra.mxu0 %v3757
        %3859 = vmatpush.bf16.msra.mxu0 %v3756
        %3860 = vmatpush.bf16.msra.mxu0 %v3755
        %3861 = vmatmul.bf16.gmra.mxu0 %v3837
        %v3862 = vpop.f32.mrf.mxu0
        %v3863 = vadd.f32 %v3823, %v3862
        %v3864 = vpop.f32.mrf.mxu0
        %3865 = vdwg.mxu0
        %3866 = vmatpush.bf16.msra.mxu0 %v3770
        %3867 = vmatpush.bf16.msra.mxu0 %v3769
        %3868 = vmatpush.bf16.msra.mxu0 %v3768
        %3869 = vmatpush.bf16.msra.mxu0 %v3767
        %3870 = vmatpush.bf16.msra.mxu0 %v3766
        %3871 = vmatpush.bf16.msra.mxu0 %v3765
        %3872 = vmatpush.bf16.msra.mxu0 %v3764
        %3873 = vmatpush.bf16.msra.mxu0 %v3763
        %3874 = vmatmul.bf16.gmra.mxu0 %v3838
        %v3875 = vpop.f32.mrf.mxu0
        %v3876 = vadd.f32 %v3863, %v3875
        %v3877 = vpop.f32.mrf.mxu0
        %3878 = vdwg.mxu0
        %3879 = vmatpush.bf16.msra.mxu0 %v3778
        %3880 = vmatpush.bf16.msra.mxu0 %v3777
        %3881 = vmatpush.bf16.msra.mxu0 %v3776
        %3882 = vmatpush.bf16.msra.mxu0 %v3775
        %3883 = vmatpush.bf16.msra.mxu0 %v3774
        %3884 = vmatpush.bf16.msra.mxu0 %v3773
        %3885 = vmatpush.bf16.msra.mxu0 %v3772
        %3886 = vmatpush.bf16.msra.mxu0 %v3771
        %3887 = vmatmul.bf16.gmra.mxu0 %v3839
        %v3888 = vpop.f32.mrf.mxu0
        %v3889 = vadd.f32 %v3876, %v3888
        %v3890 = vpop.f32.mrf.mxu0
        %3891 = vdwg.mxu0
        %3892 = vmatpush.bf16.msra.mxu0 %v3786
        %3893 = vmatpush.bf16.msra.mxu0 %v3785
        %3894 = vmatpush.bf16.msra.mxu0 %v3784
        %3895 = vmatpush.bf16.msra.mxu0 %v3783
        %3896 = vmatpush.bf16.msra.mxu0 %v3782
        %3897 = vmatpush.bf16.msra.mxu0 %v3781
        %3898 = vmatpush.bf16.msra.mxu0 %v3780
        %3899 = vmatpush.bf16.msra.mxu0 %v3779
        %3900 = vmatmul.bf16.gmra.mxu0 %v3840
        %v3901 = vpop.f32.mrf.mxu0
        %v3902 = vadd.f32 %v3889, %v3901
        %v3903 = vpop.f32.mrf.mxu0
        %3904 = vdwg.mxu0
        %3905 = vmatpush.bf16.msra.mxu0 %v3794
        %3906 = vmatpush.bf16.msra.mxu0 %v3793
        %3907 = vmatpush.bf16.msra.mxu0 %v3792
        %3908 = vmatpush.bf16.msra.mxu0 %v3791
        %3909 = vmatpush.bf16.msra.mxu0 %v3790
        %3910 = vmatpush.bf16.msra.mxu0 %v3789
        %3911 = vmatpush.bf16.msra.mxu0 %v3788
        %3912 = vmatpush.bf16.msra.mxu0 %v3787
        %3913 = vmatmul.bf16.gmra.mxu0 %v3841
        %v3914 = vpop.f32.mrf.mxu0
        %v3915 = vadd.f32 %v3902, %v3914
        %v3916 = vpop.f32.mrf.mxu0
        %3917 = vdwg.mxu0
        %3918 = vmatpush.bf16.msra.mxu0 %v3802
        %3919 = vmatpush.bf16.msra.mxu0 %v3801
        %3920 = vmatpush.bf16.msra.mxu0 %v3800
        %3921 = vmatpush.bf16.msra.mxu0 %v3799
        %3922 = vmatpush.bf16.msra.mxu0 %v3798
        %3923 = vmatpush.bf16.msra.mxu0 %v3797
        %3924 = vmatpush.bf16.msra.mxu0 %v3796
        %3925 = vmatpush.bf16.msra.mxu0 %v3795
        %3926 = vmatmul.bf16.gmra.mxu0 %v3842
        %v3927 = vpop.f32.mrf.mxu0
        %v3928 = vadd.f32 %v3915, %v3927
        %v3929 = vpop.f32.mrf.mxu0
        %3930 = vdwg.mxu0
        %3931 = vmatpush.bf16.msra.mxu0 %v3810
        %3932 = vmatpush.bf16.msra.mxu0 %v3809
        %3933 = vmatpush.bf16.msra.mxu0 %v3808
        %3934 = vmatpush.bf16.msra.mxu0 %v3807
        %3935 = vmatpush.bf16.msra.mxu0 %v3806
        %3936 = vmatpush.bf16.msra.mxu0 %v3805
        %3937 = vmatpush.bf16.msra.mxu0 %v3804
        %3938 = vmatpush.bf16.msra.mxu0 %v3803
        %3939 = vmatmul.bf16.gmra.mxu0 %v3843
        %v3940 = vpop.f32.mrf.mxu0
        %v3941 = vadd.f32 %v3928, %v3940
        %v3942 = vpop.f32.mrf.mxu0
        %3943 = vdwg.mxu0
        %3944 = vmatpush.bf16.msra.mxu0 %v3818
        %3945 = vmatpush.bf16.msra.mxu0 %v3817
        %3946 = vmatpush.bf16.msra.mxu0 %v3816
        %3947 = vmatpush.bf16.msra.mxu0 %v3815
        %3948 = vmatpush.bf16.msra.mxu0 %v3814
        %3949 = vmatpush.bf16.msra.mxu0 %v3813
        %3950 = vmatpush.bf16.msra.mxu0 %v3812
        %3951 = vmatpush.bf16.msra.mxu0 %v3811
        %3952 = vmatmul.bf16.gmra.mxu0 %v3844
        %v3953 = vpop.f32.mrf.mxu0
        %v3954 = vadd.f32 %v3941, %v3953
        %v3955 = vpop.f32.mrf.mxu0
        %3956 = vdwg.mxu0
        %3957 = vst [vmem:[%s276] sm:$0xff] %v3954
        %s3958 = sand.u32 %s157, 1
        %s3959 = scalar_lea.sflag [#allocation4], %s3958
        %s3960 = sand.u32 %s157, 1
        %s3961 = smul.addr %s3960, 8
        %s3962 = scalar_lea.vmem [#allocation7], %s3961
        // Predicated region
        $region49: #{tpu_custom_call.1} parent=39 // pred_check
          %p3963 = pneg %p167
        $region50: #{tpu_custom_call.1} parent=39 // pred_check_branch
          %3965 = sbr.rel (%p3963) target = $region52
        $region51: #{tpu_custom_call.1} parent=39 // pred_region
          %3967 = vsyncadd %s3959, 0
          %s3968 = sadd.s32 %s28, %s27
          %s3969 = smul.addr %s3968, 8
          %s3970 = scalar_lea.hbm %s5, %s3969
          %s3972 = sshll.u32 %s3962, 4
          %s3973 = int_to_ptr.vmem [resolvable:$true] %s3972
          %s3974 = sshll.u32 %s3970, 4
          %s3975 = int_to_ptr.hbm [resolvable:$true] %s3974
          %3977 = dma.vmem_to_hbm [thread:$0]  %s3973, 128, %s3975, %s3959
        $region52: #{tpu_custom_call.1} parent=39 // pred_fallthru
          _
      $region40: #{tpu_custom_call.1} parent=5 // pred_fallthru
        _
      %p3978 = scmp.le.s32.totalorder 2, %s18
      // Predicated region
      $region53: #{tpu_custom_call.1} parent=5 // pred_check
        %p3979 = pneg %p3978
      $region54: #{tpu_custom_call.1} parent=5 // pred_check_branch
        %3981 = sbr.rel (%p3979) target = $region56
      $region55: #{tpu_custom_call.1} parent=5 // pred_region
        %s3982 = ssub.s32 %s18, 2
        // Predicated region
        $region57: #{tpu_custom_call.1} parent=55 // pred_check
          %p3983 = pneg %p173
        $region58: #{tpu_custom_call.1} parent=55 // pred_check_branch
          %3985 = sbr.rel (%p3983) target = $region60
        $region59: #{tpu_custom_call.1} parent=55 // pred_region
          %s3986 = sand.u32 %s158, 1
          %s3987 = scalar_lea.sflag [#allocation4], %s3986
          %s3988 = sand.u32 %s158, 1
          %s3989 = smul.addr %s3988, 8
          %s3990 = scalar_lea.vmem [#allocation7], %s3989
          %3992 = dma.done %s3987, 128
        $region60: #{tpu_custom_call.1} parent=55 // pred_fallthru
          _
      $region56: #{tpu_custom_call.1} parent=5 // pred_fallthru
        _
    $region6: #{tpu_custom_call.1} parent=1 // loop_footer
      %s22 = sadd.s32 1, %s18
    $region7: #{tpu_custom_call.1} parent=1 // loop_footer_branch
      %17 = sbr.rel target = $region3
    $region8: #{tpu_custom_call.1} parent=1 // loop_exit
      _
    %3993 = vsyncpa [#allocation3], 1
    %s3994 = scalar_lea.sflag [#allocation3], 1
    %3995 = vsyncpa %s3994, 1
    %3996 = vsyncpa [#allocation6], 1
    %3997 = vsyncpa [#allocation4], 1
    %s3998 = scalar_lea.sflag [#allocation4], 1
    %3999 = vsyncpa %s3998, 1

</llo_original>
